<compile_context>
chip_gen: v7x
topology: tpu7x:2x2x1
jax: 0.10.0
libtpu: 0.0.40
codegen_flags: <defaults>
</compile_context>

<pallas_src>
import functools
import numpy as np
import jax
import jax.numpy as jnp
from jax.experimental import pallas as pl
from jax.experimental.pallas import tpu as pltpu


# ----------------------------------------------------------------------------
# sincos positional embedding (plain numpy glue, matches reference math)
# ----------------------------------------------------------------------------
def _get_1d_sincos(embed_dim, pos):
    omega = np.arange(embed_dim // 2, dtype=np.float64)
    omega /= embed_dim / 2.0
    omega = 1.0 / 10000 ** omega
    pos = pos.reshape(-1)
    out = np.einsum("m,d->md", pos, omega)
    return np.concatenate([np.sin(out), np.cos(out)], axis=1)


def get_2d_sincos_pos_embed(embed_dim, grid_size):
    grid_h = np.arange(grid_size, dtype=np.float32)
    grid_w = np.arange(grid_size, dtype=np.float32)
    grid = np.meshgrid(grid_w, grid_h)
    grid = np.stack(grid, axis=0).reshape([2, 1, grid_size, grid_size])
    emb_h = _get_1d_sincos(embed_dim // 2, grid[0])
    emb_w = _get_1d_sincos(embed_dim // 2, grid[1])
    return np.concatenate([emb_h, emb_w], axis=1)  # (grid_size**2, embed_dim)


# ----------------------------------------------------------------------------
# plain-JAX layout glue: nearest resize of mask, patchify
# ----------------------------------------------------------------------------
def nearest_resize(mask, out_h, out_w):
    # F.interpolate(mode='nearest'): src = floor(dst * in/out)
    B, C, Hm, Wm = mask.shape
    rows = jnp.floor(jnp.arange(out_h) * (Hm / out_h)).astype(jnp.int32)
    cols = jnp.floor(jnp.arange(out_w) * (Wm / out_w)).astype(jnp.int32)
    return mask[:, :, rows][:, :, :, cols]


def patchify(x_bhwc, p):
    B, H, W, C = x_bhwc.shape
    x = x_bhwc.reshape(B, H // p, p, W // p, p, C)
    x = x.transpose(0, 1, 3, 2, 4, 5)                     # (B, H/p, W/p, p, p, C)
    return x.reshape(B, (H // p) * (W // p), p * p * C)   # channel-fastest flatten


def _default_batch_chunks(batch):
    # v7x has 2 TensorCores per chip -> split batch across them ("parallel" grid).
    # Single-TC v5e/v6e keep one grid step (avoids per-step pipeline overhead).
    try:
        kind = jax.devices()[0].device_kind.lower()
    except Exception:
        return 1
    if ("v7" in kind or "tpu7" in kind) and batch % 2 == 0:
        return min(batch, 2)
    return 1


# ----------------------------------------------------------------------------
# fused forward kernel (feature-major: activations are (features, tokens))
# ----------------------------------------------------------------------------
def fused_forward_kernel(xp_ref, m_ref, tok_ref, pew_ref, bias0_ref,
                         wslab_ref, w2_ref, vec_ref, *rest,
                         num_heads, depth, use_mask):
    if use_mask:
        mask_ref, o_ref = rest
    else:
        (o_ref,) = rest

    D, _ = pew_ref.shape                 # embed_dim
    BNs = xp_ref.shape[-1]               # tokens handled by this grid step (lane dim)
    Dm = w2_ref.shape[-1]                # mlp hidden dim
    hd = D // num_heads
    bf16, f32 = jnp.bfloat16, jnp.float32
    inv_D = 1.0 / D

    def layernorm(v, w, b):
        # single-pass stats (var = E[x^2] - mu^2); feature reduce is over sublanes
        s1 = jnp.sum(v, axis=0, keepdims=True)
        s2 = jnp.sum(v * v, axis=0, keepdims=True)
        mu = s1 * inv_D
        var = s2 * inv_D - mu * mu
        return (v - mu) * jax.lax.rsqrt(var + 1e-6) * w + b      # eps=1e-6 (reference)

    # --- mask fill (one vsel) + folded (z1 ∘ patch-embed) matmul + (pos + pe bias) ---
    y = jnp.where(m_ref[...] != 0.0, xp_ref[...], tok_ref[...])          # (PPC, BNs)
    tokens = (jnp.dot(pew_ref[...], y.astype(bf16), preferred_element_type=f32)
              + bias0_ref[...])                                          # (D, BNs) f32

    # --- transformer blocks (depth=2 -> keep unrolled) ---
    # TODO(synk): for large depth move this loop onto an "arbitrary" grid axis with
    # per-block weight BlockSpecs and a VMEM token accumulator.
    for d in range(depth):
        w_qkv  = wslab_ref[d, 0:3 * D, :]              # (3D, D)  bf16 (q rows pre-scaled)
        w_proj = wslab_ref[d, 3 * D:4 * D, :]          # (D, D)   bf16
        w_fc1  = wslab_ref[d, 4 * D:4 * D + Dm, :]     # (Dm, D)  bf16
        w_fc2  = w2_ref[d]                             # (D, Dm)  bf16
        ln1w  = vec_ref[d, 0 * D:1 * D, :]             # (D, 1)   f32
        ln1b  = vec_ref[d, 1 * D:2 * D, :]
        qkvb  = vec_ref[d, 2 * D:5 * D, :]             # (3D, 1)  (q part pre-scaled)
        projb = vec_ref[d, 5 * D:6 * D, :]
        ln2w  = vec_ref[d, 6 * D:7 * D, :]
        ln2b  = vec_ref[d, 7 * D:8 * D, :]
        b1    = vec_ref[d, 8 * D:8 * D + Dm, :]        # (Dm, 1)
        b2    = vec_ref[d, 8 * D + Dm:9 * D + Dm, :]   # (D, 1)

        # ---- pre-LN multi-head self-attention (all heads in batched einsums) ----
        h = layernorm(tokens, ln1w, ln1b)                                  # (D, BNs)
        qkv = (jnp.dot(w_qkv, h.astype(bf16), preferred_element_type=f32)
               + qkvb)                                                     # (3D, BNs)
        # head split = free sublane regrouping (no lane slicing)
        q = qkv[0 * D:1 * D, :].reshape(num_heads, hd, BNs)
        k = qkv[1 * D:2 * D, :].reshape(num_heads, hd, BNs)
        v = qkv[2 * D:3 * D, :].reshape(num_heads, hd, BNs)
        q_t = jnp.transpose(q, (0, 2, 1))                                  # (H, BNs, hd)
        # 1/sqrt(hd) already folded into q weights/bias in the wrapper
        s = jnp.einsum('hqd,hdk->hqk', q_t.astype(bf16), k.astype(bf16),
                       preferred_element_type=f32)                         # (H, BNs, BNs)
        if use_mask:
            s = s + mask_ref[...]          # block-diagonal -1e30 across different batches
        s = s - jnp.max(s, axis=-1, keepdims=True)
        p = jnp.exp(s)
        p = p * pl.reciprocal(jnp.sum(p, axis=-1, keepdims=True), approx=True)
        o = jnp.einsum('hdk,hqk->hdq', v.astype(bf16), p.astype(bf16),
                       preferred_element_type=f32)                         # (H, hd, BNs)
        attn = jnp.dot(w_proj, o.reshape(D, BNs).astype(bf16),
                       preferred_element_type=f32)                         # (D, BNs)
        tokens = tokens + attn + projb

        # ---- MLP ----
        h2 = layernorm(tokens, ln2w, ln2b)
        m1 = jnp.dot(w_fc1, h2.astype(bf16), preferred_element_type=f32) + b1   # (Dm, BNs)
        # TODO(synk): nn.GELU default is exact erf; tanh approximation kept for robust
        # Mosaic lowering (~1e-3 relative difference).
        m1 = jax.nn.gelu(m1, approximate=True)
        m2 = jnp.dot(w_fc2, m1.astype(bf16), preferred_element_type=f32) + b2   # (D, BNs)
        tokens = tokens + m2

    # feature-major, lane-dense store; no in-kernel transpose
    o_ref[...] = tokens


# ----------------------------------------------------------------------------
# full forward wrapper (layout plumbing + weight folding / packing in plain JAX)
# ----------------------------------------------------------------------------
def aggregation_forward(x, mask, params, *, patch_size, num_heads, batch_chunks=None):
    B, C, H, W = x.shape
    P = patch_size
    N = (H // P) * (W // P)
    PPC = P * P * C
    D = params["pe_w"].shape[1]
    Dm = params["blocks"][0]["w1"].shape[1]
    depth = len(params["blocks"])
    hd = D // num_heads
    q_scale = 1.0 / float(np.sqrt(hd))

    n_chunks = batch_chunks if batch_chunks is not None else _default_batch_chunks(B)
    if B % n_chunks:
        n_chunks = 1
    Bs = B // n_chunks                   # batches per grid step
    BNs = Bs * N                         # tokens (lanes) per grid step
    use_mask = Bs > 1                    # block cross-batch attention inside a step

    # --- layout plumbing: nearest-resize mask, channels-last, patchify ---
    m = nearest_resize(mask.astype(jnp.float32), H, W)              # (B,1,H,W)
    x_l = x.transpose(0, 2, 3, 1)                                   # (B,H,W,C)
    m_l = jnp.broadcast_to(m.transpose(0, 2, 3, 1), x_l.shape)      # (B,H,W,C)
    xp = patchify(x_l, P).reshape(B * N, PPC)                       # token-major
    mp = patchify(m_l, P).reshape(B * N, PPC)

    def chunk_fm(a_tm):   # (B*N, F) -> (n_chunks, F, BNs)  feature-major chunks
        return a_tm.reshape(n_chunks, BNs, -1).transpose(0, 2, 1)

    xp_c = chunk_fm(xp)                                             # (nc, PPC, BNs)
    mp_c = chunk_fm(mp)
    tok_fm = jnp.tile(params["mask_token"], (1, P * P)).T           # (PPC, 1)

    # --- fold the z1 1x1 conv into the patch-embed weight / bias ---
    z1w, z1b = params["z1_w"], params["z1_b"]
    pe_w_f = jnp.kron(jnp.eye(P * P, dtype=jnp.float32), z1w) @ params["pe_w"]  # (PPC, D)
    pe_b_f = jnp.tile(z1b, (1, P * P)) @ params["pe_w"] + params["pe_b"]        # (1, D)
    pew_fm = pe_w_f.T.astype(jnp.bfloat16)                                      # (D, PPC)

    # --- fold patch-embed bias + sincos pos-embed into ONE feature-major bias slab ---
    bias0 = (params["pos_embed"] + pe_b_f).T                        # (D, N)
    bias0_full = jnp.tile(bias0, (1, B))                            # (D, B*N)
    bias0_c = bias0_full.reshape(D, n_chunks, BNs).transpose(1, 0, 2)

    # --- pack per-block weights / vectors into slabs (fewer DMAs, no in-kernel
    #     weight transposes; 1/sqrt(hd) folded into q weights & bias) ---
    wT = lambda a: a.T
    w_rows, v_rows = [], []
    for blk in params["blocks"]:
        qkv_wT = wT(blk["qkv_w"])                                   # (3D, D)
        qkv_wT = qkv_wT.at[:D, :].multiply(q_scale)
        w_rows.append(jnp.concatenate(
            [qkv_wT, wT(blk["proj_w"]), wT(blk["w1"])], axis=0))    # (4D+Dm, D)
        qkv_bT = wT(blk["qkv_b"])                                   # (3D, 1)
        qkv_bT = qkv_bT.at[:D, :].multiply(q_scale)
        v_rows.append(jnp.concatenate(
            [wT(blk["ln1_w"]), wT(blk["ln1_b"]), qkv_bT, wT(blk["proj_b"]),
             wT(blk["ln2_w"]), wT(blk["ln2_b"]), wT(blk["b1"]), wT(blk["b2"])],
            axis=0))                                                # (9D+Dm, 1)
    wslab = jnp.stack(w_rows).astype(jnp.bfloat16)                  # (depth, 4D+Dm, D)
    w2slab = jnp.stack([wT(blk["w2"]) for blk in params["blocks"]]
                       ).astype(jnp.bfloat16)                       # (depth, D, Dm)
    vecslab = jnp.stack(v_rows).astype(jnp.float32)                 # (depth, 9D+Dm, 1)

    kernel = functools.partial(fused_forward_kernel, num_heads=num_heads,
                               depth=depth, use_mask=use_mask)

    in_arrays = [xp_c, mp_c, tok_fm, pew_fm, bias0_c, wslab, w2slab, vecslab]
    in_specs = [
        pl.BlockSpec((None, PPC, BNs), lambda i: (i, 0, 0)),
        pl.BlockSpec((None, PPC, BNs), lambda i: (i, 0, 0)),
        pl.BlockSpec((PPC, 1), lambda i: (0, 0)),
        pl.BlockSpec((D, PPC), lambda i: (0, 0)),
        pl.BlockSpec((None, D, BNs), lambda i: (i, 0, 0)),
        pl.BlockSpec((depth, 4 * D + Dm, D), lambda i: (0, 0, 0)),
        pl.BlockSpec((depth, D, Dm), lambda i: (0, 0, 0)),
        pl.BlockSpec((depth, 9 * D + Dm, 1), lambda i: (0, 0, 0)),
    ]
    if use_mask:
        bids = jnp.repeat(jnp.arange(Bs), N)
        attn_mask = jnp.where(bids[:, None] == bids[None, :], 0.0, -1e30
                              ).astype(jnp.float32)                 # (BNs, BNs)
        in_arrays.append(attn_mask)
        in_specs.append(pl.BlockSpec((BNs, BNs), lambda i: (0, 0)))

    out_c = pl.pallas_call(
        kernel,
        grid=(n_chunks,),
        in_specs=in_specs,
        out_specs=pl.BlockSpec((None, D, BNs), lambda i: (i, 0, 0)),
        out_shape=jax.ShapeDtypeStruct((n_chunks, D, BNs), jnp.float32),
        compiler_params=pltpu.CompilerParams(dimension_semantics=("parallel",)),
    )(*in_arrays)

    # layout plumbing back to the reference (B, N, D) output
    return out_c.transpose(0, 2, 1).reshape(B, N, D)


# ----------------------------------------------------------------------------
if __name__ == "__main__":
    B, C, H, W = 2, 4, 16, 16       # spatial_dim=16, channel_dim=4
    P = 2                           # sr_ratio / patch size
    D = 32                          # embed_dim
    HEADS = 4                       # num_heads (head_dim = 8)
    MLP_RATIO = 4
    DEPTH = 2
    N = (H // P) * (W // P)         # num_patches = 64

    key = jax.random.PRNGKey(0)
    keys = jax.random.split(key, 32)
    ki = iter(keys)
    nrm = lambda k, s: 0.02 * jax.random.normal(k, s, jnp.float32)

    params = {
        "mask_token": nrm(next(ki), (1, C)),
        # NOTE: z1 is zero-initialized in the reference __init__; random (deterministic)
        # init here keeps the synthetic pipeline non-degenerate.
        "z1_w": nrm(next(ki), (C, C)),
        "z1_b": nrm(next(ki), (1, C)),
        "pe_w": nrm(next(ki), (P * P * C, D)),
        "pe_b": jnp.zeros((1, D), jnp.float32),
        "pos_embed": jnp.asarray(get_2d_sincos_pos_embed(D, int(N ** 0.5)), jnp.float32),
        "blocks": [],
    }
    for _ in range(DEPTH):
        params["blocks"].append({
            "ln1_w": jnp.ones((1, D), jnp.float32), "ln1_b": jnp.zeros((1, D), jnp.float32),
            "qkv_w": nrm(next(ki), (D, 3 * D)), "qkv_b": jnp.zeros((1, 3 * D), jnp.float32),
            "proj_w": nrm(next(ki), (D, D)), "proj_b": jnp.zeros((1, D), jnp.float32),
            "ln2_w": jnp.ones((1, D), jnp.float32), "ln2_b": jnp.zeros((1, D), jnp.float32),
            "w1": nrm(next(ki), (D, MLP_RATIO * D)), "b1": jnp.zeros((1, MLP_RATIO * D), jnp.float32),
            "w2": nrm(next(ki), (MLP_RATIO * D, D)), "b2": jnp.zeros((1, D), jnp.float32),
        })

    kx, km = jax.random.split(next(ki))
    x = jax.random.normal(kx, (B, C, H, W), jnp.float32)
    mask = (jax.random.uniform(km, (B, 1, 8, 8)) > 0.5).astype(jnp.float32)

    fwd = jax.jit(functools.partial(aggregation_forward, patch_size=P, num_heads=HEADS))
    out = fwd(x, mask, params)
    out = jax.block_until_ready(out)
    assert out.shape == (B, N, D) and out.dtype == jnp.float32
    assert bool(jnp.isfinite(out).all())
    print("KERNEL_OK")
</pallas_src>

<mosaic_0001>
module attributes {stable_mosaic.version = 11 : i64} {
  func.func @fused_forward_kernel(%arg0: i32, %arg1: memref<1x16x128xf32, #tpu.memory_space<vmem>>, %arg2: memref<1x16x128xf32, #tpu.memory_space<vmem>>, %arg3: memref<16x1xf32, #tpu.memory_space<vmem>>, %arg4: memref<32x16xbf16, #tpu.memory_space<vmem>>, %arg5: memref<1x32x128xf32, #tpu.memory_space<vmem>>, %arg6: memref<2x256x32xbf16, #tpu.memory_space<vmem>>, %arg7: memref<2x32x128xbf16, #tpu.memory_space<vmem>>, %arg8: memref<2x416x1xf32, #tpu.memory_space<vmem>>, %arg9: memref<128x128xf32, #tpu.memory_space<vmem>>, %arg10: memref<1x32x128xf32, #tpu.memory_space<vmem>>) attributes {dimension_semantics = [#tpu.dimension_semantics<parallel>], iteration_bounds = array<i64: 1>, scalar_prefetch = 0 : i64, scratch_operands = 0 : i64, tpu.core_type = #tpu.core_type<tc>, window_params = [{transform_indices = @transform_0, window_bounds = array<i64: 1, 16, 128>}, {transform_indices = @transform_1, window_bounds = array<i64: 1, 16, 128>}, {pipeline_mode = #tpu.pipeline_mode<synchronous>, transform_indices = @transform_2, window_bounds = array<i64: 16, 1>}, {pipeline_mode = #tpu.pipeline_mode<synchronous>, transform_indices = @transform_3, window_bounds = array<i64: 32, 16>}, {transform_indices = @transform_4, window_bounds = array<i64: 1, 32, 128>}, {pipeline_mode = #tpu.pipeline_mode<synchronous>, transform_indices = @transform_5, window_bounds = array<i64: 2, 256, 32>}, {pipeline_mode = #tpu.pipeline_mode<synchronous>, transform_indices = @transform_6, window_bounds = array<i64: 2, 32, 128>}, {pipeline_mode = #tpu.pipeline_mode<synchronous>, transform_indices = @transform_7, window_bounds = array<i64: 2, 416, 1>}, {pipeline_mode = #tpu.pipeline_mode<synchronous>, transform_indices = @transform_8, window_bounds = array<i64: 128, 128>}, {transform_indices = @transform_9, window_bounds = array<i64: 1, 32, 128>}]} {
    %c0 = arith.constant 0 : index
    %c0_0 = arith.constant 0 : index
    %c0_1 = arith.constant 0 : index
    %0 = vector.load %arg2[%c0, %c0_0, %c0_1] : memref<1x16x128xf32, #tpu.memory_space<vmem>>, vector<1x16x128xf32>
    %1 = vector.shape_cast %0 : vector<1x16x128xf32> to vector<16x128xf32>
    %cst = arith.constant 0.000000e+00 : f32
    %2 = vector.broadcast %cst : f32 to vector<16x128xf32>
    %3 = arith.cmpf one, %1, %2 : vector<16x128xf32>
    %c0_2 = arith.constant 0 : index
    %c0_3 = arith.constant 0 : index
    %c0_4 = arith.constant 0 : index
    %4 = vector.load %arg1[%c0_2, %c0_3, %c0_4] : memref<1x16x128xf32, #tpu.memory_space<vmem>>, vector<1x16x128xf32>
    %5 = vector.shape_cast %4 : vector<1x16x128xf32> to vector<16x128xf32>
    %c0_5 = arith.constant 0 : index
    %c0_6 = arith.constant 0 : index
    %6 = vector.load %arg3[%c0_5, %c0_6] : memref<16x1xf32, #tpu.memory_space<vmem>>, vector<16x1xf32>
    %7 = vector.shape_cast %6 : vector<16x1xf32> to vector<16x1xf32>
    %8 = vector.broadcast %7 : vector<16x1xf32> to vector<16x128xf32>
    %9 = arith.select %3, %5, %8 : vector<16x128xi1>, vector<16x128xf32>
    %c0_7 = arith.constant 0 : index
    %c0_8 = arith.constant 0 : index
    %10 = vector.load %arg4[%c0_7, %c0_8] : memref<32x16xbf16, #tpu.memory_space<vmem>>, vector<32x16xbf16>
    %11 = arith.truncf %9 : vector<16x128xf32> to vector<16x128xbf16>
    %cst_9 = arith.constant dense<0.000000e+00> : vector<32x128xf32>
    %12 = tpu.matmul %10, %11, %cst_9 {dimension_numbers = #tpu.dot_dimension_numbers<[1], [0], [0], [1], [0, 0, 1, 1], [], []>} : vector<32x16xbf16>, vector<16x128xbf16>, vector<32x128xf32> -> vector<32x128xf32>
    %c0_10 = arith.constant 0 : index
    %c0_11 = arith.constant 0 : index
    %c0_12 = arith.constant 0 : index
    %13 = vector.load %arg5[%c0_10, %c0_11, %c0_12] : memref<1x32x128xf32, #tpu.memory_space<vmem>>, vector<1x32x128xf32>
    %14 = vector.shape_cast %13 : vector<1x32x128xf32> to vector<32x128xf32>
    %15 = arith.addf %12, %14 : vector<32x128xf32>
    %c0_13 = arith.constant 0 : index
    %c0_14 = arith.constant 0 : index
    %c0_15 = arith.constant 0 : index
    %16 = vector.load %arg6[%c0_13, %c0_14, %c0_15] : memref<2x256x32xbf16, #tpu.memory_space<vmem>>, vector<1x96x32xbf16>
    %17 = vector.shape_cast %16 : vector<1x96x32xbf16> to vector<96x32xbf16>
    %c0_16 = arith.constant 0 : index
    %c96 = arith.constant 96 : index
    %c0_17 = arith.constant 0 : index
    %18 = vector.load %arg6[%c0_16, %c96, %c0_17] : memref<2x256x32xbf16, #tpu.memory_space<vmem>>, vector<1x32x32xbf16>
    %19 = vector.shape_cast %18 : vector<1x32x32xbf16> to vector<32x32xbf16>
    %c0_18 = arith.constant 0 : index
    %c128 = arith.constant 128 : index
    %c0_19 = arith.constant 0 : index
    %20 = vector.load %arg6[%c0_18, %c128, %c0_19] : memref<2x256x32xbf16, #tpu.memory_space<vmem>>, vector<1x128x32xbf16>
    %21 = vector.shape_cast %20 : vector<1x128x32xbf16> to vector<128x32xbf16>
    %c0_20 = arith.constant 0 : index
    %c0_21 = arith.constant 0 : index
    %c0_22 = arith.constant 0 : index
    %22 = vector.load %arg7[%c0_20, %c0_21, %c0_22] : memref<2x32x128xbf16, #tpu.memory_space<vmem>>, vector<1x32x128xbf16>
    %23 = vector.shape_cast %22 : vector<1x32x128xbf16> to vector<32x128xbf16>
    %c0_23 = arith.constant 0 : index
    %c0_24 = arith.constant 0 : index
    %c0_25 = arith.constant 0 : index
    %24 = vector.load %arg8[%c0_23, %c0_24, %c0_25] : memref<2x416x1xf32, #tpu.memory_space<vmem>>, vector<1x32x1xf32>
    %25 = vector.shape_cast %24 : vector<1x32x1xf32> to vector<32x1xf32>
    %c0_26 = arith.constant 0 : index
    %c32 = arith.constant 32 : index
    %c0_27 = arith.constant 0 : index
    %26 = vector.load %arg8[%c0_26, %c32, %c0_27] : memref<2x416x1xf32, #tpu.memory_space<vmem>>, vector<1x32x1xf32>
    %27 = vector.shape_cast %26 : vector<1x32x1xf32> to vector<32x1xf32>
    %c0_28 = arith.constant 0 : index
    %c64 = arith.constant 64 : index
    %c0_29 = arith.constant 0 : index
    %28 = vector.load %arg8[%c0_28, %c64, %c0_29] : memref<2x416x1xf32, #tpu.memory_space<vmem>>, vector<1x96x1xf32>
    %29 = vector.shape_cast %28 : vector<1x96x1xf32> to vector<96x1xf32>
    %c0_30 = arith.constant 0 : index
    %c160 = arith.constant 160 : index
    %c0_31 = arith.constant 0 : index
    %30 = vector.load %arg8[%c0_30, %c160, %c0_31] : memref<2x416x1xf32, #tpu.memory_space<vmem>>, vector<1x32x1xf32>
    %31 = vector.shape_cast %30 : vector<1x32x1xf32> to vector<32x1xf32>
    %c0_32 = arith.constant 0 : index
    %c192 = arith.constant 192 : index
    %c0_33 = arith.constant 0 : index
    %32 = vector.load %arg8[%c0_32, %c192, %c0_33] : memref<2x416x1xf32, #tpu.memory_space<vmem>>, vector<1x32x1xf32>
    %33 = vector.shape_cast %32 : vector<1x32x1xf32> to vector<32x1xf32>
    %c0_34 = arith.constant 0 : index
    %c224 = arith.constant 224 : index
    %c0_35 = arith.constant 0 : index
    %34 = vector.load %arg8[%c0_34, %c224, %c0_35] : memref<2x416x1xf32, #tpu.memory_space<vmem>>, vector<1x32x1xf32>
    %35 = vector.shape_cast %34 : vector<1x32x1xf32> to vector<32x1xf32>
    %c0_36 = arith.constant 0 : index
    %c256 = arith.constant 256 : index
    %c0_37 = arith.constant 0 : index
    %36 = vector.load %arg8[%c0_36, %c256, %c0_37] : memref<2x416x1xf32, #tpu.memory_space<vmem>>, vector<1x128x1xf32>
    %37 = vector.shape_cast %36 : vector<1x128x1xf32> to vector<128x1xf32>
    %c0_38 = arith.constant 0 : index
    %c384 = arith.constant 384 : index
    %c0_39 = arith.constant 0 : index
    %38 = vector.load %arg8[%c0_38, %c384, %c0_39] : memref<2x416x1xf32, #tpu.memory_space<vmem>>, vector<1x32x1xf32>
    %39 = vector.shape_cast %38 : vector<1x32x1xf32> to vector<32x1xf32>
    %cst_40 = arith.constant dense<0.000000e+00> : vector<128xf32>
    %40 = vector.multi_reduction <add>, %15, %cst_40 [0] : vector<32x128xf32> to vector<128xf32>
    %41 = vector.shape_cast %40 : vector<128xf32> to vector<1x128xf32>
    %42 = arith.mulf %15, %15 : vector<32x128xf32>
    %cst_41 = arith.constant dense<0.000000e+00> : vector<128xf32>
    %43 = vector.multi_reduction <add>, %42, %cst_41 [0] : vector<32x128xf32> to vector<128xf32>
    %44 = vector.shape_cast %43 : vector<128xf32> to vector<1x128xf32>
    %cst_42 = arith.constant 3.125000e-02 : f32
    %45 = vector.broadcast %cst_42 : f32 to vector<1x128xf32>
    %46 = arith.mulf %41, %45 : vector<1x128xf32>
    %cst_43 = arith.constant 3.125000e-02 : f32
    %47 = vector.broadcast %cst_43 : f32 to vector<1x128xf32>
    %48 = arith.mulf %44, %47 : vector<1x128xf32>
    %49 = arith.mulf %46, %46 : vector<1x128xf32>
    %50 = arith.subf %48, %49 : vector<1x128xf32>
    %51 = vector.broadcast %46 : vector<1x128xf32> to vector<32x128xf32>
    %52 = arith.subf %15, %51 : vector<32x128xf32>
    %cst_44 = arith.constant 9.99999997E-7 : f32
    %53 = vector.broadcast %cst_44 : f32 to vector<1x128xf32>
    %54 = arith.addf %50, %53 : vector<1x128xf32>
    %55 = math.rsqrt %54 : vector<1x128xf32>
    %56 = vector.broadcast %55 : vector<1x128xf32> to vector<32x128xf32>
    %57 = arith.mulf %52, %56 : vector<32x128xf32>
    %58 = vector.broadcast %25 : vector<32x1xf32> to vector<32x128xf32>
    %59 = arith.mulf %57, %58 : vector<32x128xf32>
    %60 = vector.broadcast %27 : vector<32x1xf32> to vector<32x128xf32>
    %61 = arith.addf %59, %60 : vector<32x128xf32>
    %62 = arith.truncf %61 : vector<32x128xf32> to vector<32x128xbf16>
    %cst_45 = arith.constant dense<0.000000e+00> : vector<96x128xf32>
    %63 = tpu.matmul %17, %62, %cst_45 {dimension_numbers = #tpu.dot_dimension_numbers<[1], [0], [0], [1], [0, 0, 1, 1], [], []>} : vector<96x32xbf16>, vector<32x128xbf16>, vector<96x128xf32> -> vector<96x128xf32>
    %64 = vector.broadcast %29 : vector<96x1xf32> to vector<96x128xf32>
    %65 = arith.addf %63, %64 : vector<96x128xf32>
    %66 = vector.extract_strided_slice %65 {offsets = [0, 0], sizes = [32, 128], strides = [1, 1]} : vector<96x128xf32> to vector<32x128xf32>
    %67 = vector.shape_cast %66 : vector<32x128xf32> to vector<4x8x128xf32>
    %68 = vector.extract_strided_slice %65 {offsets = [32, 0], sizes = [32, 128], strides = [1, 1]} : vector<96x128xf32> to vector<32x128xf32>
    %69 = vector.shape_cast %68 : vector<32x128xf32> to vector<4x8x128xf32>
    %70 = vector.extract_strided_slice %65 {offsets = [64, 0], sizes = [32, 128], strides = [1, 1]} : vector<96x128xf32> to vector<32x128xf32>
    %71 = vector.shape_cast %70 : vector<32x128xf32> to vector<4x8x128xf32>
    %72 = tpu.transpose %67, [0, 2, 1] : vector<4x8x128xf32> -> vector<4x128x8xf32>
    %73 = arith.truncf %72 : vector<4x128x8xf32> to vector<4x128x8xbf16>
    %74 = arith.truncf %69 : vector<4x8x128xf32> to vector<4x8x128xbf16>
    "tpu.trace_start"() <{level = 10 : i32, message = "hqd,hdk->hqk"}> : () -> ()
    %cst_46 = arith.constant dense<0.000000e+00> : vector<4x128x128xf32>
    %75 = tpu.matmul %73, %74, %cst_46 {dimension_numbers = #tpu.dot_dimension_numbers<[2], [1], [1], [2], [0, 0, 0, 1, 1, 2], [0], [0]>} : vector<4x128x8xbf16>, vector<4x8x128xbf16>, vector<4x128x128xf32> -> vector<4x128x128xf32>
    "tpu.trace_stop"() : () -> ()
    %c0_47 = arith.constant 0 : index
    %c0_48 = arith.constant 0 : index
    %76 = vector.load %arg9[%c0_47, %c0_48] : memref<128x128xf32, #tpu.memory_space<vmem>>, vector<128x128xf32>
    %77 = vector.shape_cast %76 : vector<128x128xf32> to vector<1x128x128xf32>
    %78 = vector.broadcast %77 : vector<1x128x128xf32> to vector<4x128x128xf32>
    %79 = arith.addf %75, %78 : vector<4x128x128xf32>
    %cst_49 = arith.constant dense<0xFF800000> : vector<4x128xf32>
    %80 = vector.multi_reduction <maximumf>, %79, %cst_49 [2] : vector<4x128x128xf32> to vector<4x128xf32>
    %81 = vector.shape_cast %80 : vector<4x128xf32> to vector<4x128x1xf32>
    %82 = vector.broadcast %81 : vector<4x128x1xf32> to vector<4x128x128xf32>
    %83 = arith.subf %79, %82 : vector<4x128x128xf32>
    %84 = math.exp %83 : vector<4x128x128xf32>
    %cst_50 = arith.constant dense<0.000000e+00> : vector<4x128xf32>
    %85 = vector.multi_reduction <add>, %84, %cst_50 [2] : vector<4x128x128xf32> to vector<4x128xf32>
    %86 = vector.shape_cast %85 : vector<4x128xf32> to vector<4x128x1xf32>
    %87 = tpu.reciprocal %86 {approx = true} : vector<4x128x1xf32> -> vector<4x128x1xf32>
    %88 = vector.broadcast %87 : vector<4x128x1xf32> to vector<4x128x128xf32>
    %89 = arith.mulf %84, %88 : vector<4x128x128xf32>
    %90 = arith.truncf %71 : vector<4x8x128xf32> to vector<4x8x128xbf16>
    %91 = arith.truncf %89 : vector<4x128x128xf32> to vector<4x128x128xbf16>
    "tpu.trace_start"() <{level = 10 : i32, message = "hdk,hqk->hdq"}> : () -> ()
    %cst_51 = arith.constant dense<0.000000e+00> : vector<4x8x128xf32>
    %92 = tpu.matmul %90, %91, %cst_51 {dimension_numbers = #tpu.dot_dimension_numbers<[2], [2], [1], [1], [0, 0, 0, 1, 1, 1], [0], [0]>} : vector<4x8x128xbf16>, vector<4x128x128xbf16>, vector<4x8x128xf32> -> vector<4x8x128xf32>
    "tpu.trace_stop"() : () -> ()
    %93 = vector.shape_cast %92 : vector<4x8x128xf32> to vector<32x128xf32>
    %94 = arith.truncf %93 : vector<32x128xf32> to vector<32x128xbf16>
    %cst_52 = arith.constant dense<0.000000e+00> : vector<32x128xf32>
    %95 = tpu.matmul %19, %94, %cst_52 {dimension_numbers = #tpu.dot_dimension_numbers<[1], [0], [0], [1], [0, 0, 1, 1], [], []>} : vector<32x32xbf16>, vector<32x128xbf16>, vector<32x128xf32> -> vector<32x128xf32>
    %96 = arith.addf %15, %95 : vector<32x128xf32>
    %97 = vector.broadcast %31 : vector<32x1xf32> to vector<32x128xf32>
    %98 = arith.addf %96, %97 : vector<32x128xf32>
    %cst_53 = arith.constant dense<0.000000e+00> : vector<128xf32>
    %99 = vector.multi_reduction <add>, %98, %cst_53 [0] : vector<32x128xf32> to vector<128xf32>
    %100 = vector.shape_cast %99 : vector<128xf32> to vector<1x128xf32>
    %101 = arith.mulf %98, %98 : vector<32x128xf32>
    %cst_54 = arith.constant dense<0.000000e+00> : vector<128xf32>
    %102 = vector.multi_reduction <add>, %101, %cst_54 [0] : vector<32x128xf32> to vector<128xf32>
    %103 = vector.shape_cast %102 : vector<128xf32> to vector<1x128xf32>
    %cst_55 = arith.constant 3.125000e-02 : f32
    %104 = vector.broadcast %cst_55 : f32 to vector<1x128xf32>
    %105 = arith.mulf %100, %104 : vector<1x128xf32>
    %cst_56 = arith.constant 3.125000e-02 : f32
    %106 = vector.broadcast %cst_56 : f32 to vector<1x128xf32>
    %107 = arith.mulf %103, %106 : vector<1x128xf32>
    %108 = arith.mulf %105, %105 : vector<1x128xf32>
    %109 = arith.subf %107, %108 : vector<1x128xf32>
    %110 = vector.broadcast %105 : vector<1x128xf32> to vector<32x128xf32>
    %111 = arith.subf %98, %110 : vector<32x128xf32>
    %cst_57 = arith.constant 9.99999997E-7 : f32
    %112 = vector.broadcast %cst_57 : f32 to vector<1x128xf32>
    %113 = arith.addf %109, %112 : vector<1x128xf32>
    %114 = math.rsqrt %113 : vector<1x128xf32>
    %115 = vector.broadcast %114 : vector<1x128xf32> to vector<32x128xf32>
    %116 = arith.mulf %111, %115 : vector<32x128xf32>
    %117 = vector.broadcast %33 : vector<32x1xf32> to vector<32x128xf32>
    %118 = arith.mulf %116, %117 : vector<32x128xf32>
    %119 = vector.broadcast %35 : vector<32x1xf32> to vector<32x128xf32>
    %120 = arith.addf %118, %119 : vector<32x128xf32>
    %121 = arith.truncf %120 : vector<32x128xf32> to vector<32x128xbf16>
    %cst_58 = arith.constant dense<0.000000e+00> : vector<128x128xf32>
    %122 = tpu.matmul %21, %121, %cst_58 {dimension_numbers = #tpu.dot_dimension_numbers<[1], [0], [0], [1], [0, 0, 1, 1], [], []>} : vector<128x32xbf16>, vector<32x128xbf16>, vector<128x128xf32> -> vector<128x128xf32>
    %123 = vector.broadcast %37 : vector<128x1xf32> to vector<128x128xf32>
    %124 = arith.addf %122, %123 : vector<128x128xf32>
    %125 = arith.mulf %124, %124 : vector<128x128xf32>
    %126 = arith.mulf %124, %125 : vector<128x128xf32>
    %cst_59 = arith.constant 4.471500e-02 : f32
    %127 = vector.broadcast %cst_59 : f32 to vector<128x128xf32>
    %128 = arith.mulf %127, %126 : vector<128x128xf32>
    %129 = arith.addf %124, %128 : vector<128x128xf32>
    %cst_60 = arith.constant 0.797884583 : f32
    %130 = vector.broadcast %cst_60 : f32 to vector<128x128xf32>
    %131 = arith.mulf %130, %129 : vector<128x128xf32>
    %132 = math.tanh %131 : vector<128x128xf32>
    %cst_61 = arith.constant 1.000000e+00 : f32
    %133 = vector.broadcast %cst_61 : f32 to vector<128x128xf32>
    %134 = arith.addf %133, %132 : vector<128x128xf32>
    %cst_62 = arith.constant 5.000000e-01 : f32
    %135 = vector.broadcast %cst_62 : f32 to vector<128x128xf32>
    %136 = arith.mulf %135, %134 : vector<128x128xf32>
    %137 = arith.mulf %124, %136 : vector<128x128xf32>
    %138 = arith.truncf %137 : vector<128x128xf32> to vector<128x128xbf16>
    %cst_63 = arith.constant dense<0.000000e+00> : vector<32x128xf32>
    %139 = tpu.matmul %23, %138, %cst_63 {dimension_numbers = #tpu.dot_dimension_numbers<[1], [0], [0], [1], [0, 0, 1, 1], [], []>} : vector<32x128xbf16>, vector<128x128xbf16>, vector<32x128xf32> -> vector<32x128xf32>
    %140 = vector.broadcast %39 : vector<32x1xf32> to vector<32x128xf32>
    %141 = arith.addf %139, %140 : vector<32x128xf32>
    %142 = arith.addf %98, %141 : vector<32x128xf32>
    %c1 = arith.constant 1 : index
    %c0_64 = arith.constant 0 : index
    %c0_65 = arith.constant 0 : index
    %143 = vector.load %arg6[%c1, %c0_64, %c0_65] : memref<2x256x32xbf16, #tpu.memory_space<vmem>>, vector<1x96x32xbf16>
    %144 = vector.shape_cast %143 : vector<1x96x32xbf16> to vector<96x32xbf16>
    %c1_66 = arith.constant 1 : index
    %c96_67 = arith.constant 96 : index
    %c0_68 = arith.constant 0 : index
    %145 = vector.load %arg6[%c1_66, %c96_67, %c0_68] : memref<2x256x32xbf16, #tpu.memory_space<vmem>>, vector<1x32x32xbf16>
    %146 = vector.shape_cast %145 : vector<1x32x32xbf16> to vector<32x32xbf16>
    %c1_69 = arith.constant 1 : index
    %c128_70 = arith.constant 128 : index
    %c0_71 = arith.constant 0 : index
    %147 = vector.load %arg6[%c1_69, %c128_70, %c0_71] : memref<2x256x32xbf16, #tpu.memory_space<vmem>>, vector<1x128x32xbf16>
    %148 = vector.shape_cast %147 : vector<1x128x32xbf16> to vector<128x32xbf16>
    %c1_72 = arith.constant 1 : index
    %c0_73 = arith.constant 0 : index
    %c0_74 = arith.constant 0 : index
    %149 = vector.load %arg7[%c1_72, %c0_73, %c0_74] : memref<2x32x128xbf16, #tpu.memory_space<vmem>>, vector<1x32x128xbf16>
    %150 = vector.shape_cast %149 : vector<1x32x128xbf16> to vector<32x128xbf16>
    %c1_75 = arith.constant 1 : index
    %c0_76 = arith.constant 0 : index
    %c0_77 = arith.constant 0 : index
    %151 = vector.load %arg8[%c1_75, %c0_76, %c0_77] : memref<2x416x1xf32, #tpu.memory_space<vmem>>, vector<1x32x1xf32>
    %152 = vector.shape_cast %151 : vector<1x32x1xf32> to vector<32x1xf32>
    %c1_78 = arith.constant 1 : index
    %c32_79 = arith.constant 32 : index
    %c0_80 = arith.constant 0 : index
    %153 = vector.load %arg8[%c1_78, %c32_79, %c0_80] : memref<2x416x1xf32, #tpu.memory_space<vmem>>, vector<1x32x1xf32>
    %154 = vector.shape_cast %153 : vector<1x32x1xf32> to vector<32x1xf32>
    %c1_81 = arith.constant 1 : index
    %c64_82 = arith.constant 64 : index
    %c0_83 = arith.constant 0 : index
    %155 = vector.load %arg8[%c1_81, %c64_82, %c0_83] : memref<2x416x1xf32, #tpu.memory_space<vmem>>, vector<1x96x1xf32>
    %156 = vector.shape_cast %155 : vector<1x96x1xf32> to vector<96x1xf32>
    %c1_84 = arith.constant 1 : index
    %c160_85 = arith.constant 160 : index
    %c0_86 = arith.constant 0 : index
    %157 = vector.load %arg8[%c1_84, %c160_85, %c0_86] : memref<2x416x1xf32, #tpu.memory_space<vmem>>, vector<1x32x1xf32>
    %158 = vector.shape_cast %157 : vector<1x32x1xf32> to vector<32x1xf32>
    %c1_87 = arith.constant 1 : index
    %c192_88 = arith.constant 192 : index
    %c0_89 = arith.constant 0 : index
    %159 = vector.load %arg8[%c1_87, %c192_88, %c0_89] : memref<2x416x1xf32, #tpu.memory_space<vmem>>, vector<1x32x1xf32>
    %160 = vector.shape_cast %159 : vector<1x32x1xf32> to vector<32x1xf32>
    %c1_90 = arith.constant 1 : index
    %c224_91 = arith.constant 224 : index
    %c0_92 = arith.constant 0 : index
    %161 = vector.load %arg8[%c1_90, %c224_91, %c0_92] : memref<2x416x1xf32, #tpu.memory_space<vmem>>, vector<1x32x1xf32>
    %162 = vector.shape_cast %161 : vector<1x32x1xf32> to vector<32x1xf32>
    %c1_93 = arith.constant 1 : index
    %c256_94 = arith.constant 256 : index
    %c0_95 = arith.constant 0 : index
    %163 = vector.load %arg8[%c1_93, %c256_94, %c0_95] : memref<2x416x1xf32, #tpu.memory_space<vmem>>, vector<1x128x1xf32>
    %164 = vector.shape_cast %163 : vector<1x128x1xf32> to vector<128x1xf32>
    %c1_96 = arith.constant 1 : index
    %c384_97 = arith.constant 384 : index
    %c0_98 = arith.constant 0 : index
    %165 = vector.load %arg8[%c1_96, %c384_97, %c0_98] : memref<2x416x1xf32, #tpu.memory_space<vmem>>, vector<1x32x1xf32>
    %166 = vector.shape_cast %165 : vector<1x32x1xf32> to vector<32x1xf32>
    %cst_99 = arith.constant dense<0.000000e+00> : vector<128xf32>
    %167 = vector.multi_reduction <add>, %142, %cst_99 [0] : vector<32x128xf32> to vector<128xf32>
    %168 = vector.shape_cast %167 : vector<128xf32> to vector<1x128xf32>
    %169 = arith.mulf %142, %142 : vector<32x128xf32>
    %cst_100 = arith.constant dense<0.000000e+00> : vector<128xf32>
    %170 = vector.multi_reduction <add>, %169, %cst_100 [0] : vector<32x128xf32> to vector<128xf32>
    %171 = vector.shape_cast %170 : vector<128xf32> to vector<1x128xf32>
    %cst_101 = arith.constant 3.125000e-02 : f32
    %172 = vector.broadcast %cst_101 : f32 to vector<1x128xf32>
    %173 = arith.mulf %168, %172 : vector<1x128xf32>
    %cst_102 = arith.constant 3.125000e-02 : f32
    %174 = vector.broadcast %cst_102 : f32 to vector<1x128xf32>
    %175 = arith.mulf %171, %174 : vector<1x128xf32>
    %176 = arith.mulf %173, %173 : vector<1x128xf32>
    %177 = arith.subf %175, %176 : vector<1x128xf32>
    %178 = vector.broadcast %173 : vector<1x128xf32> to vector<32x128xf32>
    %179 = arith.subf %142, %178 : vector<32x128xf32>
    %cst_103 = arith.constant 9.99999997E-7 : f32
    %180 = vector.broadcast %cst_103 : f32 to vector<1x128xf32>
    %181 = arith.addf %177, %180 : vector<1x128xf32>
    %182 = math.rsqrt %181 : vector<1x128xf32>
    %183 = vector.broadcast %182 : vector<1x128xf32> to vector<32x128xf32>
    %184 = arith.mulf %179, %183 : vector<32x128xf32>
    %185 = vector.broadcast %152 : vector<32x1xf32> to vector<32x128xf32>
    %186 = arith.mulf %184, %185 : vector<32x128xf32>
    %187 = vector.broadcast %154 : vector<32x1xf32> to vector<32x128xf32>
    %188 = arith.addf %186, %187 : vector<32x128xf32>
    %189 = arith.truncf %188 : vector<32x128xf32> to vector<32x128xbf16>
    %cst_104 = arith.constant dense<0.000000e+00> : vector<96x128xf32>
    %190 = tpu.matmul %144, %189, %cst_104 {dimension_numbers = #tpu.dot_dimension_numbers<[1], [0], [0], [1], [0, 0, 1, 1], [], []>} : vector<96x32xbf16>, vector<32x128xbf16>, vector<96x128xf32> -> vector<96x128xf32>
    %191 = vector.broadcast %156 : vector<96x1xf32> to vector<96x128xf32>
    %192 = arith.addf %190, %191 : vector<96x128xf32>
    %193 = vector.extract_strided_slice %192 {offsets = [0, 0], sizes = [32, 128], strides = [1, 1]} : vector<96x128xf32> to vector<32x128xf32>
    %194 = vector.shape_cast %193 : vector<32x128xf32> to vector<4x8x128xf32>
    %195 = vector.extract_strided_slice %192 {offsets = [32, 0], sizes = [32, 128], strides = [1, 1]} : vector<96x128xf32> to vector<32x128xf32>
    %196 = vector.shape_cast %195 : vector<32x128xf32> to vector<4x8x128xf32>
    %197 = vector.extract_strided_slice %192 {offsets = [64, 0], sizes = [32, 128], strides = [1, 1]} : vector<96x128xf32> to vector<32x128xf32>
    %198 = vector.shape_cast %197 : vector<32x128xf32> to vector<4x8x128xf32>
    %199 = tpu.transpose %194, [0, 2, 1] : vector<4x8x128xf32> -> vector<4x128x8xf32>
    %200 = arith.truncf %199 : vector<4x128x8xf32> to vector<4x128x8xbf16>
    %201 = arith.truncf %196 : vector<4x8x128xf32> to vector<4x8x128xbf16>
    "tpu.trace_start"() <{level = 10 : i32, message = "hqd,hdk->hqk"}> : () -> ()
    %cst_105 = arith.constant dense<0.000000e+00> : vector<4x128x128xf32>
    %202 = tpu.matmul %200, %201, %cst_105 {dimension_numbers = #tpu.dot_dimension_numbers<[2], [1], [1], [2], [0, 0, 0, 1, 1, 2], [0], [0]>} : vector<4x128x8xbf16>, vector<4x8x128xbf16>, vector<4x128x128xf32> -> vector<4x128x128xf32>
    "tpu.trace_stop"() : () -> ()
    %c0_106 = arith.constant 0 : index
    %c0_107 = arith.constant 0 : index
    %203 = vector.load %arg9[%c0_106, %c0_107] : memref<128x128xf32, #tpu.memory_space<vmem>>, vector<128x128xf32>
    %204 = vector.shape_cast %203 : vector<128x128xf32> to vector<1x128x128xf32>
    %205 = vector.broadcast %204 : vector<1x128x128xf32> to vector<4x128x128xf32>
    %206 = arith.addf %202, %205 : vector<4x128x128xf32>
    %cst_108 = arith.constant dense<0xFF800000> : vector<4x128xf32>
    %207 = vector.multi_reduction <maximumf>, %206, %cst_108 [2] : vector<4x128x128xf32> to vector<4x128xf32>
    %208 = vector.shape_cast %207 : vector<4x128xf32> to vector<4x128x1xf32>
    %209 = vector.broadcast %208 : vector<4x128x1xf32> to vector<4x128x128xf32>
    %210 = arith.subf %206, %209 : vector<4x128x128xf32>
    %211 = math.exp %210 : vector<4x128x128xf32>
    %cst_109 = arith.constant dense<0.000000e+00> : vector<4x128xf32>
    %212 = vector.multi_reduction <add>, %211, %cst_109 [2] : vector<4x128x128xf32> to vector<4x128xf32>
    %213 = vector.shape_cast %212 : vector<4x128xf32> to vector<4x128x1xf32>
    %214 = tpu.reciprocal %213 {approx = true} : vector<4x128x1xf32> -> vector<4x128x1xf32>
    %215 = vector.broadcast %214 : vector<4x128x1xf32> to vector<4x128x128xf32>
    %216 = arith.mulf %211, %215 : vector<4x128x128xf32>
    %217 = arith.truncf %198 : vector<4x8x128xf32> to vector<4x8x128xbf16>
    %218 = arith.truncf %216 : vector<4x128x128xf32> to vector<4x128x128xbf16>
    "tpu.trace_start"() <{level = 10 : i32, message = "hdk,hqk->hdq"}> : () -> ()
    %cst_110 = arith.constant dense<0.000000e+00> : vector<4x8x128xf32>
    %219 = tpu.matmul %217, %218, %cst_110 {dimension_numbers = #tpu.dot_dimension_numbers<[2], [2], [1], [1], [0, 0, 0, 1, 1, 1], [0], [0]>} : vector<4x8x128xbf16>, vector<4x128x128xbf16>, vector<4x8x128xf32> -> vector<4x8x128xf32>
    "tpu.trace_stop"() : () -> ()
    %220 = vector.shape_cast %219 : vector<4x8x128xf32> to vector<32x128xf32>
    %221 = arith.truncf %220 : vector<32x128xf32> to vector<32x128xbf16>
    %cst_111 = arith.constant dense<0.000000e+00> : vector<32x128xf32>
    %222 = tpu.matmul %146, %221, %cst_111 {dimension_numbers = #tpu.dot_dimension_numbers<[1], [0], [0], [1], [0, 0, 1, 1], [], []>} : vector<32x32xbf16>, vector<32x128xbf16>, vector<32x128xf32> -> vector<32x128xf32>
    %223 = arith.addf %142, %222 : vector<32x128xf32>
    %224 = vector.broadcast %158 : vector<32x1xf32> to vector<32x128xf32>
    %225 = arith.addf %223, %224 : vector<32x128xf32>
    %cst_112 = arith.constant dense<0.000000e+00> : vector<128xf32>
    %226 = vector.multi_reduction <add>, %225, %cst_112 [0] : vector<32x128xf32> to vector<128xf32>
    %227 = vector.shape_cast %226 : vector<128xf32> to vector<1x128xf32>
    %228 = arith.mulf %225, %225 : vector<32x128xf32>
    %cst_113 = arith.constant dense<0.000000e+00> : vector<128xf32>
    %229 = vector.multi_reduction <add>, %228, %cst_113 [0] : vector<32x128xf32> to vector<128xf32>
    %230 = vector.shape_cast %229 : vector<128xf32> to vector<1x128xf32>
    %cst_114 = arith.constant 3.125000e-02 : f32
    %231 = vector.broadcast %cst_114 : f32 to vector<1x128xf32>
    %232 = arith.mulf %227, %231 : vector<1x128xf32>
    %cst_115 = arith.constant 3.125000e-02 : f32
    %233 = vector.broadcast %cst_115 : f32 to vector<1x128xf32>
    %234 = arith.mulf %230, %233 : vector<1x128xf32>
    %235 = arith.mulf %232, %232 : vector<1x128xf32>
    %236 = arith.subf %234, %235 : vector<1x128xf32>
    %237 = vector.broadcast %232 : vector<1x128xf32> to vector<32x128xf32>
    %238 = arith.subf %225, %237 : vector<32x128xf32>
    %cst_116 = arith.constant 9.99999997E-7 : f32
    %239 = vector.broadcast %cst_116 : f32 to vector<1x128xf32>
    %240 = arith.addf %236, %239 : vector<1x128xf32>
    %241 = math.rsqrt %240 : vector<1x128xf32>
    %242 = vector.broadcast %241 : vector<1x128xf32> to vector<32x128xf32>
    %243 = arith.mulf %238, %242 : vector<32x128xf32>
    %244 = vector.broadcast %160 : vector<32x1xf32> to vector<32x128xf32>
    %245 = arith.mulf %243, %244 : vector<32x128xf32>
    %246 = vector.broadcast %162 : vector<32x1xf32> to vector<32x128xf32>
    %247 = arith.addf %245, %246 : vector<32x128xf32>
    %248 = arith.truncf %247 : vector<32x128xf32> to vector<32x128xbf16>
    %cst_117 = arith.constant dense<0.000000e+00> : vector<128x128xf32>
    %249 = tpu.matmul %148, %248, %cst_117 {dimension_numbers = #tpu.dot_dimension_numbers<[1], [0], [0], [1], [0, 0, 1, 1], [], []>} : vector<128x32xbf16>, vector<32x128xbf16>, vector<128x128xf32> -> vector<128x128xf32>
    %250 = vector.broadcast %164 : vector<128x1xf32> to vector<128x128xf32>
    %251 = arith.addf %249, %250 : vector<128x128xf32>
    %252 = arith.mulf %251, %251 : vector<128x128xf32>
    %253 = arith.mulf %251, %252 : vector<128x128xf32>
    %cst_118 = arith.constant 4.471500e-02 : f32
    %254 = vector.broadcast %cst_118 : f32 to vector<128x128xf32>
    %255 = arith.mulf %254, %253 : vector<128x128xf32>
    %256 = arith.addf %251, %255 : vector<128x128xf32>
    %cst_119 = arith.constant 0.797884583 : f32
    %257 = vector.broadcast %cst_119 : f32 to vector<128x128xf32>
    %258 = arith.mulf %257, %256 : vector<128x128xf32>
    %259 = math.tanh %258 : vector<128x128xf32>
    %cst_120 = arith.constant 1.000000e+00 : f32
    %260 = vector.broadcast %cst_120 : f32 to vector<128x128xf32>
    %261 = arith.addf %260, %259 : vector<128x128xf32>
    %cst_121 = arith.constant 5.000000e-01 : f32
    %262 = vector.broadcast %cst_121 : f32 to vector<128x128xf32>
    %263 = arith.mulf %262, %261 : vector<128x128xf32>
    %264 = arith.mulf %251, %263 : vector<128x128xf32>
    %265 = arith.truncf %264 : vector<128x128xf32> to vector<128x128xbf16>
    %cst_122 = arith.constant dense<0.000000e+00> : vector<32x128xf32>
    %266 = tpu.matmul %150, %265, %cst_122 {dimension_numbers = #tpu.dot_dimension_numbers<[1], [0], [0], [1], [0, 0, 1, 1], [], []>} : vector<32x128xbf16>, vector<128x128xbf16>, vector<32x128xf32> -> vector<32x128xf32>
    %267 = vector.broadcast %166 : vector<32x1xf32> to vector<32x128xf32>
    %268 = arith.addf %266, %267 : vector<32x128xf32>
    %269 = arith.addf %225, %268 : vector<32x128xf32>
    %c0_123 = arith.constant 0 : index
    %c0_124 = arith.constant 0 : index
    %c0_125 = arith.constant 0 : index
    %270 = vector.load %arg10[%c0_123, %c0_124, %c0_125] : memref<1x32x128xf32, #tpu.memory_space<vmem>>, vector<1x32x128xf32>
    %271 = vector.shape_cast %270 : vector<1x32x128xf32> to vector<32x128xf32>
    %272 = vector.shape_cast %269 : vector<32x128xf32> to vector<1x32x128xf32>
    tpu.vector_store %arg10[%c0_123, %c0_124, %c0_125], %272 {strides = array<i32>} : memref<1x32x128xf32, #tpu.memory_space<vmem>>, vector<1x32x128xf32>,
    return
  }
  func.func @transform_0(%arg0: i32) -> (i32, i32, i32) {
    %c0_i32 = arith.constant 0 : i32
    %c0_i32_0 = arith.constant 0 : i32
    %c0_i32_1 = arith.constant 0 : i32
    return %arg0, %c0_i32, %c0_i32_0 : i32, i32, i32
  }
  func.func @transform_1(%arg0: i32) -> (i32, i32, i32) {
    %c0_i32 = arith.constant 0 : i32
    %c0_i32_0 = arith.constant 0 : i32
    %c0_i32_1 = arith.constant 0 : i32
    return %arg0, %c0_i32, %c0_i32_0 : i32, i32, i32
  }
  func.func @transform_2(%arg0: i32) -> (i32, i32) {
    %c0_i32 = arith.constant 0 : i32
    %c0_i32_0 = arith.constant 0 : i32
    %c0_i32_1 = arith.constant 0 : i32
    return %c0_i32, %c0_i32_0 : i32, i32
  }
  func.func @transform_3(%arg0: i32) -> (i32, i32) {
    %c0_i32 = arith.constant 0 : i32
    %c0_i32_0 = arith.constant 0 : i32
    %c0_i32_1 = arith.constant 0 : i32
    return %c0_i32, %c0_i32_0 : i32, i32
  }
  func.func @transform_4(%arg0: i32) -> (i32, i32, i32) {
    %c0_i32 = arith.constant 0 : i32
    %c0_i32_0 = arith.constant 0 : i32
    %c0_i32_1 = arith.constant 0 : i32
    return %arg0, %c0_i32, %c0_i32_0 : i32, i32, i32
  }
  func.func @transform_5(%arg0: i32) -> (i32, i32, i32) {
    %c0_i32 = arith.constant 0 : i32
    %c0_i32_0 = arith.constant 0 : i32
    %c0_i32_1 = arith.constant 0 : i32
    %c0_i32_2 = arith.constant 0 : i32
    return %c0_i32, %c0_i32_0, %c0_i32_1 : i32, i32, i32
  }
  func.func @transform_6(%arg0: i32) -> (i32, i32, i32) {
    %c0_i32 = arith.constant 0 : i32
    %c0_i32_0 = arith.constant 0 : i32
    %c0_i32_1 = arith.constant 0 : i32
    %c0_i32_2 = arith.constant 0 : i32
    return %c0_i32, %c0_i32_0, %c0_i32_1 : i32, i32, i32
  }
  func.func @transform_7(%arg0: i32) -> (i32, i32, i32) {
    %c0_i32 = arith.constant 0 : i32
    %c0_i32_0 = arith.constant 0 : i32
    %c0_i32_1 = arith.constant 0 : i32
    %c0_i32_2 = arith.constant 0 : i32
    return %c0_i32, %c0_i32_0, %c0_i32_1 : i32, i32, i32
  }
  func.func @transform_8(%arg0: i32) -> (i32, i32) {
    %c0_i32 = arith.constant 0 : i32
    %c0_i32_0 = arith.constant 0 : i32
    %c0_i32_1 = arith.constant 0 : i32
    return %c0_i32, %c0_i32_0 : i32, i32
  }
  func.func @transform_9(%arg0: i32) -> (i32, i32, i32) {
    %c0_i32 = arith.constant 0 : i32
    %c0_i32_0 = arith.constant 0 : i32
    %c0_i32_1 = arith.constant 0 : i32
    return %arg0, %c0_i32, %c0_i32_0 : i32, i32, i32
  }
}

</mosaic_0001>

<llo_original>
// kernel: eq.10
$region0: #{eq.10}
  %s0 = inlined_call_operand.vmem [shape: s32[2,64], index: 0, kind: input, shape index: {}]
  %s1 = inlined_call_operand.vmem [shape: s32[128], index: 1, kind: output, shape index: {}]
  $region1: #{eq.10} parent=0
    #allocation0 [shape = 'u8[4096]{0}', space=vmem, size = 0x1000, scoped, tag = 'scoped mem for output reshape']
    #allocation1 [shape = 'u8[4096]{0}', space=vmem, size = 0x1000, scoped, tag = 'scoped mem for input reshape']
    %s3 = sshllo.u32 0, 2
    %v4 = vld [vmem:[%s0] sm:%s3]
    %5 = vst [vmem:[#allocation1] sm:%s3] %v4
    %v6 = vld [vmem:[#allocation1] sm:$0x1]
    %vm7 = vcmask 523264
    %8 = vst.msk [vmem:[#allocation0] sm:$0x1] %vm7, %v6
    %s9 = scalar_lea.vmem [#allocation1], 1
    %v10 = vld [vmem:[%s9] sm:$0x1]
    %11 = vrot.lane.b32.xlu0 %v10, 64
    %v12 = vpop.permute.xlu0 %11
    %vm13 = vcmask 1048064
    %14 = vst.msk [vmem:[#allocation0] sm:$0x1] %vm13, %v12
    %s16 = sshllo.u32 0, 1
    %v18 = vld [vmem:[#allocation0] sm:%s16]
    %s19 = sshllo.u32 0, 1
    %20 = vst [vmem:[%s1] sm:%s19] %v18

// kernel: aggregation_forward.1
$region0: #{aggregation_forward.1}
  #allocation0 [shape = 'u32[]', space=smem, size = 0x4, offset = 0x4, fixed_abs, tag = 'smem constant byte address 0x4 - core index']
  #allocation1 [shape = 'u32[144,128]{1,0:T(1,128)}', space=vmem, size = 0x12000, scoped, tag = 'internal scratch']
  %s0 = inlined_call_operand.vmem [shape: f32[1,16,128], index: 0, kind: input, shape index: {}]
  %s1 = inlined_call_operand.vmem [shape: f32[1,16,128], index: 1, kind: input, shape index: {}]
  %s2 = inlined_call_operand.vmem [shape: f32[16,1], index: 2, kind: input, shape index: {}]
  %s3 = inlined_call_operand.vmem [shape: bf16[32,16], index: 3, kind: input, shape index: {}]
  %s4 = inlined_call_operand.vmem [shape: f32[1,32,128], index: 4, kind: input, shape index: {}]
  %s5 = inlined_call_operand.vmem [shape: bf16[2,256,32], index: 5, kind: input, shape index: {}]
  %s6 = inlined_call_operand.vmem [shape: bf16[2,32,128], index: 6, kind: input, shape index: {}]
  %s7 = inlined_call_operand.vmem [shape: f32[2,416,1], index: 7, kind: input, shape index: {}]
  %s8 = inlined_call_operand.vmem [shape: f32[128,128], index: 8, kind: input, shape index: {}]
  %s9 = inlined_call_operand.vmem [shape: f32[1,32,128], index: 9, kind: output, shape index: {}]
  %s10 = sld [smem:[#allocation0]]
  $region46: #{aggregation_forward.1} parent=0
    _
  %s12 = ssub.s32 1, %s10
  %s13 = scalar_select 0, %s12, %s10
  // Predicated region
  $region2: #{aggregation_forward.1} parent=0 // pred_check
    _
  $region3: #{aggregation_forward.1} parent=0 // pred_check_branch
    %15 = sbr.rel (0) target = $region5
  $region4: #{aggregation_forward.1} parent=0 // pred_region
    _
  $region5: #{aggregation_forward.1} parent=0 // pred_fallthru
    _
  // Predicated region
  $region6: #{aggregation_forward.1} parent=0 // pred_check
    _
  $region7: #{aggregation_forward.1} parent=0 // pred_check_branch
    %17 = sbr.rel (0) target = $region9
  $region8: #{aggregation_forward.1} parent=0 // pred_region
    _
  $region9: #{aggregation_forward.1} parent=0 // pred_fallthru
    _
  // Predicated region
  $region10: #{aggregation_forward.1} parent=0 // pred_check
    _
  $region11: #{aggregation_forward.1} parent=0 // pred_check_branch
    %19 = sbr.rel (0) target = $region13
  $region12: #{aggregation_forward.1} parent=0 // pred_region
    _
  $region13: #{aggregation_forward.1} parent=0 // pred_fallthru
    _
  // Predicated region
  $region14: #{aggregation_forward.1} parent=0 // pred_check
    _
  $region15: #{aggregation_forward.1} parent=0 // pred_check_branch
    %21 = sbr.rel (0) target = $region17
  $region16: #{aggregation_forward.1} parent=0 // pred_region
    _
  $region17: #{aggregation_forward.1} parent=0 // pred_fallthru
    _
  // Predicated region
  $region18: #{aggregation_forward.1} parent=0 // pred_check
    _
  $region19: #{aggregation_forward.1} parent=0 // pred_check_branch
    %23 = sbr.rel (0) target = $region21
  $region20: #{aggregation_forward.1} parent=0 // pred_region
    _
  $region21: #{aggregation_forward.1} parent=0 // pred_fallthru
    _
  // Predicated region
  $region22: #{aggregation_forward.1} parent=0 // pred_check
    _
  $region23: #{aggregation_forward.1} parent=0 // pred_check_branch
    %25 = sbr.rel (0) target = $region25
  $region24: #{aggregation_forward.1} parent=0 // pred_region
    _
  $region25: #{aggregation_forward.1} parent=0 // pred_fallthru
    _
  // Predicated region
  $region26: #{aggregation_forward.1} parent=0 // pred_check
    _
  $region27: #{aggregation_forward.1} parent=0 // pred_check_branch
    %27 = sbr.rel (0) target = $region29
  $region28: #{aggregation_forward.1} parent=0 // pred_region
    _
  $region29: #{aggregation_forward.1} parent=0 // pred_fallthru
    _
  // Predicated region
  $region30: #{aggregation_forward.1} parent=0 // pred_check
    _
  $region31: #{aggregation_forward.1} parent=0 // pred_check_branch
    %29 = sbr.rel (0) target = $region33
  $region32: #{aggregation_forward.1} parent=0 // pred_region
    _
  $region33: #{aggregation_forward.1} parent=0 // pred_fallthru
    _
  // Predicated region
  $region34: #{aggregation_forward.1} parent=0 // pred_check
    _
  $region35: #{aggregation_forward.1} parent=0 // pred_check_branch
    %31 = sbr.rel (0) target = $region37
  $region36: #{aggregation_forward.1} parent=0 // pred_region
    _
  $region37: #{aggregation_forward.1} parent=0 // pred_fallthru
    _
  %v33 = vld [vmem:[%s1] sm:$0xff]
  %v34 = vld [vmem:[%s1 + $0x8] sm:$0xff]
  %vm35 = vcmp.ne.f32.partialorder %v33, 0.0
  %vm36 = vcmp.ne.f32.partialorder %v34, 0.0
  %v37 = vld [vmem:[%s0] sm:$0xff]
  %v38 = vld [vmem:[%s0 + $0x8] sm:$0xff]
  %v39 = vld [vmem:[%s2] sm:$0xff]
  %v40 = vld [vmem:[%s2 + $0x8] sm:$0xff]
  %42 = vset.pattern.permute.xlu0 0
  %43 = vperm.xlu0 %42, %v39
  %v44 = vpop.permute.xlu0 %43
  %47 = vset.pattern.permute.xlu0 0
  %48 = vperm.xlu0 %47, %v40
  %v49 = vpop.permute.xlu0 %48
  %v51 = vsel %vm35, %v37, %v44
  %v52 = vsel %vm36, %v38, %v49
  %v53 = vld [vmem:[%s3] sm:$0xf]
  %v54 = vld [vmem:[%s3 + $0x4] sm:$0xf]
  %v55 = vld [vmem:[%s3 + $0x8] sm:$0xf]
  %v56 = vld [vmem:[%s3 + $0xc] sm:$0xf]
  %v57 = vpack.c.bf16 %v52, %v51
  %v58 = vld [vmem:[%s4] sm:$0xff]
  %v59 = vld [vmem:[%s4 + $0x8] sm:$0xff]
  %v60 = vld [vmem:[%s4 + $0x10] sm:$0xff]
  %v61 = vld [vmem:[%s4 + $0x18] sm:$0xff]
  %v66 = vunpack.c.l.b16 %v53
  %v67 = vunpack.c.l.b16 %v54
  %v68 = vunpack.c.l.b16 %v55
  %v69 = vunpack.c.l.b16 %v56
  %v70 = vpack.c.b16 %v67, %v66
  %v71 = vpack.c.b16 %v69, %v68
  %vm72 = vcmask 130048
  %v74 = vsel %vm72, %v70, 0
  %v77 = vsel %vm72, %v71, 0
  %79 = vmatprep.subr.bf16.mxu0 0
  %80 = vmatpush1.bf16.msra.mxu0 %v57
  %81 = vmatprep.subr.bf16.mxu0 0
  %82 = vmatpush1.bf16.msra.mxu0 0
  %83 = vmatprep.subr.bf16.mxu0 0
  %84 = vmatpush1.bf16.msra.mxu0 0
  %85 = vmatprep.subr.bf16.mxu0 0
  %86 = vmatpush1.bf16.msra.mxu0 0
  %87 = vmatprep.subr.bf16.mxu0 0
  %88 = vmatpush1.bf16.msra.mxu0 0
  %89 = vmatprep.subr.bf16.mxu0 0
  %90 = vmatpush1.bf16.msra.mxu0 0
  %91 = vmatprep.subr.bf16.mxu0 0
  %92 = vmatpush1.bf16.msra.mxu0 0
  %93 = vmatprep.subr.bf16.mxu0 0
  %94 = vmatpush1.bf16.msra.mxu0 0
  %95 = vmatprep.subr.bf16.mxu0 0
  %96 = vmatpush1.bf16.msra.mxu0 0
  %97 = vmatprep.subr.bf16.mxu0 0
  %98 = vmatpush1.bf16.msra.mxu0 0
  %99 = vmatprep.subr.bf16.mxu0 0
  %100 = vmatpush1.bf16.msra.mxu0 0
  %101 = vmatprep.subr.bf16.mxu0 0
  %102 = vmatpush1.bf16.msra.mxu0 0
  %103 = vmatprep.subr.bf16.mxu0 0
  %104 = vmatpush1.bf16.msra.mxu0 0
  %105 = vmatprep.subr.bf16.mxu0 0
  %106 = vmatpush1.bf16.msra.mxu0 0
  %107 = vmatprep.subr.bf16.mxu0 0
  %108 = vmatpush1.bf16.msra.mxu0 0
  %109 = vmatprep.subr.bf16.mxu0 0
  %110 = vmatpush1.bf16.msra.mxu0 0
  %111 = vmatprep.mubr.bf16.mxu0 0
  %112 = vmatmul.mubr.bf16.gmra.mrb[0].mxu0 %v74
  %v113 = vpop.f32.mrb[0].mxu0
  %v114 = vadd.f32 %v58, %v113
  %v115 = vpop.f32.mrb[0].mxu0
  %v116 = vpop.f32.mrb[0].mxu0
  %v117 = vadd.f32 %v59, %v116
  %v118 = vpop.f32.mrb[0].mxu0
  %119 = vmatprep.mubr.bf16.mxu0 0
  %120 = vmatmul.mubr.bf16.gmra.mrb[0].mxu0 %v77
  %v121 = vpop.f32.mrb[0].mxu0
  %v122 = vadd.f32 %v60, %v121
  %v123 = vpop.f32.mrb[0].mxu0
  %v124 = vpop.f32.mrb[0].mxu0
  %v125 = vadd.f32 %v61, %v124
  %v126 = vpop.f32.mrb[0].mxu0
  %127 = vdwg.mxu0
  %v128 = vld [vmem:[%s5] sm:$0xf]
  %v129 = vld [vmem:[%s5 + $0x4] sm:$0xf]
  %v130 = vld [vmem:[%s5 + $0x8] sm:$0xf]
  %v131 = vld [vmem:[%s5 + $0xc] sm:$0xf]
  %v132 = vld [vmem:[%s5 + $0x10] sm:$0xf]
  %v133 = vld [vmem:[%s5 + $0x14] sm:$0xf]
  %v134 = vld [vmem:[%s5 + $0x18] sm:$0xf]
  %v135 = vld [vmem:[%s5 + $0x1c] sm:$0xf]
  %v136 = vld [vmem:[%s5 + $0x20] sm:$0xf]
  %v137 = vld [vmem:[%s5 + $0x24] sm:$0xf]
  %v138 = vld [vmem:[%s5 + $0x28] sm:$0xf]
  %v139 = vld [vmem:[%s5 + $0x2c] sm:$0xf]
  %v140 = vld [vmem:[%s5 + $0x30] sm:$0xf]
  %v141 = vld [vmem:[%s5 + $0x34] sm:$0xf]
  %v142 = vld [vmem:[%s5 + $0x38] sm:$0xf]
  %v143 = vld [vmem:[%s5 + $0x3c] sm:$0xf]
  %v144 = vld [vmem:[%s5 + $0x40] sm:$0xf]
  %v145 = vld [vmem:[%s5 + $0x44] sm:$0xf]
  %v146 = vld [vmem:[%s5 + $0x48] sm:$0xf]
  %v147 = vld [vmem:[%s5 + $0x4c] sm:$0xf]
  %v148 = vld [vmem:[%s5 + $0x50] sm:$0xf]
  %v149 = vld [vmem:[%s5 + $0x54] sm:$0xf]
  %v150 = vld [vmem:[%s5 + $0x58] sm:$0xf]
  %v151 = vld [vmem:[%s5 + $0x5c] sm:$0xf]
  %v152 = vld [vmem:[%s5 + $0x60] sm:$0xf]
  %v153 = vld [vmem:[%s5 + $0x64] sm:$0xf]
  %v154 = vld [vmem:[%s5 + $0x68] sm:$0xf]
  %v155 = vld [vmem:[%s5 + $0x6c] sm:$0xf]
  %v156 = vld [vmem:[%s5 + $0x70] sm:$0xf]
  %v157 = vld [vmem:[%s5 + $0x74] sm:$0xf]
  %v158 = vld [vmem:[%s5 + $0x78] sm:$0xf]
  %v159 = vld [vmem:[%s5 + $0x7c] sm:$0xf]
  %v160 = vld [vmem:[%s6] sm:$0xf]
  %v161 = vld [vmem:[%s6 + $0x4] sm:$0xf]
  %v162 = vld [vmem:[%s6 + $0x8] sm:$0xf]
  %v163 = vld [vmem:[%s6 + $0xc] sm:$0xf]
  %v164 = vld [vmem:[%s7] sm:$0xff]
  %v165 = vld [vmem:[%s7 + $0x8] sm:$0xff]
  %v166 = vld [vmem:[%s7 + $0x10] sm:$0xff]
  %v167 = vld [vmem:[%s7 + $0x18] sm:$0xff]
  %v168 = vld [vmem:[%s7 + $0x20] sm:$0xff]
  %v169 = vld [vmem:[%s7 + $0x28] sm:$0xff]
  %v170 = vld [vmem:[%s7 + $0x30] sm:$0xff]
  %v171 = vld [vmem:[%s7 + $0x38] sm:$0xff]
  %v172 = vld [vmem:[%s7 + $0x40] sm:$0xff]
  %v173 = vld [vmem:[%s7 + $0x48] sm:$0xff]
  %v174 = vld [vmem:[%s7 + $0x50] sm:$0xff]
  %v175 = vld [vmem:[%s7 + $0x58] sm:$0xff]
  %v176 = vld [vmem:[%s7 + $0x60] sm:$0xff]
  %v177 = vld [vmem:[%s7 + $0x68] sm:$0xff]
  %v178 = vld [vmem:[%s7 + $0x70] sm:$0xff]
  %v179 = vld [vmem:[%s7 + $0x78] sm:$0xff]
  %v180 = vld [vmem:[%s7 + $0x80] sm:$0xff]
  %v181 = vld [vmem:[%s7 + $0x88] sm:$0xff]
  %v182 = vld [vmem:[%s7 + $0x90] sm:$0xff]
  %v183 = vld [vmem:[%s7 + $0x98] sm:$0xff]
  %v184 = vld [vmem:[%s7 + $0xa0] sm:$0xff]
  %v185 = vld [vmem:[%s7 + $0xa8] sm:$0xff]
  %v186 = vld [vmem:[%s7 + $0xb0] sm:$0xff]
  %v187 = vld [vmem:[%s7 + $0xb8] sm:$0xff]
  %v188 = vld [vmem:[%s7 + $0xc0] sm:$0xff]
  %v189 = vld [vmem:[%s7 + $0xc8] sm:$0xff]
  %v190 = vld [vmem:[%s7 + $0xd0] sm:$0xff]
  %v191 = vld [vmem:[%s7 + $0xd8] sm:$0xff]
  %v192 = vld [vmem:[%s7 + $0xe0] sm:$0xff]
  %v193 = vld [vmem:[%s7 + $0xe8] sm:$0xff]
  %v194 = vld [vmem:[%s7 + $0xf0] sm:$0xff]
  %v195 = vld [vmem:[%s7 + $0xf8] sm:$0xff]
  %v196 = vld [vmem:[%s7 + $0x100] sm:$0xff]
  %v197 = vld [vmem:[%s7 + $0x108] sm:$0xff]
  %v198 = vld [vmem:[%s7 + $0x110] sm:$0xff]
  %v199 = vld [vmem:[%s7 + $0x118] sm:$0xff]
  %v200 = vld [vmem:[%s7 + $0x120] sm:$0xff]
  %v201 = vld [vmem:[%s7 + $0x128] sm:$0xff]
  %v202 = vld [vmem:[%s7 + $0x130] sm:$0xff]
  %v203 = vld [vmem:[%s7 + $0x138] sm:$0xff]
  %v204 = vld [vmem:[%s7 + $0x140] sm:$0xff]
  %v205 = vld [vmem:[%s7 + $0x148] sm:$0xff]
  %v206 = vld [vmem:[%s7 + $0x150] sm:$0xff]
  %v207 = vld [vmem:[%s7 + $0x158] sm:$0xff]
  %v208 = vld [vmem:[%s7 + $0x160] sm:$0xff]
  %v209 = vld [vmem:[%s7 + $0x168] sm:$0xff]
  %v210 = vld [vmem:[%s7 + $0x170] sm:$0xff]
  %v211 = vld [vmem:[%s7 + $0x178] sm:$0xff]
  %v212 = vld [vmem:[%s7 + $0x180] sm:$0xff]
  %v213 = vld [vmem:[%s7 + $0x188] sm:$0xff]
  %v214 = vld [vmem:[%s7 + $0x190] sm:$0xff]
  %v215 = vld [vmem:[%s7 + $0x198] sm:$0xff]
  %v216 = vadd.f32 %v114, %v117
  %v217 = vadd.f32 %v216, %v122
  %v218 = vadd.f32 %v217, %v125
  %v219 = vrot.slane %v218, 4
  %v220 = vadd.f32 %v218, %v219
  %v221 = vrot.slane %v220, 2
  %v222 = vadd.f32 %v220, %v221
  %v223 = vrot.slane %v222, 1
  %v224 = vadd.f32 %v222, %v223
  %v225 = vmul.f32 %v114, %v114
  %v226 = vmul.f32 %v117, %v117
  %v227 = vmul.f32 %v122, %v122
  %v228 = vmul.f32 %v125, %v125
  %v229 = vadd.f32 %v225, %v226
  %v230 = vadd.f32 %v229, %v227
  %v231 = vadd.f32 %v230, %v228
  %v232 = vrot.slane %v231, 4
  %v233 = vadd.f32 %v231, %v232
  %v234 = vrot.slane %v233, 2
  %v235 = vadd.f32 %v233, %v234
  %v236 = vrot.slane %v235, 1
  %v237 = vadd.f32 %v235, %v236
  %v238 = vmul.f32 %v224, 0.03125
  %v239 = vmul.f32 %v237, 0.03125
  %v240 = vmul.f32 %v238, %v238
  %v241 = vsub.f32 %v239, %v240
  %v242 = vsub.f32 %v114, %v238
  %v243 = vsub.f32 %v117, %v238
  %v244 = vsub.f32 %v122, %v238
  %v245 = vsub.f32 %v125, %v238
  %v246 = vadd.f32 %v241, 1e-06
  %v247 = vrsqrt.pop %v246
  %v248 = vmul.f32 %v242, %v247
  %v249 = vmul.f32 %v243, %v247
  %v250 = vmul.f32 %v244, %v247
  %v251 = vmul.f32 %v245, %v247
  %253 = vset.pattern.permute.xlu0 0
  %254 = vperm.xlu0 %253, %v164
  %v255 = vpop.permute.xlu0 %254
  %258 = vset.pattern.permute.xlu0 0
  %259 = vperm.xlu0 %258, %v165
  %v260 = vpop.permute.xlu0 %259
  %263 = vset.pattern.permute.xlu0 0
  %264 = vperm.xlu0 %263, %v166
  %v265 = vpop.permute.xlu0 %264
  %268 = vset.pattern.permute.xlu0 0
  %269 = vperm.xlu0 %268, %v167
  %v270 = vpop.permute.xlu0 %269
  %v272 = vmul.f32 %v248, %v255
  %v273 = vmul.f32 %v249, %v260
  %v274 = vmul.f32 %v250, %v265
  %v275 = vmul.f32 %v251, %v270
  %277 = vset.pattern.permute.xlu0 0
  %278 = vperm.xlu0 %277, %v168
  %v279 = vpop.permute.xlu0 %278
  %282 = vset.pattern.permute.xlu0 0
  %283 = vperm.xlu0 %282, %v169
  %v284 = vpop.permute.xlu0 %283
  %287 = vset.pattern.permute.xlu0 0
  %288 = vperm.xlu0 %287, %v170
  %v289 = vpop.permute.xlu0 %288
  %292 = vset.pattern.permute.xlu0 0
  %293 = vperm.xlu0 %292, %v171
  %v294 = vpop.permute.xlu0 %293
  %v296 = vadd.f32 %v272, %v279
  %v297 = vadd.f32 %v273, %v284
  %v298 = vadd.f32 %v274, %v289
  %v299 = vadd.f32 %v275, %v294
  %v300 = vpack.c.bf16 %v297, %v296
  %v301 = vpack.c.bf16 %v299, %v298
  %303 = vset.pattern.permute.xlu0 0
  %304 = vperm.xlu0 %303, %v172
  %v305 = vpop.permute.xlu0 %304
  %308 = vset.pattern.permute.xlu0 0
  %309 = vperm.xlu0 %308, %v173
  %v310 = vpop.permute.xlu0 %309
  %313 = vset.pattern.permute.xlu0 0
  %314 = vperm.xlu0 %313, %v174
  %v315 = vpop.permute.xlu0 %314
  %318 = vset.pattern.permute.xlu0 0
  %319 = vperm.xlu0 %318, %v175
  %v320 = vpop.permute.xlu0 %319
  %323 = vset.pattern.permute.xlu0 0
  %324 = vperm.xlu0 %323, %v176
  %v325 = vpop.permute.xlu0 %324
  %328 = vset.pattern.permute.xlu0 0
  %329 = vperm.xlu0 %328, %v177
  %v330 = vpop.permute.xlu0 %329
  %333 = vset.pattern.permute.xlu0 0
  %334 = vperm.xlu0 %333, %v178
  %v335 = vpop.permute.xlu0 %334
  %338 = vset.pattern.permute.xlu0 0
  %339 = vperm.xlu0 %338, %v179
  %v340 = vpop.permute.xlu0 %339
  %343 = vset.pattern.permute.xlu0 0
  %344 = vperm.xlu0 %343, %v180
  %v345 = vpop.permute.xlu0 %344
  %348 = vset.pattern.permute.xlu0 0
  %349 = vperm.xlu0 %348, %v181
  %v350 = vpop.permute.xlu0 %349
  %353 = vset.pattern.permute.xlu0 0
  %354 = vperm.xlu0 %353, %v182
  %v355 = vpop.permute.xlu0 %354
  %358 = vset.pattern.permute.xlu0 0
  %359 = vperm.xlu0 %358, %v183
  %v360 = vpop.permute.xlu0 %359
  %v374 = vunpack.c.l.b16 %v128
  %v375 = vunpack.c.l.b16 %v129
  %v376 = vunpack.c.l.b16 %v130
  %v377 = vunpack.c.l.b16 %v131
  %v378 = vunpack.c.l.b16 %v132
  %v379 = vunpack.c.l.b16 %v133
  %v380 = vunpack.c.l.b16 %v134
  %v381 = vunpack.c.l.b16 %v135
  %v382 = vunpack.c.l.b16 %v136
  %v383 = vunpack.c.l.b16 %v137
  %v384 = vunpack.c.l.b16 %v138
  %v385 = vunpack.c.l.b16 %v139
  %v386 = vpack.c.b16 %v375, %v374
  %v387 = vpack.c.b16 %v377, %v376
  %v388 = vpack.c.b16 %v379, %v378
  %v389 = vpack.c.b16 %v381, %v380
  %v390 = vpack.c.b16 %v383, %v382
  %v391 = vpack.c.b16 %v385, %v384
  %vm392 = vcmask 261120
  %v394 = vsel %vm392, %v386, 0
  %v397 = vsel %vm392, %v387, 0
  %v400 = vsel %vm392, %v388, 0
  %v403 = vsel %vm392, %v389, 0
  %v406 = vsel %vm392, %v390, 0
  %v409 = vsel %vm392, %v391, 0
  %411 = vmatprep.subr.bf16.mxu0 0
  %412 = vmatpush1.bf16.msra.mxu0 %v300
  %413 = vmatprep.subr.bf16.mxu0 0
  %414 = vmatpush1.bf16.msra.mxu0 %v301
  %415 = vmatprep.subr.bf16.mxu0 0
  %416 = vmatpush1.bf16.msra.mxu0 0
  %417 = vmatprep.subr.bf16.mxu0 0
  %418 = vmatpush1.bf16.msra.mxu0 0
  %419 = vmatprep.subr.bf16.mxu0 0
  %420 = vmatpush1.bf16.msra.mxu0 0
  %421 = vmatprep.subr.bf16.mxu0 0
  %422 = vmatpush1.bf16.msra.mxu0 0
  %423 = vmatprep.subr.bf16.mxu0 0
  %424 = vmatpush1.bf16.msra.mxu0 0
  %425 = vmatprep.subr.bf16.mxu0 0
  %426 = vmatpush1.bf16.msra.mxu0 0
  %427 = vmatprep.subr.bf16.mxu0 0
  %428 = vmatpush1.bf16.msra.mxu0 0
  %429 = vmatprep.subr.bf16.mxu0 0
  %430 = vmatpush1.bf16.msra.mxu0 0
  %431 = vmatprep.subr.bf16.mxu0 0
  %432 = vmatpush1.bf16.msra.mxu0 0
  %433 = vmatprep.subr.bf16.mxu0 0
  %434 = vmatpush1.bf16.msra.mxu0 0
  %435 = vmatprep.subr.bf16.mxu0 0
  %436 = vmatpush1.bf16.msra.mxu0 0
  %437 = vmatprep.subr.bf16.mxu0 0
  %438 = vmatpush1.bf16.msra.mxu0 0
  %439 = vmatprep.subr.bf16.mxu0 0
  %440 = vmatpush1.bf16.msra.mxu0 0
  %441 = vmatprep.subr.bf16.mxu0 0
  %442 = vmatpush1.bf16.msra.mxu0 0
  %443 = vmatprep.mubr.bf16.mxu0 0
  %444 = vmatmul.mubr.bf16.gmra.mrb[0].mxu0 %v394
  %v445 = vpop.f32.mrb[0].mxu0
  %v446 = vadd.f32 %v305, %v445
  %v447 = vpop.f32.mrb[0].mxu0
  %v448 = vpop.f32.mrb[0].mxu0
  %v449 = vadd.f32 %v310, %v448
  %v450 = vpop.f32.mrb[0].mxu0
  %451 = vmatprep.mubr.bf16.mxu0 0
  %452 = vmatmul.mubr.bf16.gmra.mrb[0].mxu0 %v397
  %v453 = vpop.f32.mrb[0].mxu0
  %v454 = vadd.f32 %v315, %v453
  %v455 = vpop.f32.mrb[0].mxu0
  %v456 = vpop.f32.mrb[0].mxu0
  %v457 = vadd.f32 %v320, %v456
  %v458 = vpop.f32.mrb[0].mxu0
  %459 = vmatprep.mubr.bf16.mxu0 0
  %460 = vmatmul.mubr.bf16.gmra.mrb[0].mxu0 %v400
  %v461 = vpop.f32.mrb[0].mxu0
  %v462 = vadd.f32 %v325, %v461
  %v463 = vpop.f32.mrb[0].mxu0
  %v464 = vpop.f32.mrb[0].mxu0
  %v465 = vadd.f32 %v330, %v464
  %v466 = vpop.f32.mrb[0].mxu0
  %467 = vmatprep.mubr.bf16.mxu0 0
  %468 = vmatmul.mubr.bf16.gmra.mrb[0].mxu0 %v403
  %v469 = vpop.f32.mrb[0].mxu0
  %v470 = vadd.f32 %v335, %v469
  %v471 = vpop.f32.mrb[0].mxu0
  %v472 = vpop.f32.mrb[0].mxu0
  %v473 = vadd.f32 %v340, %v472
  %v474 = vpop.f32.mrb[0].mxu0
  %475 = vmatprep.mubr.bf16.mxu0 0
  %476 = vmatmul.mubr.bf16.gmra.mrb[0].mxu0 %v406
  %v477 = vpop.f32.mrb[0].mxu0
  %v478 = vadd.f32 %v345, %v477
  %v479 = vpop.f32.mrb[0].mxu0
  %v480 = vpop.f32.mrb[0].mxu0
  %v481 = vadd.f32 %v350, %v480
  %v482 = vpop.f32.mrb[0].mxu0
  %483 = vmatprep.mubr.bf16.mxu0 0
  %484 = vmatmul.mubr.bf16.gmra.mrb[0].mxu0 %v409
  %v485 = vpop.f32.mrb[0].mxu0
  %v486 = vadd.f32 %v355, %v485
  %v487 = vpop.f32.mrb[0].mxu0
  %v488 = vpop.f32.mrb[0].mxu0
  %v489 = vadd.f32 %v360, %v488
  %v490 = vpop.f32.mrb[0].mxu0
  %491 = vdwg.mxu0
  %492 = vxpose.xlu0.b32.start [1/16] %v446, 128
  %493 = vxpose.xlu0.b32.cont [2/16] 0.0, 128
  %494 = vxpose.xlu0.b32.cont [3/16] 0.0, 128
  %495 = vxpose.xlu0.b32.cont [4/16] 0.0, 128
  %496 = vxpose.xlu0.b32.cont [5/16] 0.0, 128
  %497 = vxpose.xlu0.b32.cont [6/16] 0.0, 128
  %498 = vxpose.xlu0.b32.cont [7/16] 0.0, 128
  %499 = vxpose.xlu0.b32.cont [8/16] 0.0, 128
  %500 = vxpose.xlu0.b32.cont [9/16] 0.0, 128
  %501 = vxpose.xlu0.b32.cont [10/16] 0.0, 128
  %502 = vxpose.xlu0.b32.cont [11/16] 0.0, 128
  %503 = vxpose.xlu0.b32.cont [12/16] 0.0, 128
  %504 = vxpose.xlu0.b32.cont [13/16] 0.0, 128
  %505 = vxpose.xlu0.b32.cont [14/16] 0.0, 128
  %506 = vxpose.xlu0.b32.cont [15/16] 0.0, 128
  %507 = vxpose.xlu0.b32.end [16/16] 0.0, 128
  %v508 = vpop.trf.xlu0
  %v509 = vpop.trf.xlu0
  %v510 = vpop.trf.xlu0
  %v511 = vpop.trf.xlu0
  %v512 = vpop.trf.xlu0
  %v513 = vpop.trf.xlu0
  %v514 = vpop.trf.xlu0
  %v515 = vpop.trf.xlu0
  %v516 = vpop.trf.xlu0
  %v517 = vpop.trf.xlu0
  %v518 = vpop.trf.xlu0
  %v519 = vpop.trf.xlu0
  %v520 = vpop.trf.xlu0
  %v521 = vpop.trf.xlu0
  %v522 = vpop.trf.xlu0
  %v523 = vpop.trf.xlu0
  %524 = vxpose.xlu0.b32.start [1/16] %v449, 128
  %525 = vxpose.xlu0.b32.cont [2/16] 0.0, 128
  %526 = vxpose.xlu0.b32.cont [3/16] 0.0, 128
  %527 = vxpose.xlu0.b32.cont [4/16] 0.0, 128
  %528 = vxpose.xlu0.b32.cont [5/16] 0.0, 128
  %529 = vxpose.xlu0.b32.cont [6/16] 0.0, 128
  %530 = vxpose.xlu0.b32.cont [7/16] 0.0, 128
  %531 = vxpose.xlu0.b32.cont [8/16] 0.0, 128
  %532 = vxpose.xlu0.b32.cont [9/16] 0.0, 128
  %533 = vxpose.xlu0.b32.cont [10/16] 0.0, 128
  %534 = vxpose.xlu0.b32.cont [11/16] 0.0, 128
  %535 = vxpose.xlu0.b32.cont [12/16] 0.0, 128
  %536 = vxpose.xlu0.b32.cont [13/16] 0.0, 128
  %537 = vxpose.xlu0.b32.cont [14/16] 0.0, 128
  %538 = vxpose.xlu0.b32.cont [15/16] 0.0, 128
  %539 = vxpose.xlu0.b32.end [16/16] 0.0, 128
  %v540 = vpop.trf.xlu0
  %v541 = vpop.trf.xlu0
  %v542 = vpop.trf.xlu0
  %v543 = vpop.trf.xlu0
  %v544 = vpop.trf.xlu0
  %v545 = vpop.trf.xlu0
  %v546 = vpop.trf.xlu0
  %v547 = vpop.trf.xlu0
  %v548 = vpop.trf.xlu0
  %v549 = vpop.trf.xlu0
  %v550 = vpop.trf.xlu0
  %v551 = vpop.trf.xlu0
  %v552 = vpop.trf.xlu0
  %v553 = vpop.trf.xlu0
  %v554 = vpop.trf.xlu0
  %v555 = vpop.trf.xlu0
  %556 = vxpose.xlu0.b32.start [1/16] %v454, 128
  %557 = vxpose.xlu0.b32.cont [2/16] 0.0, 128
  %558 = vxpose.xlu0.b32.cont [3/16] 0.0, 128
  %559 = vxpose.xlu0.b32.cont [4/16] 0.0, 128
  %560 = vxpose.xlu0.b32.cont [5/16] 0.0, 128
  %561 = vxpose.xlu0.b32.cont [6/16] 0.0, 128
  %562 = vxpose.xlu0.b32.cont [7/16] 0.0, 128
  %563 = vxpose.xlu0.b32.cont [8/16] 0.0, 128
  %564 = vxpose.xlu0.b32.cont [9/16] 0.0, 128
  %565 = vxpose.xlu0.b32.cont [10/16] 0.0, 128
  %566 = vxpose.xlu0.b32.cont [11/16] 0.0, 128
  %567 = vxpose.xlu0.b32.cont [12/16] 0.0, 128
  %568 = vxpose.xlu0.b32.cont [13/16] 0.0, 128
  %569 = vxpose.xlu0.b32.cont [14/16] 0.0, 128
  %570 = vxpose.xlu0.b32.cont [15/16] 0.0, 128
  %571 = vxpose.xlu0.b32.end [16/16] 0.0, 128
  %v572 = vpop.trf.xlu0
  %v573 = vpop.trf.xlu0
  %v574 = vpop.trf.xlu0
  %v575 = vpop.trf.xlu0
  %v576 = vpop.trf.xlu0
  %v577 = vpop.trf.xlu0
  %v578 = vpop.trf.xlu0
  %v579 = vpop.trf.xlu0
  %v580 = vpop.trf.xlu0
  %v581 = vpop.trf.xlu0
  %v582 = vpop.trf.xlu0
  %v583 = vpop.trf.xlu0
  %v584 = vpop.trf.xlu0
  %v585 = vpop.trf.xlu0
  %v586 = vpop.trf.xlu0
  %v587 = vpop.trf.xlu0
  %588 = vxpose.xlu0.b32.start [1/16] %v457, 128
  %589 = vxpose.xlu0.b32.cont [2/16] 0.0, 128
  %590 = vxpose.xlu0.b32.cont [3/16] 0.0, 128
  %591 = vxpose.xlu0.b32.cont [4/16] 0.0, 128
  %592 = vxpose.xlu0.b32.cont [5/16] 0.0, 128
  %593 = vxpose.xlu0.b32.cont [6/16] 0.0, 128
  %594 = vxpose.xlu0.b32.cont [7/16] 0.0, 128
  %595 = vxpose.xlu0.b32.cont [8/16] 0.0, 128
  %596 = vxpose.xlu0.b32.cont [9/16] 0.0, 128
  %597 = vxpose.xlu0.b32.cont [10/16] 0.0, 128
  %598 = vxpose.xlu0.b32.cont [11/16] 0.0, 128
  %599 = vxpose.xlu0.b32.cont [12/16] 0.0, 128
  %600 = vxpose.xlu0.b32.cont [13/16] 0.0, 128
  %601 = vxpose.xlu0.b32.cont [14/16] 0.0, 128
  %602 = vxpose.xlu0.b32.cont [15/16] 0.0, 128
  %603 = vxpose.xlu0.b32.end [16/16] 0.0, 128
  %v604 = vpop.trf.xlu0
  %v605 = vpop.trf.xlu0
  %v606 = vpop.trf.xlu0
  %v607 = vpop.trf.xlu0
  %v608 = vpop.trf.xlu0
  %v609 = vpop.trf.xlu0
  %v610 = vpop.trf.xlu0
  %v611 = vpop.trf.xlu0
  %v612 = vpop.trf.xlu0
  %v613 = vpop.trf.xlu0
  %v614 = vpop.trf.xlu0
  %v615 = vpop.trf.xlu0
  %v616 = vpop.trf.xlu0
  %v617 = vpop.trf.xlu0
  %v618 = vpop.trf.xlu0
  %v619 = vpop.trf.xlu0
  %v620 = vpack.c.bf16 %v509, %v508
  %v621 = vpack.c.bf16 %v511, %v510
  %v622 = vpack.c.bf16 %v513, %v512
  %v623 = vpack.c.bf16 %v515, %v514
  %v624 = vpack.c.bf16 %v517, %v516
  %v625 = vpack.c.bf16 %v519, %v518
  %v626 = vpack.c.bf16 %v521, %v520
  %v627 = vpack.c.bf16 %v523, %v522
  %v628 = vpack.c.bf16 %v541, %v540
  %v629 = vpack.c.bf16 %v543, %v542
  %v630 = vpack.c.bf16 %v545, %v544
  %v631 = vpack.c.bf16 %v547, %v546
  %v632 = vpack.c.bf16 %v549, %v548
  %v633 = vpack.c.bf16 %v551, %v550
  %v634 = vpack.c.bf16 %v553, %v552
  %v635 = vpack.c.bf16 %v555, %v554
  %v636 = vpack.c.bf16 %v573, %v572
  %v637 = vpack.c.bf16 %v575, %v574
  %v638 = vpack.c.bf16 %v577, %v576
  %v639 = vpack.c.bf16 %v579, %v578
  %v640 = vpack.c.bf16 %v581, %v580
  %v641 = vpack.c.bf16 %v583, %v582
  %v642 = vpack.c.bf16 %v585, %v584
  %v643 = vpack.c.bf16 %v587, %v586
  %v644 = vpack.c.bf16 %v605, %v604
  %v645 = vpack.c.bf16 %v607, %v606
  %v646 = vpack.c.bf16 %v609, %v608
  %v647 = vpack.c.bf16 %v611, %v610
  %v648 = vpack.c.bf16 %v613, %v612
  %v649 = vpack.c.bf16 %v615, %v614
  %v650 = vpack.c.bf16 %v617, %v616
  %v651 = vpack.c.bf16 %v619, %v618
  %v652 = vpack.c.bf16 %v462, %v462
  %v653 = vpack.c.bf16 %v465, %v465
  %v654 = vpack.c.bf16 %v470, %v470
  %v655 = vpack.c.bf16 %v473, %v473
  %v656 = vld [vmem:[%s8] sm:$0xff]
  %v657 = vld [vmem:[%s8 + $0x8] sm:$0xff]
  %v658 = vld [vmem:[%s8 + $0x10] sm:$0xff]
  %v659 = vld [vmem:[%s8 + $0x18] sm:$0xff]
  %v660 = vld [vmem:[%s8 + $0x20] sm:$0xff]
  %v661 = vld [vmem:[%s8 + $0x28] sm:$0xff]
  %v662 = vld [vmem:[%s8 + $0x30] sm:$0xff]
  %v663 = vld [vmem:[%s8 + $0x38] sm:$0xff]
  %v664 = vld [vmem:[%s8 + $0x40] sm:$0xff]
  %v665 = vld [vmem:[%s8 + $0x48] sm:$0xff]
  %v666 = vld [vmem:[%s8 + $0x50] sm:$0xff]
  %v667 = vld [vmem:[%s8 + $0x58] sm:$0xff]
  %v668 = vld [vmem:[%s8 + $0x60] sm:$0xff]
  %v669 = vld [vmem:[%s8 + $0x68] sm:$0xff]
  %v670 = vld [vmem:[%s8 + $0x70] sm:$0xff]
  %v671 = vld [vmem:[%s8 + $0x78] sm:$0xff]
  %vm672 = vcmask 64512
  %v674 = vsel %vm672, %v620, 0
  %v677 = vsel %vm672, %v621, 0
  %v680 = vsel %vm672, %v622, 0
  %v683 = vsel %vm672, %v623, 0
  %v686 = vsel %vm672, %v624, 0
  %v689 = vsel %vm672, %v625, 0
  %v692 = vsel %vm672, %v626, 0
  %v695 = vsel %vm672, %v627, 0
  %vm697 = vcmask 1043456
  %v699 = vsel %vm697, %v652, 0
  %701 = vmatprep.subr.bf16.mxu0 0
  %702 = vmatpush1.bf16.msra.mxu0 %v699
  %703 = vmatprep.subr.bf16.mxu0 0
  %704 = vmatpush1.bf16.msra.mxu0 0
  %705 = vmatprep.subr.bf16.mxu0 0
  %706 = vmatpush1.bf16.msra.mxu0 0
  %707 = vmatprep.subr.bf16.mxu0 0
  %708 = vmatpush1.bf16.msra.mxu0 0
  %709 = vmatprep.subr.bf16.mxu0 0
  %710 = vmatpush1.bf16.msra.mxu0 0
  %711 = vmatprep.subr.bf16.mxu0 0
  %712 = vmatpush1.bf16.msra.mxu0 0
  %713 = vmatprep.subr.bf16.mxu0 0
  %714 = vmatpush1.bf16.msra.mxu0 0
  %715 = vmatprep.subr.bf16.mxu0 0
  %716 = vmatpush1.bf16.msra.mxu0 0
  %717 = vmatprep.subr.bf16.mxu0 0
  %718 = vmatpush1.bf16.msra.mxu0 0
  %719 = vmatprep.subr.bf16.mxu0 0
  %720 = vmatpush1.bf16.msra.mxu0 0
  %721 = vmatprep.subr.bf16.mxu0 0
  %722 = vmatpush1.bf16.msra.mxu0 0
  %723 = vmatprep.subr.bf16.mxu0 0
  %724 = vmatpush1.bf16.msra.mxu0 0
  %725 = vmatprep.subr.bf16.mxu0 0
  %726 = vmatpush1.bf16.msra.mxu0 0
  %727 = vmatprep.subr.bf16.mxu0 0
  %728 = vmatpush1.bf16.msra.mxu0 0
  %729 = vmatprep.subr.bf16.mxu0 0
  %730 = vmatpush1.bf16.msra.mxu0 0
  %731 = vmatprep.subr.bf16.mxu0 0
  %732 = vmatpush1.bf16.msra.mxu0 0
  %733 = vmatprep.mubr.bf16.mxu0 0
  %734 = vmatmul.mubr.bf16.gmra.mrb[0].mxu0 %v674
  %v735 = vpop.f32.mrb[0].mxu0
  %v736 = vadd.f32 %v656, %v735
  %v737 = vpop.f32.mrb[0].mxu0
  %v738 = vpop.f32.mrb[0].mxu0
  %v739 = vadd.f32 %v657, %v738
  %v740 = vpop.f32.mrb[0].mxu0
  %741 = vmatprep.mubr.bf16.mxu0 0
  %742 = vmatmul.mubr.bf16.gmra.mrb[0].mxu0 %v677
  %v743 = vpop.f32.mrb[0].mxu0
  %v744 = vadd.f32 %v658, %v743
  %v745 = vpop.f32.mrb[0].mxu0
  %v746 = vpop.f32.mrb[0].mxu0
  %v747 = vadd.f32 %v659, %v746
  %v748 = vpop.f32.mrb[0].mxu0
  %749 = vmatprep.mubr.bf16.mxu0 0
  %750 = vmatmul.mubr.bf16.gmra.mrb[0].mxu0 %v680
  %v751 = vpop.f32.mrb[0].mxu0
  %v752 = vadd.f32 %v660, %v751
  %v753 = vpop.f32.mrb[0].mxu0
  %v754 = vpop.f32.mrb[0].mxu0
  %v755 = vadd.f32 %v661, %v754
  %v756 = vpop.f32.mrb[0].mxu0
  %757 = vmatprep.mubr.bf16.mxu0 0
  %758 = vmatmul.mubr.bf16.gmra.mrb[0].mxu0 %v683
  %v759 = vpop.f32.mrb[0].mxu0
  %v760 = vadd.f32 %v662, %v759
  %v761 = vpop.f32.mrb[0].mxu0
  %v762 = vpop.f32.mrb[0].mxu0
  %v763 = vadd.f32 %v663, %v762
  %v764 = vpop.f32.mrb[0].mxu0
  %765 = vmatprep.mubr.bf16.mxu0 0
  %766 = vmatmul.mubr.bf16.gmra.mrb[0].mxu0 %v686
  %v767 = vpop.f32.mrb[0].mxu0
  %v768 = vadd.f32 %v664, %v767
  %v769 = vpop.f32.mrb[0].mxu0
  %v770 = vpop.f32.mrb[0].mxu0
  %v771 = vadd.f32 %v665, %v770
  %v772 = vpop.f32.mrb[0].mxu0
  %773 = vmatprep.mubr.bf16.mxu0 0
  %774 = vmatmul.mubr.bf16.gmra.mrb[0].mxu0 %v689
  %v775 = vpop.f32.mrb[0].mxu0
  %v776 = vadd.f32 %v666, %v775
  %v777 = vpop.f32.mrb[0].mxu0
  %v778 = vpop.f32.mrb[0].mxu0
  %v779 = vadd.f32 %v667, %v778
  %v780 = vpop.f32.mrb[0].mxu0
  %781 = vmatprep.mubr.bf16.mxu0 0
  %782 = vmatmul.mubr.bf16.gmra.mrb[0].mxu0 %v692
  %v783 = vpop.f32.mrb[0].mxu0
  %v784 = vadd.f32 %v668, %v783
  %v785 = vpop.f32.mrb[0].mxu0
  %v786 = vpop.f32.mrb[0].mxu0
  %v787 = vadd.f32 %v669, %v786
  %v788 = vpop.f32.mrb[0].mxu0
  %789 = vmatprep.mubr.bf16.mxu0 0
  %790 = vmatmul.mubr.bf16.gmra.mrb[0].mxu0 %v695
  %v791 = vpop.f32.mrb[0].mxu0
  %v792 = vadd.f32 %v670, %v791
  %v793 = vpop.f32.mrb[0].mxu0
  %v794 = vpop.f32.mrb[0].mxu0
  %v795 = vadd.f32 %v671, %v794
  %v796 = vpop.f32.mrb[0].mxu0
  %797 = vdwg.mxu0
  %v799 = vsel %vm672, %v628, 0
  %v802 = vsel %vm672, %v629, 0
  %v805 = vsel %vm672, %v630, 0
  %v808 = vsel %vm672, %v631, 0
  %v811 = vsel %vm672, %v632, 0
  %v814 = vsel %vm672, %v633, 0
  %v817 = vsel %vm672, %v634, 0
  %v820 = vsel %vm672, %v635, 0
  %v823 = vsel %vm697, %v653, 0
  %825 = vmatprep.subr.bf16.mxu0 0
  %826 = vmatpush1.bf16.msra.mxu0 %v823
  %827 = vmatprep.subr.bf16.mxu0 0
  %828 = vmatpush1.bf16.msra.mxu0 0
  %829 = vmatprep.subr.bf16.mxu0 0
  %830 = vmatpush1.bf16.msra.mxu0 0
  %831 = vmatprep.subr.bf16.mxu0 0
  %832 = vmatpush1.bf16.msra.mxu0 0
  %833 = vmatprep.subr.bf16.mxu0 0
  %834 = vmatpush1.bf16.msra.mxu0 0
  %835 = vmatprep.subr.bf16.mxu0 0
  %836 = vmatpush1.bf16.msra.mxu0 0
  %837 = vmatprep.subr.bf16.mxu0 0
  %838 = vmatpush1.bf16.msra.mxu0 0
  %839 = vmatprep.subr.bf16.mxu0 0
  %840 = vmatpush1.bf16.msra.mxu0 0
  %841 = vmatprep.subr.bf16.mxu0 0
  %842 = vmatpush1.bf16.msra.mxu0 0
  %843 = vmatprep.subr.bf16.mxu0 0
  %844 = vmatpush1.bf16.msra.mxu0 0
  %845 = vmatprep.subr.bf16.mxu0 0
  %846 = vmatpush1.bf16.msra.mxu0 0
  %847 = vmatprep.subr.bf16.mxu0 0
  %848 = vmatpush1.bf16.msra.mxu0 0
  %849 = vmatprep.subr.bf16.mxu0 0
  %850 = vmatpush1.bf16.msra.mxu0 0
  %851 = vmatprep.subr.bf16.mxu0 0
  %852 = vmatpush1.bf16.msra.mxu0 0
  %853 = vmatprep.subr.bf16.mxu0 0
  %854 = vmatpush1.bf16.msra.mxu0 0
  %855 = vmatprep.subr.bf16.mxu0 0
  %856 = vmatpush1.bf16.msra.mxu0 0
  %857 = vmatprep.mubr.bf16.mxu0 0
  %858 = vmatmul.mubr.bf16.gmra.mrb[0].mxu0 %v799
  %v859 = vpop.f32.mrb[0].mxu0
  %v860 = vadd.f32 %v656, %v859
  %v861 = vpop.f32.mrb[0].mxu0
  %v862 = vpop.f32.mrb[0].mxu0
  %v863 = vadd.f32 %v657, %v862
  %v864 = vpop.f32.mrb[0].mxu0
  %865 = vmatprep.mubr.bf16.mxu0 0
  %866 = vmatmul.mubr.bf16.gmra.mrb[0].mxu0 %v802
  %v867 = vpop.f32.mrb[0].mxu0
  %v868 = vadd.f32 %v658, %v867
  %v869 = vpop.f32.mrb[0].mxu0
  %v870 = vpop.f32.mrb[0].mxu0
  %v871 = vadd.f32 %v659, %v870
  %v872 = vpop.f32.mrb[0].mxu0
  %873 = vmatprep.mubr.bf16.mxu0 0
  %874 = vmatmul.mubr.bf16.gmra.mrb[0].mxu0 %v805
  %v875 = vpop.f32.mrb[0].mxu0
  %v876 = vadd.f32 %v660, %v875
  %v877 = vpop.f32.mrb[0].mxu0
  %v878 = vpop.f32.mrb[0].mxu0
  %v879 = vadd.f32 %v661, %v878
  %v880 = vpop.f32.mrb[0].mxu0
  %881 = vmatprep.mubr.bf16.mxu0 0
  %882 = vmatmul.mubr.bf16.gmra.mrb[0].mxu0 %v808
  %v883 = vpop.f32.mrb[0].mxu0
  %v884 = vadd.f32 %v662, %v883
  %v885 = vpop.f32.mrb[0].mxu0
  %v886 = vpop.f32.mrb[0].mxu0
  %v887 = vadd.f32 %v663, %v886
  %v888 = vpop.f32.mrb[0].mxu0
  %889 = vmatprep.mubr.bf16.mxu0 0
  %890 = vmatmul.mubr.bf16.gmra.mrb[0].mxu0 %v811
  %v891 = vpop.f32.mrb[0].mxu0
  %v892 = vadd.f32 %v664, %v891
  %v893 = vpop.f32.mrb[0].mxu0
  %v894 = vpop.f32.mrb[0].mxu0
  %v895 = vadd.f32 %v665, %v894
  %v896 = vpop.f32.mrb[0].mxu0
  %897 = vmatprep.mubr.bf16.mxu0 0
  %898 = vmatmul.mubr.bf16.gmra.mrb[0].mxu0 %v814
  %v899 = vpop.f32.mrb[0].mxu0
  %v900 = vadd.f32 %v666, %v899
  %v901 = vpop.f32.mrb[0].mxu0
  %v902 = vpop.f32.mrb[0].mxu0
  %v903 = vadd.f32 %v667, %v902
  %v904 = vpop.f32.mrb[0].mxu0
  %905 = vmatprep.mubr.bf16.mxu0 0
  %906 = vmatmul.mubr.bf16.gmra.mrb[0].mxu0 %v817
  %v907 = vpop.f32.mrb[0].mxu0
  %v908 = vadd.f32 %v668, %v907
  %v909 = vpop.f32.mrb[0].mxu0
  %v910 = vpop.f32.mrb[0].mxu0
  %v911 = vadd.f32 %v669, %v910
  %v912 = vpop.f32.mrb[0].mxu0
  %913 = vmatprep.mubr.bf16.mxu0 0
  %914 = vmatmul.mubr.bf16.gmra.mrb[0].mxu0 %v820
  %v915 = vpop.f32.mrb[0].mxu0
  %v916 = vadd.f32 %v670, %v915
  %v917 = vpop.f32.mrb[0].mxu0
  %v918 = vpop.f32.mrb[0].mxu0
  %v919 = vadd.f32 %v671, %v918
  %v920 = vpop.f32.mrb[0].mxu0
  %921 = vdwg.mxu0
  %v923 = vsel %vm672, %v636, 0
  %v926 = vsel %vm672, %v637, 0
  %v929 = vsel %vm672, %v638, 0
  %v932 = vsel %vm672, %v639, 0
  %v935 = vsel %vm672, %v640, 0
  %v938 = vsel %vm672, %v641, 0
  %v941 = vsel %vm672, %v642, 0
  %v944 = vsel %vm672, %v643, 0
  %v947 = vsel %vm697, %v654, 0
  %949 = vmatprep.subr.bf16.mxu0 0
  %950 = vmatpush1.bf16.msra.mxu0 %v947
  %951 = vmatprep.subr.bf16.mxu0 0
  %952 = vmatpush1.bf16.msra.mxu0 0
  %953 = vmatprep.subr.bf16.mxu0 0
  %954 = vmatpush1.bf16.msra.mxu0 0
  %955 = vmatprep.subr.bf16.mxu0 0
  %956 = vmatpush1.bf16.msra.mxu0 0
  %957 = vmatprep.subr.bf16.mxu0 0
  %958 = vmatpush1.bf16.msra.mxu0 0
  %959 = vmatprep.subr.bf16.mxu0 0
  %960 = vmatpush1.bf16.msra.mxu0 0
  %961 = vmatprep.subr.bf16.mxu0 0
  %962 = vmatpush1.bf16.msra.mxu0 0
  %963 = vmatprep.subr.bf16.mxu0 0
  %964 = vmatpush1.bf16.msra.mxu0 0
  %965 = vmatprep.subr.bf16.mxu0 0
  %966 = vmatpush1.bf16.msra.mxu0 0
  %967 = vmatprep.subr.bf16.mxu0 0
  %968 = vmatpush1.bf16.msra.mxu0 0
  %969 = vmatprep.subr.bf16.mxu0 0
  %970 = vmatpush1.bf16.msra.mxu0 0
  %971 = vmatprep.subr.bf16.mxu0 0
  %972 = vmatpush1.bf16.msra.mxu0 0
  %973 = vmatprep.subr.bf16.mxu0 0
  %974 = vmatpush1.bf16.msra.mxu0 0
  %975 = vmatprep.subr.bf16.mxu0 0
  %976 = vmatpush1.bf16.msra.mxu0 0
  %977 = vmatprep.subr.bf16.mxu0 0
  %978 = vmatpush1.bf16.msra.mxu0 0
  %979 = vmatprep.subr.bf16.mxu0 0
  %980 = vmatpush1.bf16.msra.mxu0 0
  %981 = vmatprep.mubr.bf16.mxu0 0
  %982 = vmatmul.mubr.bf16.gmra.mrb[0].mxu0 %v923
  %v983 = vpop.f32.mrb[0].mxu0
  %v984 = vadd.f32 %v656, %v983
  %v985 = vpop.f32.mrb[0].mxu0
  %v986 = vpop.f32.mrb[0].mxu0
  %v987 = vadd.f32 %v657, %v986
  %v988 = vpop.f32.mrb[0].mxu0
  %989 = vmatprep.mubr.bf16.mxu0 0
  %990 = vmatmul.mubr.bf16.gmra.mrb[0].mxu0 %v926
  %v991 = vpop.f32.mrb[0].mxu0
  %v992 = vadd.f32 %v658, %v991
  %v993 = vpop.f32.mrb[0].mxu0
  %v994 = vpop.f32.mrb[0].mxu0
  %v995 = vadd.f32 %v659, %v994
  %v996 = vpop.f32.mrb[0].mxu0
  %997 = vmatprep.mubr.bf16.mxu0 0
  %998 = vmatmul.mubr.bf16.gmra.mrb[0].mxu0 %v929
  %v999 = vpop.f32.mrb[0].mxu0
  %v1000 = vadd.f32 %v660, %v999
  %v1001 = vpop.f32.mrb[0].mxu0
  %v1002 = vpop.f32.mrb[0].mxu0
  %v1003 = vadd.f32 %v661, %v1002
  %v1004 = vpop.f32.mrb[0].mxu0
  %1005 = vmatprep.mubr.bf16.mxu0 0
  %1006 = vmatmul.mubr.bf16.gmra.mrb[0].mxu0 %v932
  %v1007 = vpop.f32.mrb[0].mxu0
  %v1008 = vadd.f32 %v662, %v1007
  %v1009 = vpop.f32.mrb[0].mxu0
  %v1010 = vpop.f32.mrb[0].mxu0
  %v1011 = vadd.f32 %v663, %v1010
  %v1012 = vpop.f32.mrb[0].mxu0
  %1013 = vmatprep.mubr.bf16.mxu0 0
  %1014 = vmatmul.mubr.bf16.gmra.mrb[0].mxu0 %v935
  %v1015 = vpop.f32.mrb[0].mxu0
  %v1016 = vadd.f32 %v664, %v1015
  %v1017 = vpop.f32.mrb[0].mxu0
  %v1018 = vpop.f32.mrb[0].mxu0
  %v1019 = vadd.f32 %v665, %v1018
  %v1020 = vpop.f32.mrb[0].mxu0
  %1021 = vmatprep.mubr.bf16.mxu0 0
  %1022 = vmatmul.mubr.bf16.gmra.mrb[0].mxu0 %v938
  %v1023 = vpop.f32.mrb[0].mxu0
  %v1024 = vadd.f32 %v666, %v1023
  %v1025 = vpop.f32.mrb[0].mxu0
  %v1026 = vpop.f32.mrb[0].mxu0
  %v1027 = vadd.f32 %v667, %v1026
  %v1028 = vpop.f32.mrb[0].mxu0
  %1029 = vmatprep.mubr.bf16.mxu0 0
  %1030 = vmatmul.mubr.bf16.gmra.mrb[0].mxu0 %v941
  %v1031 = vpop.f32.mrb[0].mxu0
  %v1032 = vadd.f32 %v668, %v1031
  %v1033 = vpop.f32.mrb[0].mxu0
  %v1034 = vpop.f32.mrb[0].mxu0
  %v1035 = vadd.f32 %v669, %v1034
  %v1036 = vpop.f32.mrb[0].mxu0
  %1037 = vmatprep.mubr.bf16.mxu0 0
  %1038 = vmatmul.mubr.bf16.gmra.mrb[0].mxu0 %v944
  %v1039 = vpop.f32.mrb[0].mxu0
  %v1040 = vadd.f32 %v670, %v1039
  %v1041 = vpop.f32.mrb[0].mxu0
  %v1042 = vpop.f32.mrb[0].mxu0
  %v1043 = vadd.f32 %v671, %v1042
  %v1044 = vpop.f32.mrb[0].mxu0
  %1045 = vdwg.mxu0
  %v1047 = vsel %vm672, %v644, 0
  %v1050 = vsel %vm672, %v645, 0
  %v1053 = vsel %vm672, %v646, 0
  %v1056 = vsel %vm672, %v647, 0
  %v1059 = vsel %vm672, %v648, 0
  %v1062 = vsel %vm672, %v649, 0
  %v1065 = vsel %vm672, %v650, 0
  %v1068 = vsel %vm672, %v651, 0
  %v1071 = vsel %vm697, %v655, 0
  %1073 = vmatprep.subr.bf16.mxu0 0
  %1074 = vmatpush1.bf16.msra.mxu0 %v1071
  %1075 = vmatprep.subr.bf16.mxu0 0
  %1076 = vmatpush1.bf16.msra.mxu0 0
  %1077 = vmatprep.subr.bf16.mxu0 0
  %1078 = vmatpush1.bf16.msra.mxu0 0
  %1079 = vmatprep.subr.bf16.mxu0 0
  %1080 = vmatpush1.bf16.msra.mxu0 0
  %1081 = vmatprep.subr.bf16.mxu0 0
  %1082 = vmatpush1.bf16.msra.mxu0 0
  %1083 = vmatprep.subr.bf16.mxu0 0
  %1084 = vmatpush1.bf16.msra.mxu0 0
  %1085 = vmatprep.subr.bf16.mxu0 0
  %1086 = vmatpush1.bf16.msra.mxu0 0
  %1087 = vmatprep.subr.bf16.mxu0 0
  %1088 = vmatpush1.bf16.msra.mxu0 0
  %1089 = vmatprep.subr.bf16.mxu0 0
  %1090 = vmatpush1.bf16.msra.mxu0 0
  %1091 = vmatprep.subr.bf16.mxu0 0
  %1092 = vmatpush1.bf16.msra.mxu0 0
  %1093 = vmatprep.subr.bf16.mxu0 0
  %1094 = vmatpush1.bf16.msra.mxu0 0
  %1095 = vmatprep.subr.bf16.mxu0 0
  %1096 = vmatpush1.bf16.msra.mxu0 0
  %1097 = vmatprep.subr.bf16.mxu0 0
  %1098 = vmatpush1.bf16.msra.mxu0 0
  %1099 = vmatprep.subr.bf16.mxu0 0
  %1100 = vmatpush1.bf16.msra.mxu0 0
  %1101 = vmatprep.subr.bf16.mxu0 0
  %1102 = vmatpush1.bf16.msra.mxu0 0
  %1103 = vmatprep.subr.bf16.mxu0 0
  %1104 = vmatpush1.bf16.msra.mxu0 0
  %1105 = vmatprep.mubr.bf16.mxu0 0
  %1106 = vmatmul.mubr.bf16.gmra.mrb[0].mxu0 %v1047
  %v1107 = vpop.f32.mrb[0].mxu0
  %v1108 = vadd.f32 %v656, %v1107
  %v1109 = vpop.f32.mrb[0].mxu0
  %v1110 = vpop.f32.mrb[0].mxu0
  %v1111 = vadd.f32 %v657, %v1110
  %v1112 = vpop.f32.mrb[0].mxu0
  %1113 = vmatprep.mubr.bf16.mxu0 0
  %1114 = vmatmul.mubr.bf16.gmra.mrb[0].mxu0 %v1050
  %v1115 = vpop.f32.mrb[0].mxu0
  %v1116 = vadd.f32 %v658, %v1115
  %v1117 = vpop.f32.mrb[0].mxu0
  %v1118 = vpop.f32.mrb[0].mxu0
  %v1119 = vadd.f32 %v659, %v1118
  %v1120 = vpop.f32.mrb[0].mxu0
  %1121 = vmatprep.mubr.bf16.mxu0 0
  %1122 = vmatmul.mubr.bf16.gmra.mrb[0].mxu0 %v1053
  %v1123 = vpop.f32.mrb[0].mxu0
  %v1124 = vadd.f32 %v660, %v1123
  %v1125 = vpop.f32.mrb[0].mxu0
  %v1126 = vpop.f32.mrb[0].mxu0
  %v1127 = vadd.f32 %v661, %v1126
  %v1128 = vpop.f32.mrb[0].mxu0
  %1129 = vmatprep.mubr.bf16.mxu0 0
  %1130 = vmatmul.mubr.bf16.gmra.mrb[0].mxu0 %v1056
  %v1131 = vpop.f32.mrb[0].mxu0
  %v1132 = vadd.f32 %v662, %v1131
  %v1133 = vpop.f32.mrb[0].mxu0
  %v1134 = vpop.f32.mrb[0].mxu0
  %v1135 = vadd.f32 %v663, %v1134
  %v1136 = vpop.f32.mrb[0].mxu0
  %1137 = vmatprep.mubr.bf16.mxu0 0
  %1138 = vmatmul.mubr.bf16.gmra.mrb[0].mxu0 %v1059
  %v1139 = vpop.f32.mrb[0].mxu0
  %v1140 = vadd.f32 %v664, %v1139
  %v1141 = vpop.f32.mrb[0].mxu0
  %v1142 = vpop.f32.mrb[0].mxu0
  %v1143 = vadd.f32 %v665, %v1142
  %v1144 = vpop.f32.mrb[0].mxu0
  %1145 = vmatprep.mubr.bf16.mxu0 0
  %1146 = vmatmul.mubr.bf16.gmra.mrb[0].mxu0 %v1062
  %v1147 = vpop.f32.mrb[0].mxu0
  %v1148 = vadd.f32 %v666, %v1147
  %v1149 = vpop.f32.mrb[0].mxu0
  %v1150 = vpop.f32.mrb[0].mxu0
  %v1151 = vadd.f32 %v667, %v1150
  %v1152 = vpop.f32.mrb[0].mxu0
  %1153 = vmatprep.mubr.bf16.mxu0 0
  %1154 = vmatmul.mubr.bf16.gmra.mrb[0].mxu0 %v1065
  %v1155 = vpop.f32.mrb[0].mxu0
  %v1156 = vadd.f32 %v668, %v1155
  %v1157 = vpop.f32.mrb[0].mxu0
  %v1158 = vpop.f32.mrb[0].mxu0
  %v1159 = vadd.f32 %v669, %v1158
  %v1160 = vpop.f32.mrb[0].mxu0
  %1161 = vmatprep.mubr.bf16.mxu0 0
  %1162 = vmatmul.mubr.bf16.gmra.mrb[0].mxu0 %v1068
  %v1163 = vpop.f32.mrb[0].mxu0
  %v1164 = vadd.f32 %v670, %v1163
  %v1165 = vpop.f32.mrb[0].mxu0
  %v1166 = vpop.f32.mrb[0].mxu0
  %v1167 = vadd.f32 %v671, %v1166
  %v1168 = vpop.f32.mrb[0].mxu0
  %1169 = vdwg.mxu0
  %1170 = vmax.xlane.f32.xlu0 %v736
  %v1171 = vpop.xlane.xlu0 %1170
  %1172 = vmax.xlane.f32.xlu0 %v739
  %v1173 = vpop.xlane.xlu0 %1172
  %1174 = vmax.xlane.f32.xlu0 %v744
  %v1175 = vpop.xlane.xlu0 %1174
  %1176 = vmax.xlane.f32.xlu0 %v747
  %v1177 = vpop.xlane.xlu0 %1176
  %1178 = vmax.xlane.f32.xlu0 %v752
  %v1179 = vpop.xlane.xlu0 %1178
  %1180 = vmax.xlane.f32.xlu0 %v755
  %v1181 = vpop.xlane.xlu0 %1180
  %1182 = vmax.xlane.f32.xlu0 %v760
  %v1183 = vpop.xlane.xlu0 %1182
  %1184 = vmax.xlane.f32.xlu0 %v763
  %v1185 = vpop.xlane.xlu0 %1184
  %1186 = vmax.xlane.f32.xlu0 %v768
  %v1187 = vpop.xlane.xlu0 %1186
  %1188 = vmax.xlane.f32.xlu0 %v771
  %v1189 = vpop.xlane.xlu0 %1188
  %1190 = vmax.xlane.f32.xlu0 %v776
  %v1191 = vpop.xlane.xlu0 %1190
  %1192 = vmax.xlane.f32.xlu0 %v779
  %v1193 = vpop.xlane.xlu0 %1192
  %1194 = vmax.xlane.f32.xlu0 %v784
  %v1195 = vpop.xlane.xlu0 %1194
  %1196 = vmax.xlane.f32.xlu0 %v787
  %v1197 = vpop.xlane.xlu0 %1196
  %1198 = vmax.xlane.f32.xlu0 %v792
  %v1199 = vpop.xlane.xlu0 %1198
  %1200 = vmax.xlane.f32.xlu0 %v795
  %v1201 = vpop.xlane.xlu0 %1200
  %1202 = vmax.xlane.f32.xlu0 %v860
  %v1203 = vpop.xlane.xlu0 %1202
  %1204 = vmax.xlane.f32.xlu0 %v863
  %v1205 = vpop.xlane.xlu0 %1204
  %1206 = vmax.xlane.f32.xlu0 %v868
  %v1207 = vpop.xlane.xlu0 %1206
  %1208 = vmax.xlane.f32.xlu0 %v871
  %v1209 = vpop.xlane.xlu0 %1208
  %1210 = vmax.xlane.f32.xlu0 %v876
  %v1211 = vpop.xlane.xlu0 %1210
  %1212 = vmax.xlane.f32.xlu0 %v879
  %v1213 = vpop.xlane.xlu0 %1212
  %1214 = vmax.xlane.f32.xlu0 %v884
  %v1215 = vpop.xlane.xlu0 %1214
  %1216 = vmax.xlane.f32.xlu0 %v887
  %v1217 = vpop.xlane.xlu0 %1216
  %1218 = vmax.xlane.f32.xlu0 %v892
  %v1219 = vpop.xlane.xlu0 %1218
  %1220 = vmax.xlane.f32.xlu0 %v895
  %v1221 = vpop.xlane.xlu0 %1220
  %1222 = vmax.xlane.f32.xlu0 %v900
  %v1223 = vpop.xlane.xlu0 %1222
  %1224 = vmax.xlane.f32.xlu0 %v903
  %v1225 = vpop.xlane.xlu0 %1224
  %1226 = vmax.xlane.f32.xlu0 %v908
  %v1227 = vpop.xlane.xlu0 %1226
  %1228 = vmax.xlane.f32.xlu0 %v911
  %v1229 = vpop.xlane.xlu0 %1228
  %1230 = vmax.xlane.f32.xlu0 %v916
  %v1231 = vpop.xlane.xlu0 %1230
  %1232 = vmax.xlane.f32.xlu0 %v919
  %v1233 = vpop.xlane.xlu0 %1232
  %1234 = vmax.xlane.f32.xlu0 %v984
  %v1235 = vpop.xlane.xlu0 %1234
  %1236 = vmax.xlane.f32.xlu0 %v987
  %v1237 = vpop.xlane.xlu0 %1236
  %1238 = vmax.xlane.f32.xlu0 %v992
  %v1239 = vpop.xlane.xlu0 %1238
  %1240 = vmax.xlane.f32.xlu0 %v995
  %v1241 = vpop.xlane.xlu0 %1240
  %1242 = vmax.xlane.f32.xlu0 %v1000
  %v1243 = vpop.xlane.xlu0 %1242
  %1244 = vmax.xlane.f32.xlu0 %v1003
  %v1245 = vpop.xlane.xlu0 %1244
  %1246 = vmax.xlane.f32.xlu0 %v1008
  %v1247 = vpop.xlane.xlu0 %1246
  %1248 = vmax.xlane.f32.xlu0 %v1011
  %v1249 = vpop.xlane.xlu0 %1248
  %1250 = vmax.xlane.f32.xlu0 %v1016
  %v1251 = vpop.xlane.xlu0 %1250
  %1252 = vmax.xlane.f32.xlu0 %v1019
  %v1253 = vpop.xlane.xlu0 %1252
  %1254 = vmax.xlane.f32.xlu0 %v1024
  %v1255 = vpop.xlane.xlu0 %1254
  %1256 = vmax.xlane.f32.xlu0 %v1027
  %v1257 = vpop.xlane.xlu0 %1256
  %1258 = vmax.xlane.f32.xlu0 %v1032
  %v1259 = vpop.xlane.xlu0 %1258
  %1260 = vmax.xlane.f32.xlu0 %v1035
  %v1261 = vpop.xlane.xlu0 %1260
  %1262 = vmax.xlane.f32.xlu0 %v1040
  %v1263 = vpop.xlane.xlu0 %1262
  %1264 = vmax.xlane.f32.xlu0 %v1043
  %v1265 = vpop.xlane.xlu0 %1264
  %1266 = vmax.xlane.f32.xlu0 %v1108
  %v1267 = vpop.xlane.xlu0 %1266
  %1268 = vmax.xlane.f32.xlu0 %v1111
  %v1269 = vpop.xlane.xlu0 %1268
  %1270 = vmax.xlane.f32.xlu0 %v1116
  %v1271 = vpop.xlane.xlu0 %1270
  %1272 = vmax.xlane.f32.xlu0 %v1119
  %v1273 = vpop.xlane.xlu0 %1272
  %1274 = vmax.xlane.f32.xlu0 %v1124
  %v1275 = vpop.xlane.xlu0 %1274
  %1276 = vmax.xlane.f32.xlu0 %v1127
  %v1277 = vpop.xlane.xlu0 %1276
  %1278 = vmax.xlane.f32.xlu0 %v1132
  %v1279 = vpop.xlane.xlu0 %1278
  %1280 = vmax.xlane.f32.xlu0 %v1135
  %v1281 = vpop.xlane.xlu0 %1280
  %1282 = vmax.xlane.f32.xlu0 %v1140
  %v1283 = vpop.xlane.xlu0 %1282
  %1284 = vmax.xlane.f32.xlu0 %v1143
  %v1285 = vpop.xlane.xlu0 %1284
  %1286 = vmax.xlane.f32.xlu0 %v1148
  %v1287 = vpop.xlane.xlu0 %1286
  %1288 = vmax.xlane.f32.xlu0 %v1151
  %v1289 = vpop.xlane.xlu0 %1288
  %1290 = vmax.xlane.f32.xlu0 %v1156
  %v1291 = vpop.xlane.xlu0 %1290
  %1292 = vmax.xlane.f32.xlu0 %v1159
  %v1293 = vpop.xlane.xlu0 %1292
  %1294 = vmax.xlane.f32.xlu0 %v1164
  %v1295 = vpop.xlane.xlu0 %1294
  %1296 = vmax.xlane.f32.xlu0 %v1167
  %v1297 = vpop.xlane.xlu0 %1296
  %v1298 = vsub.f32 %v736, %v1171
  %v1299 = vsub.f32 %v739, %v1173
  %v1300 = vsub.f32 %v744, %v1175
  %v1301 = vsub.f32 %v747, %v1177
  %v1302 = vsub.f32 %v752, %v1179
  %v1303 = vsub.f32 %v755, %v1181
  %v1304 = vsub.f32 %v760, %v1183
  %v1305 = vsub.f32 %v763, %v1185
  %v1306 = vsub.f32 %v768, %v1187
  %v1307 = vsub.f32 %v771, %v1189
  %v1308 = vsub.f32 %v776, %v1191
  %v1309 = vsub.f32 %v779, %v1193
  %v1310 = vsub.f32 %v784, %v1195
  %v1311 = vsub.f32 %v787, %v1197
  %v1312 = vsub.f32 %v792, %v1199
  %v1313 = vsub.f32 %v795, %v1201
  %v1314 = vsub.f32 %v860, %v1203
  %v1315 = vsub.f32 %v863, %v1205
  %v1316 = vsub.f32 %v868, %v1207
  %v1317 = vsub.f32 %v871, %v1209
  %v1318 = vsub.f32 %v876, %v1211
  %v1319 = vsub.f32 %v879, %v1213
  %v1320 = vsub.f32 %v884, %v1215
  %v1321 = vsub.f32 %v887, %v1217
  %v1322 = vsub.f32 %v892, %v1219
  %v1323 = vsub.f32 %v895, %v1221
  %v1324 = vsub.f32 %v900, %v1223
  %v1325 = vsub.f32 %v903, %v1225
  %v1326 = vsub.f32 %v908, %v1227
  %v1327 = vsub.f32 %v911, %v1229
  %v1328 = vsub.f32 %v916, %v1231
  %v1329 = vsub.f32 %v919, %v1233
  %v1330 = vsub.f32 %v984, %v1235
  %v1331 = vsub.f32 %v987, %v1237
  %v1332 = vsub.f32 %v992, %v1239
  %v1333 = vsub.f32 %v995, %v1241
  %v1334 = vsub.f32 %v1000, %v1243
  %v1335 = vsub.f32 %v1003, %v1245
  %v1336 = vsub.f32 %v1008, %v1247
  %v1337 = vsub.f32 %v1011, %v1249
  %v1338 = vsub.f32 %v1016, %v1251
  %v1339 = vsub.f32 %v1019, %v1253
  %v1340 = vsub.f32 %v1024, %v1255
  %v1341 = vsub.f32 %v1027, %v1257
  %v1342 = vsub.f32 %v1032, %v1259
  %v1343 = vsub.f32 %v1035, %v1261
  %v1344 = vsub.f32 %v1040, %v1263
  %v1345 = vsub.f32 %v1043, %v1265
  %v1346 = vsub.f32 %v1108, %v1267
  %v1347 = vsub.f32 %v1111, %v1269
  %v1348 = vsub.f32 %v1116, %v1271
  %v1349 = vsub.f32 %v1119, %v1273
  %v1350 = vsub.f32 %v1124, %v1275
  %v1351 = vsub.f32 %v1127, %v1277
  %v1352 = vsub.f32 %v1132, %v1279
  %v1353 = vsub.f32 %v1135, %v1281
  %v1354 = vsub.f32 %v1140, %v1283
  %v1355 = vsub.f32 %v1143, %v1285
  %v1356 = vsub.f32 %v1148, %v1287
  %v1357 = vsub.f32 %v1151, %v1289
  %v1358 = vsub.f32 %v1156, %v1291
  %v1359 = vsub.f32 %v1159, %v1293
  %v1360 = vsub.f32 %v1164, %v1295
  %v1361 = vsub.f32 %v1167, %v1297
  %v1362 = vmul.f32 %v1298, 1.442695
  %v1363 = vpow.pop %v1362
  %v1364 = vmul.f32 %v1299, 1.442695
  %v1365 = vpow.pop %v1364
  %v1366 = vmul.f32 %v1300, 1.442695
  %v1367 = vpow.pop %v1366
  %v1368 = vmul.f32 %v1301, 1.442695
  %v1369 = vpow.pop %v1368
  %v1370 = vmul.f32 %v1302, 1.442695
  %v1371 = vpow.pop %v1370
  %v1372 = vmul.f32 %v1303, 1.442695
  %v1373 = vpow.pop %v1372
  %v1374 = vmul.f32 %v1304, 1.442695
  %v1375 = vpow.pop %v1374
  %v1376 = vmul.f32 %v1305, 1.442695
  %v1377 = vpow.pop %v1376
  %v1378 = vmul.f32 %v1306, 1.442695
  %v1379 = vpow.pop %v1378
  %v1380 = vmul.f32 %v1307, 1.442695
  %v1381 = vpow.pop %v1380
  %v1382 = vmul.f32 %v1308, 1.442695
  %v1383 = vpow.pop %v1382
  %v1384 = vmul.f32 %v1309, 1.442695
  %v1385 = vpow.pop %v1384
  %v1386 = vmul.f32 %v1310, 1.442695
  %v1387 = vpow.pop %v1386
  %v1388 = vmul.f32 %v1311, 1.442695
  %v1389 = vpow.pop %v1388
  %v1390 = vmul.f32 %v1312, 1.442695
  %v1391 = vpow.pop %v1390
  %v1392 = vmul.f32 %v1313, 1.442695
  %v1393 = vpow.pop %v1392
  %v1394 = vmul.f32 %v1314, 1.442695
  %v1395 = vpow.pop %v1394
  %v1396 = vmul.f32 %v1315, 1.442695
  %v1397 = vpow.pop %v1396
  %v1398 = vmul.f32 %v1316, 1.442695
  %v1399 = vpow.pop %v1398
  %v1400 = vmul.f32 %v1317, 1.442695
  %v1401 = vpow.pop %v1400
  %v1402 = vmul.f32 %v1318, 1.442695
  %v1403 = vpow.pop %v1402
  %v1404 = vmul.f32 %v1319, 1.442695
  %v1405 = vpow.pop %v1404
  %v1406 = vmul.f32 %v1320, 1.442695
  %v1407 = vpow.pop %v1406
  %v1408 = vmul.f32 %v1321, 1.442695
  %v1409 = vpow.pop %v1408
  %v1410 = vmul.f32 %v1322, 1.442695
  %v1411 = vpow.pop %v1410
  %v1412 = vmul.f32 %v1323, 1.442695
  %v1413 = vpow.pop %v1412
  %v1414 = vmul.f32 %v1324, 1.442695
  %v1415 = vpow.pop %v1414
  %v1416 = vmul.f32 %v1325, 1.442695
  %v1417 = vpow.pop %v1416
  %v1418 = vmul.f32 %v1326, 1.442695
  %v1419 = vpow.pop %v1418
  %v1420 = vmul.f32 %v1327, 1.442695
  %v1421 = vpow.pop %v1420
  %v1422 = vmul.f32 %v1328, 1.442695
  %v1423 = vpow.pop %v1422
  %v1424 = vmul.f32 %v1329, 1.442695
  %v1425 = vpow.pop %v1424
  %v1426 = vmul.f32 %v1330, 1.442695
  %v1427 = vpow.pop %v1426
  %v1428 = vmul.f32 %v1331, 1.442695
  %v1429 = vpow.pop %v1428
  %v1430 = vmul.f32 %v1332, 1.442695
  %v1431 = vpow.pop %v1430
  %v1432 = vmul.f32 %v1333, 1.442695
  %v1433 = vpow.pop %v1432
  %v1434 = vmul.f32 %v1334, 1.442695
  %v1435 = vpow.pop %v1434
  %v1436 = vmul.f32 %v1335, 1.442695
  %v1437 = vpow.pop %v1436
  %v1438 = vmul.f32 %v1336, 1.442695
  %v1439 = vpow.pop %v1438
  %v1440 = vmul.f32 %v1337, 1.442695
  %v1441 = vpow.pop %v1440
  %v1442 = vmul.f32 %v1338, 1.442695
  %v1443 = vpow.pop %v1442
  %v1444 = vmul.f32 %v1339, 1.442695
  %v1445 = vpow.pop %v1444
  %v1446 = vmul.f32 %v1340, 1.442695
  %v1447 = vpow.pop %v1446
  %v1448 = vmul.f32 %v1341, 1.442695
  %v1449 = vpow.pop %v1448
  %v1450 = vmul.f32 %v1342, 1.442695
  %v1451 = vpow.pop %v1450
  %v1452 = vmul.f32 %v1343, 1.442695
  %v1453 = vpow.pop %v1452
  %v1454 = vmul.f32 %v1344, 1.442695
  %v1455 = vpow.pop %v1454
  %v1456 = vmul.f32 %v1345, 1.442695
  %v1457 = vpow.pop %v1456
  %v1458 = vmul.f32 %v1346, 1.442695
  %v1459 = vpow.pop %v1458
  %v1460 = vmul.f32 %v1347, 1.442695
  %v1461 = vpow.pop %v1460
  %v1462 = vmul.f32 %v1348, 1.442695
  %v1463 = vpow.pop %v1462
  %v1464 = vmul.f32 %v1349, 1.442695
  %v1465 = vpow.pop %v1464
  %v1466 = vmul.f32 %v1350, 1.442695
  %v1467 = vpow.pop %v1466
  %v1468 = vmul.f32 %v1351, 1.442695
  %v1469 = vpow.pop %v1468
  %v1470 = vmul.f32 %v1352, 1.442695
  %v1471 = vpow.pop %v1470
  %v1472 = vmul.f32 %v1353, 1.442695
  %v1473 = vpow.pop %v1472
  %v1474 = vmul.f32 %v1354, 1.442695
  %v1475 = vpow.pop %v1474
  %v1476 = vmul.f32 %v1355, 1.442695
  %v1477 = vpow.pop %v1476
  %v1478 = vmul.f32 %v1356, 1.442695
  %v1479 = vpow.pop %v1478
  %v1480 = vmul.f32 %v1357, 1.442695
  %v1481 = vpow.pop %v1480
  %v1482 = vmul.f32 %v1358, 1.442695
  %v1483 = vpow.pop %v1482
  %v1484 = vmul.f32 %v1359, 1.442695
  %v1485 = vpow.pop %v1484
  %v1486 = vmul.f32 %v1360, 1.442695
  %v1487 = vpow.pop %v1486
  %v1488 = vmul.f32 %v1361, 1.442695
  %v1489 = vpow.pop %v1488
  %1490 = vadd.xlane.f32.xlu0 %v1363
  %v1491 = vpop.xlane.xlu0 %1490
  %1492 = vadd.xlane.f32.xlu0 %v1365
  %v1493 = vpop.xlane.xlu0 %1492
  %1494 = vadd.xlane.f32.xlu0 %v1367
  %v1495 = vpop.xlane.xlu0 %1494
  %1496 = vadd.xlane.f32.xlu0 %v1369
  %v1497 = vpop.xlane.xlu0 %1496
  %1498 = vadd.xlane.f32.xlu0 %v1371
  %v1499 = vpop.xlane.xlu0 %1498
  %1500 = vadd.xlane.f32.xlu0 %v1373
  %v1501 = vpop.xlane.xlu0 %1500
  %1502 = vadd.xlane.f32.xlu0 %v1375
  %v1503 = vpop.xlane.xlu0 %1502
  %1504 = vadd.xlane.f32.xlu0 %v1377
  %v1505 = vpop.xlane.xlu0 %1504
  %1506 = vadd.xlane.f32.xlu0 %v1379
  %v1507 = vpop.xlane.xlu0 %1506
  %1508 = vadd.xlane.f32.xlu0 %v1381
  %v1509 = vpop.xlane.xlu0 %1508
  %1510 = vadd.xlane.f32.xlu0 %v1383
  %v1511 = vpop.xlane.xlu0 %1510
  %1512 = vadd.xlane.f32.xlu0 %v1385
  %v1513 = vpop.xlane.xlu0 %1512
  %1514 = vadd.xlane.f32.xlu0 %v1387
  %v1515 = vpop.xlane.xlu0 %1514
  %1516 = vadd.xlane.f32.xlu0 %v1389
  %v1517 = vpop.xlane.xlu0 %1516
  %1518 = vadd.xlane.f32.xlu0 %v1391
  %v1519 = vpop.xlane.xlu0 %1518
  %1520 = vadd.xlane.f32.xlu0 %v1393
  %v1521 = vpop.xlane.xlu0 %1520
  %1522 = vadd.xlane.f32.xlu0 %v1395
  %v1523 = vpop.xlane.xlu0 %1522
  %1524 = vadd.xlane.f32.xlu0 %v1397
  %v1525 = vpop.xlane.xlu0 %1524
  %1526 = vadd.xlane.f32.xlu0 %v1399
  %v1527 = vpop.xlane.xlu0 %1526
  %1528 = vadd.xlane.f32.xlu0 %v1401
  %v1529 = vpop.xlane.xlu0 %1528
  %1530 = vadd.xlane.f32.xlu0 %v1403
  %v1531 = vpop.xlane.xlu0 %1530
  %1532 = vadd.xlane.f32.xlu0 %v1405
  %v1533 = vpop.xlane.xlu0 %1532
  %1534 = vadd.xlane.f32.xlu0 %v1407
  %v1535 = vpop.xlane.xlu0 %1534
  %1536 = vadd.xlane.f32.xlu0 %v1409
  %v1537 = vpop.xlane.xlu0 %1536
  %1538 = vadd.xlane.f32.xlu0 %v1411
  %v1539 = vpop.xlane.xlu0 %1538
  %1540 = vadd.xlane.f32.xlu0 %v1413
  %v1541 = vpop.xlane.xlu0 %1540
  %1542 = vadd.xlane.f32.xlu0 %v1415
  %v1543 = vpop.xlane.xlu0 %1542
  %1544 = vadd.xlane.f32.xlu0 %v1417
  %v1545 = vpop.xlane.xlu0 %1544
  %1546 = vadd.xlane.f32.xlu0 %v1419
  %v1547 = vpop.xlane.xlu0 %1546
  %1548 = vadd.xlane.f32.xlu0 %v1421
  %v1549 = vpop.xlane.xlu0 %1548
  %1550 = vadd.xlane.f32.xlu0 %v1423
  %v1551 = vpop.xlane.xlu0 %1550
  %1552 = vadd.xlane.f32.xlu0 %v1425
  %v1553 = vpop.xlane.xlu0 %1552
  %1554 = vadd.xlane.f32.xlu0 %v1427
  %v1555 = vpop.xlane.xlu0 %1554
  %1556 = vadd.xlane.f32.xlu0 %v1429
  %v1557 = vpop.xlane.xlu0 %1556
  %1558 = vadd.xlane.f32.xlu0 %v1431
  %v1559 = vpop.xlane.xlu0 %1558
  %1560 = vadd.xlane.f32.xlu0 %v1433
  %v1561 = vpop.xlane.xlu0 %1560
  %1562 = vadd.xlane.f32.xlu0 %v1435
  %v1563 = vpop.xlane.xlu0 %1562
  %1564 = vadd.xlane.f32.xlu0 %v1437
  %v1565 = vpop.xlane.xlu0 %1564
  %1566 = vadd.xlane.f32.xlu0 %v1439
  %v1567 = vpop.xlane.xlu0 %1566
  %1568 = vadd.xlane.f32.xlu0 %v1441
  %v1569 = vpop.xlane.xlu0 %1568
  %1570 = vadd.xlane.f32.xlu0 %v1443
  %v1571 = vpop.xlane.xlu0 %1570
  %1572 = vadd.xlane.f32.xlu0 %v1445
  %v1573 = vpop.xlane.xlu0 %1572
  %1574 = vadd.xlane.f32.xlu0 %v1447
  %v1575 = vpop.xlane.xlu0 %1574
  %1576 = vadd.xlane.f32.xlu0 %v1449
  %v1577 = vpop.xlane.xlu0 %1576
  %1578 = vadd.xlane.f32.xlu0 %v1451
  %v1579 = vpop.xlane.xlu0 %1578
  %1580 = vadd.xlane.f32.xlu0 %v1453
  %v1581 = vpop.xlane.xlu0 %1580
  %1582 = vadd.xlane.f32.xlu0 %v1455
  %v1583 = vpop.xlane.xlu0 %1582
  %1584 = vadd.xlane.f32.xlu0 %v1457
  %v1585 = vpop.xlane.xlu0 %1584
  %1586 = vadd.xlane.f32.xlu0 %v1459
  %v1587 = vpop.xlane.xlu0 %1586
  %1588 = vadd.xlane.f32.xlu0 %v1461
  %v1589 = vpop.xlane.xlu0 %1588
  %1590 = vadd.xlane.f32.xlu0 %v1463
  %v1591 = vpop.xlane.xlu0 %1590
  %1592 = vadd.xlane.f32.xlu0 %v1465
  %v1593 = vpop.xlane.xlu0 %1592
  %1594 = vadd.xlane.f32.xlu0 %v1467
  %v1595 = vpop.xlane.xlu0 %1594
  %1596 = vadd.xlane.f32.xlu0 %v1469
  %v1597 = vpop.xlane.xlu0 %1596
  %1598 = vadd.xlane.f32.xlu0 %v1471
  %v1599 = vpop.xlane.xlu0 %1598
  %1600 = vadd.xlane.f32.xlu0 %v1473
  %v1601 = vpop.xlane.xlu0 %1600
  %1602 = vadd.xlane.f32.xlu0 %v1475
  %v1603 = vpop.xlane.xlu0 %1602
  %1604 = vadd.xlane.f32.xlu0 %v1477
  %v1605 = vpop.xlane.xlu0 %1604
  %1606 = vadd.xlane.f32.xlu0 %v1479
  %v1607 = vpop.xlane.xlu0 %1606
  %1608 = vadd.xlane.f32.xlu0 %v1481
  %v1609 = vpop.xlane.xlu0 %1608
  %1610 = vadd.xlane.f32.xlu0 %v1483
  %v1611 = vpop.xlane.xlu0 %1610
  %1612 = vadd.xlane.f32.xlu0 %v1485
  %v1613 = vpop.xlane.xlu0 %1612
  %1614 = vadd.xlane.f32.xlu0 %v1487
  %v1615 = vpop.xlane.xlu0 %1614
  %1616 = vadd.xlane.f32.xlu0 %v1489
  %v1617 = vpop.xlane.xlu0 %1616
  %v1618 = vrcp.pop %v1491
  %v1619 = vrcp.pop %v1493
  %v1620 = vrcp.pop %v1495
  %v1621 = vrcp.pop %v1497
  %v1622 = vrcp.pop %v1499
  %v1623 = vrcp.pop %v1501
  %v1624 = vrcp.pop %v1503
  %v1625 = vrcp.pop %v1505
  %v1626 = vrcp.pop %v1507
  %v1627 = vrcp.pop %v1509
  %v1628 = vrcp.pop %v1511
  %v1629 = vrcp.pop %v1513
  %v1630 = vrcp.pop %v1515
  %v1631 = vrcp.pop %v1517
  %v1632 = vrcp.pop %v1519
  %v1633 = vrcp.pop %v1521
  %v1634 = vrcp.pop %v1523
  %v1635 = vrcp.pop %v1525
  %v1636 = vrcp.pop %v1527
  %v1637 = vrcp.pop %v1529
  %v1638 = vrcp.pop %v1531
  %v1639 = vrcp.pop %v1533
  %v1640 = vrcp.pop %v1535
  %v1641 = vrcp.pop %v1537
  %v1642 = vrcp.pop %v1539
  %v1643 = vrcp.pop %v1541
  %v1644 = vrcp.pop %v1543
  %v1645 = vrcp.pop %v1545
  %v1646 = vrcp.pop %v1547
  %v1647 = vrcp.pop %v1549
  %v1648 = vrcp.pop %v1551
  %v1649 = vrcp.pop %v1553
  %v1650 = vrcp.pop %v1555
  %v1651 = vrcp.pop %v1557
  %v1652 = vrcp.pop %v1559
  %v1653 = vrcp.pop %v1561
  %v1654 = vrcp.pop %v1563
  %v1655 = vrcp.pop %v1565
  %v1656 = vrcp.pop %v1567
  %v1657 = vrcp.pop %v1569
  %v1658 = vrcp.pop %v1571
  %v1659 = vrcp.pop %v1573
  %v1660 = vrcp.pop %v1575
  %v1661 = vrcp.pop %v1577
  %v1662 = vrcp.pop %v1579
  %v1663 = vrcp.pop %v1581
  %v1664 = vrcp.pop %v1583
  %v1665 = vrcp.pop %v1585
  %v1666 = vrcp.pop %v1587
  %v1667 = vrcp.pop %v1589
  %v1668 = vrcp.pop %v1591
  %v1669 = vrcp.pop %v1593
  %v1670 = vrcp.pop %v1595
  %v1671 = vrcp.pop %v1597
  %v1672 = vrcp.pop %v1599
  %v1673 = vrcp.pop %v1601
  %v1674 = vrcp.pop %v1603
  %v1675 = vrcp.pop %v1605
  %v1676 = vrcp.pop %v1607
  %v1677 = vrcp.pop %v1609
  %v1678 = vrcp.pop %v1611
  %v1679 = vrcp.pop %v1613
  %v1680 = vrcp.pop %v1615
  %v1681 = vrcp.pop %v1617
  %v1682 = vmul.f32 %v1363, %v1618
  %v1683 = vmul.f32 %v1365, %v1619
  %v1684 = vmul.f32 %v1367, %v1620
  %v1685 = vmul.f32 %v1369, %v1621
  %v1686 = vmul.f32 %v1371, %v1622
  %v1687 = vmul.f32 %v1373, %v1623
  %v1688 = vmul.f32 %v1375, %v1624
  %v1689 = vmul.f32 %v1377, %v1625
  %v1690 = vmul.f32 %v1379, %v1626
  %v1691 = vmul.f32 %v1381, %v1627
  %v1692 = vmul.f32 %v1383, %v1628
  %v1693 = vmul.f32 %v1385, %v1629
  %v1694 = vmul.f32 %v1387, %v1630
  %v1695 = vmul.f32 %v1389, %v1631
  %v1696 = vmul.f32 %v1391, %v1632
  %v1697 = vmul.f32 %v1393, %v1633
  %v1698 = vmul.f32 %v1395, %v1634
  %v1699 = vmul.f32 %v1397, %v1635
  %v1700 = vmul.f32 %v1399, %v1636
  %v1701 = vmul.f32 %v1401, %v1637
  %v1702 = vmul.f32 %v1403, %v1638
  %v1703 = vmul.f32 %v1405, %v1639
  %v1704 = vmul.f32 %v1407, %v1640
  %v1705 = vmul.f32 %v1409, %v1641
  %v1706 = vmul.f32 %v1411, %v1642
  %v1707 = vmul.f32 %v1413, %v1643
  %v1708 = vmul.f32 %v1415, %v1644
  %v1709 = vmul.f32 %v1417, %v1645
  %v1710 = vmul.f32 %v1419, %v1646
  %v1711 = vmul.f32 %v1421, %v1647
  %v1712 = vmul.f32 %v1423, %v1648
  %v1713 = vmul.f32 %v1425, %v1649
  %v1714 = vmul.f32 %v1427, %v1650
  %v1715 = vmul.f32 %v1429, %v1651
  %v1716 = vmul.f32 %v1431, %v1652
  %v1717 = vmul.f32 %v1433, %v1653
  %v1718 = vmul.f32 %v1435, %v1654
  %v1719 = vmul.f32 %v1437, %v1655
  %v1720 = vmul.f32 %v1439, %v1656
  %v1721 = vmul.f32 %v1441, %v1657
  %v1722 = vmul.f32 %v1443, %v1658
  %v1723 = vmul.f32 %v1445, %v1659
  %v1724 = vmul.f32 %v1447, %v1660
  %v1725 = vmul.f32 %v1449, %v1661
  %v1726 = vmul.f32 %v1451, %v1662
  %v1727 = vmul.f32 %v1453, %v1663
  %v1728 = vmul.f32 %v1455, %v1664
  %v1729 = vmul.f32 %v1457, %v1665
  %v1730 = vmul.f32 %v1459, %v1666
  %v1731 = vmul.f32 %v1461, %v1667
  %v1732 = vmul.f32 %v1463, %v1668
  %v1733 = vmul.f32 %v1465, %v1669
  %v1734 = vmul.f32 %v1467, %v1670
  %v1735 = vmul.f32 %v1469, %v1671
  %v1736 = vmul.f32 %v1471, %v1672
  %v1737 = vmul.f32 %v1473, %v1673
  %v1738 = vmul.f32 %v1475, %v1674
  %v1739 = vmul.f32 %v1477, %v1675
  %v1740 = vmul.f32 %v1479, %v1676
  %v1741 = vmul.f32 %v1481, %v1677
  %v1742 = vmul.f32 %v1483, %v1678
  %v1743 = vmul.f32 %v1485, %v1679
  %v1744 = vmul.f32 %v1487, %v1680
  %v1745 = vmul.f32 %v1489, %v1681
  %v1746 = vpack.c.bf16 %v478, %v478
  %v1747 = vpack.c.bf16 %v481, %v481
  %v1748 = vpack.c.bf16 %v486, %v486
  %v1749 = vpack.c.bf16 %v489, %v489
  %v1750 = vpack.c.bf16 %v1683, %v1682
  %v1751 = vpack.c.bf16 %v1685, %v1684
  %v1752 = vpack.c.bf16 %v1687, %v1686
  %v1753 = vpack.c.bf16 %v1689, %v1688
  %v1754 = vpack.c.bf16 %v1691, %v1690
  %v1755 = vpack.c.bf16 %v1693, %v1692
  %v1756 = vpack.c.bf16 %v1695, %v1694
  %v1757 = vpack.c.bf16 %v1697, %v1696
  %v1758 = vpack.c.bf16 %v1699, %v1698
  %v1759 = vpack.c.bf16 %v1701, %v1700
  %v1760 = vpack.c.bf16 %v1703, %v1702
  %v1761 = vpack.c.bf16 %v1705, %v1704
  %v1762 = vpack.c.bf16 %v1707, %v1706
  %v1763 = vpack.c.bf16 %v1709, %v1708
  %v1764 = vpack.c.bf16 %v1711, %v1710
  %v1765 = vpack.c.bf16 %v1713, %v1712
  %v1766 = vpack.c.bf16 %v1715, %v1714
  %v1767 = vpack.c.bf16 %v1717, %v1716
  %v1768 = vpack.c.bf16 %v1719, %v1718
  %v1769 = vpack.c.bf16 %v1721, %v1720
  %v1770 = vpack.c.bf16 %v1723, %v1722
  %v1771 = vpack.c.bf16 %v1725, %v1724
  %v1772 = vpack.c.bf16 %v1727, %v1726
  %v1773 = vpack.c.bf16 %v1729, %v1728
  %v1774 = vpack.c.bf16 %v1731, %v1730
  %v1775 = vpack.c.bf16 %v1733, %v1732
  %v1776 = vpack.c.bf16 %v1735, %v1734
  %v1777 = vpack.c.bf16 %v1737, %v1736
  %v1778 = vpack.c.bf16 %v1739, %v1738
  %v1779 = vpack.c.bf16 %v1741, %v1740
  %v1780 = vpack.c.bf16 %v1743, %v1742
  %v1781 = vpack.c.bf16 %v1745, %v1744
  %1782 = vmatprep.subr.bf16.mxu0 0
  %1783 = vmatpush1.bf16.xpose.msra.mxu0 %v1750
  %1784 = vmatprep.subr.bf16.mxu0 0
  %1785 = vmatpush1.bf16.xpose.msra.mxu0 %v1751
  %1786 = vmatprep.subr.bf16.mxu0 0
  %1787 = vmatpush1.bf16.xpose.msra.mxu0 %v1752
  %1788 = vmatprep.subr.bf16.mxu0 0
  %1789 = vmatpush1.bf16.xpose.msra.mxu0 %v1753
  %1790 = vmatprep.subr.bf16.mxu0 0
  %1791 = vmatpush1.bf16.xpose.msra.mxu0 %v1754
  %1792 = vmatprep.subr.bf16.mxu0 0
  %1793 = vmatpush1.bf16.xpose.msra.mxu0 %v1755
  %1794 = vmatprep.subr.bf16.mxu0 0
  %1795 = vmatpush1.bf16.xpose.msra.mxu0 %v1756
  %1796 = vmatprep.subr.bf16.mxu0 0
  %1797 = vmatpush1.bf16.xpose.msra.mxu0 %v1757
  %1798 = vmatprep.subr.bf16.mxu0 0
  %1799 = vmatpush1.bf16.xpose.msra.mxu0 0
  %1800 = vmatprep.subr.bf16.mxu0 0
  %1801 = vmatpush1.bf16.xpose.msra.mxu0 0
  %1802 = vmatprep.subr.bf16.mxu0 0
  %1803 = vmatpush1.bf16.xpose.msra.mxu0 0
  %1804 = vmatprep.subr.bf16.mxu0 0
  %1805 = vmatpush1.bf16.xpose.msra.mxu0 0
  %1806 = vmatprep.subr.bf16.mxu0 0
  %1807 = vmatpush1.bf16.xpose.msra.mxu0 0
  %1808 = vmatprep.subr.bf16.mxu0 0
  %1809 = vmatpush1.bf16.xpose.msra.mxu0 0
  %1810 = vmatprep.subr.bf16.mxu0 0
  %1811 = vmatpush1.bf16.xpose.msra.mxu0 0
  %1812 = vmatprep.subr.bf16.mxu0 0
  %1813 = vmatpush1.bf16.xpose.msra.mxu0 0
  %1814 = vmatprep.mubr.bf16.mxu0 0
  %1815 = vmatmul.mubr.bf16.gmra.mrb[0].mxu0 %v1746
  %v1816 = vpop.f32.mrb[0].mxu0
  %v1817 = vadd.f32 0.0, %v1816
  %v1818 = vpop.f32.mrb[0].mxu0
  %v1819 = vpop.f32.mrb[0].mxu0
  %v1820 = vpop.f32.mrb[0].mxu0
  %1821 = vdwg.mxu0
  %1822 = vmatprep.subr.bf16.mxu0 0
  %1823 = vmatpush1.bf16.xpose.msra.mxu0 %v1758
  %1824 = vmatprep.subr.bf16.mxu0 0
  %1825 = vmatpush1.bf16.xpose.msra.mxu0 %v1759
  %1826 = vmatprep.subr.bf16.mxu0 0
  %1827 = vmatpush1.bf16.xpose.msra.mxu0 %v1760
  %1828 = vmatprep.subr.bf16.mxu0 0
  %1829 = vmatpush1.bf16.xpose.msra.mxu0 %v1761
  %1830 = vmatprep.subr.bf16.mxu0 0
  %1831 = vmatpush1.bf16.xpose.msra.mxu0 %v1762
  %1832 = vmatprep.subr.bf16.mxu0 0
  %1833 = vmatpush1.bf16.xpose.msra.mxu0 %v1763
  %1834 = vmatprep.subr.bf16.mxu0 0
  %1835 = vmatpush1.bf16.xpose.msra.mxu0 %v1764
  %1836 = vmatprep.subr.bf16.mxu0 0
  %1837 = vmatpush1.bf16.xpose.msra.mxu0 %v1765
  %1838 = vmatprep.subr.bf16.mxu0 0
  %1839 = vmatpush1.bf16.xpose.msra.mxu0 0
  %1840 = vmatprep.subr.bf16.mxu0 0
  %1841 = vmatpush1.bf16.xpose.msra.mxu0 0
  %1842 = vmatprep.subr.bf16.mxu0 0
  %1843 = vmatpush1.bf16.xpose.msra.mxu0 0
  %1844 = vmatprep.subr.bf16.mxu0 0
  %1845 = vmatpush1.bf16.xpose.msra.mxu0 0
  %1846 = vmatprep.subr.bf16.mxu0 0
  %1847 = vmatpush1.bf16.xpose.msra.mxu0 0
  %1848 = vmatprep.subr.bf16.mxu0 0
  %1849 = vmatpush1.bf16.xpose.msra.mxu0 0
  %1850 = vmatprep.subr.bf16.mxu0 0
  %1851 = vmatpush1.bf16.xpose.msra.mxu0 0
  %1852 = vmatprep.subr.bf16.mxu0 0
  %1853 = vmatpush1.bf16.xpose.msra.mxu0 0
  %1854 = vmatprep.mubr.bf16.mxu0 0
  %1855 = vmatmul.mubr.bf16.gmra.mrb[0].mxu0 %v1747
  %v1856 = vpop.f32.mrb[0].mxu0
  %v1857 = vadd.f32 0.0, %v1856
  %v1858 = vpop.f32.mrb[0].mxu0
  %v1859 = vpop.f32.mrb[0].mxu0
  %v1860 = vpop.f32.mrb[0].mxu0
  %1861 = vdwg.mxu0
  %1862 = vmatprep.subr.bf16.mxu0 0
  %1863 = vmatpush1.bf16.xpose.msra.mxu0 %v1766
  %1864 = vmatprep.subr.bf16.mxu0 0
  %1865 = vmatpush1.bf16.xpose.msra.mxu0 %v1767
  %1866 = vmatprep.subr.bf16.mxu0 0
  %1867 = vmatpush1.bf16.xpose.msra.mxu0 %v1768
  %1868 = vmatprep.subr.bf16.mxu0 0
  %1869 = vmatpush1.bf16.xpose.msra.mxu0 %v1769
  %1870 = vmatprep.subr.bf16.mxu0 0
  %1871 = vmatpush1.bf16.xpose.msra.mxu0 %v1770
  %1872 = vmatprep.subr.bf16.mxu0 0
  %1873 = vmatpush1.bf16.xpose.msra.mxu0 %v1771
  %1874 = vmatprep.subr.bf16.mxu0 0
  %1875 = vmatpush1.bf16.xpose.msra.mxu0 %v1772
  %1876 = vmatprep.subr.bf16.mxu0 0
  %1877 = vmatpush1.bf16.xpose.msra.mxu0 %v1773
  %1878 = vmatprep.subr.bf16.mxu0 0
  %1879 = vmatpush1.bf16.xpose.msra.mxu0 0
  %1880 = vmatprep.subr.bf16.mxu0 0
  %1881 = vmatpush1.bf16.xpose.msra.mxu0 0
  %1882 = vmatprep.subr.bf16.mxu0 0
  %1883 = vmatpush1.bf16.xpose.msra.mxu0 0
  %1884 = vmatprep.subr.bf16.mxu0 0
  %1885 = vmatpush1.bf16.xpose.msra.mxu0 0
  %1886 = vmatprep.subr.bf16.mxu0 0
  %1887 = vmatpush1.bf16.xpose.msra.mxu0 0
  %1888 = vmatprep.subr.bf16.mxu0 0
  %1889 = vmatpush1.bf16.xpose.msra.mxu0 0
  %1890 = vmatprep.subr.bf16.mxu0 0
  %1891 = vmatpush1.bf16.xpose.msra.mxu0 0
  %1892 = vmatprep.subr.bf16.mxu0 0
  %1893 = vmatpush1.bf16.xpose.msra.mxu0 0
  %1894 = vmatprep.mubr.bf16.mxu0 0
  %1895 = vmatmul.mubr.bf16.gmra.mrb[0].mxu0 %v1748
  %v1896 = vpop.f32.mrb[0].mxu0
  %v1897 = vadd.f32 0.0, %v1896
  %v1898 = vpop.f32.mrb[0].mxu0
  %v1899 = vpop.f32.mrb[0].mxu0
  %v1900 = vpop.f32.mrb[0].mxu0
  %1901 = vdwg.mxu0
  %1902 = vmatprep.subr.bf16.mxu0 0
  %1903 = vmatpush1.bf16.xpose.msra.mxu0 %v1774
  %1904 = vmatprep.subr.bf16.mxu0 0
  %1905 = vmatpush1.bf16.xpose.msra.mxu0 %v1775
  %1906 = vmatprep.subr.bf16.mxu0 0
  %1907 = vmatpush1.bf16.xpose.msra.mxu0 %v1776
  %1908 = vmatprep.subr.bf16.mxu0 0
  %1909 = vmatpush1.bf16.xpose.msra.mxu0 %v1777
  %1910 = vmatprep.subr.bf16.mxu0 0
  %1911 = vmatpush1.bf16.xpose.msra.mxu0 %v1778
  %1912 = vmatprep.subr.bf16.mxu0 0
  %1913 = vmatpush1.bf16.xpose.msra.mxu0 %v1779
  %1914 = vmatprep.subr.bf16.mxu0 0
  %1915 = vmatpush1.bf16.xpose.msra.mxu0 %v1780
  %1916 = vmatprep.subr.bf16.mxu0 0
  %1917 = vmatpush1.bf16.xpose.msra.mxu0 %v1781
  %1918 = vmatprep.subr.bf16.mxu0 0
  %1919 = vmatpush1.bf16.xpose.msra.mxu0 0
  %1920 = vmatprep.subr.bf16.mxu0 0
  %1921 = vmatpush1.bf16.xpose.msra.mxu0 0
  %1922 = vmatprep.subr.bf16.mxu0 0
  %1923 = vmatpush1.bf16.xpose.msra.mxu0 0
  %1924 = vmatprep.subr.bf16.mxu0 0
  %1925 = vmatpush1.bf16.xpose.msra.mxu0 0
  %1926 = vmatprep.subr.bf16.mxu0 0
  %1927 = vmatpush1.bf16.xpose.msra.mxu0 0
  %1928 = vmatprep.subr.bf16.mxu0 0
  %1929 = vmatpush1.bf16.xpose.msra.mxu0 0
  %1930 = vmatprep.subr.bf16.mxu0 0
  %1931 = vmatpush1.bf16.xpose.msra.mxu0 0
  %1932 = vmatprep.subr.bf16.mxu0 0
  %1933 = vmatpush1.bf16.xpose.msra.mxu0 0
  %1934 = vmatprep.mubr.bf16.mxu0 0
  %1935 = vmatmul.mubr.bf16.gmra.mrb[0].mxu0 %v1749
  %v1936 = vpop.f32.mrb[0].mxu0
  %v1937 = vadd.f32 0.0, %v1936
  %v1938 = vpop.f32.mrb[0].mxu0
  %v1939 = vpop.f32.mrb[0].mxu0
  %v1940 = vpop.f32.mrb[0].mxu0
  %1941 = vdwg.mxu0
  %v1942 = vpack.c.bf16 %v1857, %v1817
  %v1943 = vpack.c.bf16 %v1937, %v1897
  %v1948 = vunpack.c.l.b16 %v140
  %v1949 = vunpack.c.l.b16 %v141
  %v1950 = vunpack.c.l.b16 %v142
  %v1951 = vunpack.c.l.b16 %v143
  %v1952 = vpack.c.b16 %v1949, %v1948
  %v1953 = vpack.c.b16 %v1951, %v1950
  %v1955 = vsel %vm392, %v1952, 0
  %v1958 = vsel %vm392, %v1953, 0
  %1960 = vmatprep.subr.bf16.mxu0 0
  %1961 = vmatpush1.bf16.msra.mxu0 %v1942
  %1962 = vmatprep.subr.bf16.mxu0 0
  %1963 = vmatpush1.bf16.msra.mxu0 %v1943
  %1964 = vmatprep.subr.bf16.mxu0 0
  %1965 = vmatpush1.bf16.msra.mxu0 0
  %1966 = vmatprep.subr.bf16.mxu0 0
  %1967 = vmatpush1.bf16.msra.mxu0 0
  %1968 = vmatprep.subr.bf16.mxu0 0
  %1969 = vmatpush1.bf16.msra.mxu0 0
  %1970 = vmatprep.subr.bf16.mxu0 0
  %1971 = vmatpush1.bf16.msra.mxu0 0
  %1972 = vmatprep.subr.bf16.mxu0 0
  %1973 = vmatpush1.bf16.msra.mxu0 0
  %1974 = vmatprep.subr.bf16.mxu0 0
  %1975 = vmatpush1.bf16.msra.mxu0 0
  %1976 = vmatprep.subr.bf16.mxu0 0
  %1977 = vmatpush1.bf16.msra.mxu0 0
  %1978 = vmatprep.subr.bf16.mxu0 0
  %1979 = vmatpush1.bf16.msra.mxu0 0
  %1980 = vmatprep.subr.bf16.mxu0 0
  %1981 = vmatpush1.bf16.msra.mxu0 0
  %1982 = vmatprep.subr.bf16.mxu0 0
  %1983 = vmatpush1.bf16.msra.mxu0 0
  %1984 = vmatprep.subr.bf16.mxu0 0
  %1985 = vmatpush1.bf16.msra.mxu0 0
  %1986 = vmatprep.subr.bf16.mxu0 0
  %1987 = vmatpush1.bf16.msra.mxu0 0
  %1988 = vmatprep.subr.bf16.mxu0 0
  %1989 = vmatpush1.bf16.msra.mxu0 0
  %1990 = vmatprep.subr.bf16.mxu0 0
  %1991 = vmatpush1.bf16.msra.mxu0 0
  %1992 = vmatprep.mubr.bf16.mxu0 0
  %1993 = vmatmul.mubr.bf16.gmra.mrb[0].mxu0 %v1955
  %v1994 = vpop.f32.mrb[0].mxu0
  %v1995 = vadd.f32 0.0, %v1994
  %v1996 = vpop.f32.mrb[0].mxu0
  %v1997 = vpop.f32.mrb[0].mxu0
  %v1998 = vadd.f32 0.0, %v1997
  %v1999 = vpop.f32.mrb[0].mxu0
  %2000 = vmatprep.mubr.bf16.mxu0 0
  %2001 = vmatmul.mubr.bf16.gmra.mrb[0].mxu0 %v1958
  %v2002 = vpop.f32.mrb[0].mxu0
  %v2003 = vadd.f32 0.0, %v2002
  %v2004 = vpop.f32.mrb[0].mxu0
  %v2005 = vpop.f32.mrb[0].mxu0
  %v2006 = vadd.f32 0.0, %v2005
  %v2007 = vpop.f32.mrb[0].mxu0
  %2008 = vdwg.mxu0
  %v2009 = vadd.f32 %v114, %v1995
  %v2010 = vadd.f32 %v117, %v1998
  %v2011 = vadd.f32 %v122, %v2003
  %v2012 = vadd.f32 %v125, %v2006
  %2014 = vset.pattern.permute.xlu0 0
  %2015 = vperm.xlu0 %2014, %v184
  %v2016 = vpop.permute.xlu0 %2015
  %2019 = vset.pattern.permute.xlu0 0
  %2020 = vperm.xlu0 %2019, %v185
  %v2021 = vpop.permute.xlu0 %2020
  %2024 = vset.pattern.permute.xlu0 0
  %2025 = vperm.xlu0 %2024, %v186
  %v2026 = vpop.permute.xlu0 %2025
  %2029 = vset.pattern.permute.xlu0 0
  %2030 = vperm.xlu0 %2029, %v187
  %v2031 = vpop.permute.xlu0 %2030
  %v2033 = vadd.f32 %v2009, %v2016
  %v2034 = vadd.f32 %v2010, %v2021
  %v2035 = vadd.f32 %v2011, %v2026
  %v2036 = vadd.f32 %v2012, %v2031
  %v2037 = vadd.f32 %v2033, %v2034
  %v2038 = vadd.f32 %v2037, %v2035
  %v2039 = vadd.f32 %v2038, %v2036
  %v2040 = vrot.slane %v2039, 4
  %v2041 = vadd.f32 %v2039, %v2040
  %v2042 = vrot.slane %v2041, 2
  %v2043 = vadd.f32 %v2041, %v2042
  %v2044 = vrot.slane %v2043, 1
  %v2045 = vadd.f32 %v2043, %v2044
  %v2046 = vmul.f32 %v2033, %v2033
  %v2047 = vmul.f32 %v2034, %v2034
  %v2048 = vmul.f32 %v2035, %v2035
  %v2049 = vmul.f32 %v2036, %v2036
  %v2050 = vadd.f32 %v2046, %v2047
  %v2051 = vadd.f32 %v2050, %v2048
  %v2052 = vadd.f32 %v2051, %v2049
  %v2053 = vrot.slane %v2052, 4
  %v2054 = vadd.f32 %v2052, %v2053
  %v2055 = vrot.slane %v2054, 2
  %v2056 = vadd.f32 %v2054, %v2055
  %v2057 = vrot.slane %v2056, 1
  %v2058 = vadd.f32 %v2056, %v2057
  %v2059 = vmul.f32 %v2045, 0.03125
  %v2060 = vmul.f32 %v2058, 0.03125
  %v2061 = vmul.f32 %v2059, %v2059
  %v2062 = vsub.f32 %v2060, %v2061
  %v2063 = vsub.f32 %v2033, %v2059
  %v2064 = vsub.f32 %v2034, %v2059
  %v2065 = vsub.f32 %v2035, %v2059
  %v2066 = vsub.f32 %v2036, %v2059
  %v2067 = vadd.f32 %v2062, 1e-06
  %v2068 = vrsqrt.pop %v2067
  %v2069 = vmul.f32 %v2063, %v2068
  %v2070 = vmul.f32 %v2064, %v2068
  %v2071 = vmul.f32 %v2065, %v2068
  %v2072 = vmul.f32 %v2066, %v2068
  %2074 = vset.pattern.permute.xlu0 0
  %2075 = vperm.xlu0 %2074, %v188
  %v2076 = vpop.permute.xlu0 %2075
  %2079 = vset.pattern.permute.xlu0 0
  %2080 = vperm.xlu0 %2079, %v189
  %v2081 = vpop.permute.xlu0 %2080
  %2084 = vset.pattern.permute.xlu0 0
  %2085 = vperm.xlu0 %2084, %v190
  %v2086 = vpop.permute.xlu0 %2085
  %2089 = vset.pattern.permute.xlu0 0
  %2090 = vperm.xlu0 %2089, %v191
  %v2091 = vpop.permute.xlu0 %2090
  %v2093 = vmul.f32 %v2069, %v2076
  %v2094 = vmul.f32 %v2070, %v2081
  %v2095 = vmul.f32 %v2071, %v2086
  %v2096 = vmul.f32 %v2072, %v2091
  %2098 = vset.pattern.permute.xlu0 0
  %2099 = vperm.xlu0 %2098, %v192
  %v2100 = vpop.permute.xlu0 %2099
  %2103 = vset.pattern.permute.xlu0 0
  %2104 = vperm.xlu0 %2103, %v193
  %v2105 = vpop.permute.xlu0 %2104
  %2108 = vset.pattern.permute.xlu0 0
  %2109 = vperm.xlu0 %2108, %v194
  %v2110 = vpop.permute.xlu0 %2109
  %2113 = vset.pattern.permute.xlu0 0
  %2114 = vperm.xlu0 %2113, %v195
  %v2115 = vpop.permute.xlu0 %2114
  %v2117 = vadd.f32 %v2093, %v2100
  %v2118 = vadd.f32 %v2094, %v2105
  %v2119 = vadd.f32 %v2095, %v2110
  %v2120 = vadd.f32 %v2096, %v2115
  %v2121 = vpack.c.bf16 %v2118, %v2117
  %v2122 = vpack.c.bf16 %v2120, %v2119
  %2124 = vset.pattern.permute.xlu0 0
  %2125 = vperm.xlu0 %2124, %v196
  %v2126 = vpop.permute.xlu0 %2125
  %2129 = vset.pattern.permute.xlu0 0
  %2130 = vperm.xlu0 %2129, %v197
  %v2131 = vpop.permute.xlu0 %2130
  %2134 = vset.pattern.permute.xlu0 0
  %2135 = vperm.xlu0 %2134, %v198
  %v2136 = vpop.permute.xlu0 %2135
  %2139 = vset.pattern.permute.xlu0 0
  %2140 = vperm.xlu0 %2139, %v199
  %v2141 = vpop.permute.xlu0 %2140
  %2144 = vset.pattern.permute.xlu0 0
  %2145 = vperm.xlu0 %2144, %v200
  %v2146 = vpop.permute.xlu0 %2145
  %2149 = vset.pattern.permute.xlu0 0
  %2150 = vperm.xlu0 %2149, %v201
  %v2151 = vpop.permute.xlu0 %2150
  %2154 = vset.pattern.permute.xlu0 0
  %2155 = vperm.xlu0 %2154, %v202
  %v2156 = vpop.permute.xlu0 %2155
  %2159 = vset.pattern.permute.xlu0 0
  %2160 = vperm.xlu0 %2159, %v203
  %v2161 = vpop.permute.xlu0 %2160
  %2164 = vset.pattern.permute.xlu0 0
  %2165 = vperm.xlu0 %2164, %v204
  %v2166 = vpop.permute.xlu0 %2165
  %2169 = vset.pattern.permute.xlu0 0
  %2170 = vperm.xlu0 %2169, %v205
  %v2171 = vpop.permute.xlu0 %2170
  %2174 = vset.pattern.permute.xlu0 0
  %2175 = vperm.xlu0 %2174, %v206
  %v2176 = vpop.permute.xlu0 %2175
  %2179 = vset.pattern.permute.xlu0 0
  %2180 = vperm.xlu0 %2179, %v207
  %v2181 = vpop.permute.xlu0 %2180
  %2184 = vset.pattern.permute.xlu0 0
  %2185 = vperm.xlu0 %2184, %v208
  %v2186 = vpop.permute.xlu0 %2185
  %2189 = vset.pattern.permute.xlu0 0
  %2190 = vperm.xlu0 %2189, %v209
  %v2191 = vpop.permute.xlu0 %2190
  %2194 = vset.pattern.permute.xlu0 0
  %2195 = vperm.xlu0 %2194, %v210
  %v2196 = vpop.permute.xlu0 %2195
  %2199 = vset.pattern.permute.xlu0 0
  %2200 = vperm.xlu0 %2199, %v211
  %v2201 = vpop.permute.xlu0 %2200
  %v2219 = vunpack.c.l.b16 %v144
  %v2220 = vunpack.c.l.b16 %v145
  %v2221 = vunpack.c.l.b16 %v146
  %v2222 = vunpack.c.l.b16 %v147
  %v2223 = vunpack.c.l.b16 %v148
  %v2224 = vunpack.c.l.b16 %v149
  %v2225 = vunpack.c.l.b16 %v150
  %v2226 = vunpack.c.l.b16 %v151
  %v2227 = vunpack.c.l.b16 %v152
  %v2228 = vunpack.c.l.b16 %v153
  %v2229 = vunpack.c.l.b16 %v154
  %v2230 = vunpack.c.l.b16 %v155
  %v2231 = vunpack.c.l.b16 %v156
  %v2232 = vunpack.c.l.b16 %v157
  %v2233 = vunpack.c.l.b16 %v158
  %v2234 = vunpack.c.l.b16 %v159
  %v2235 = vpack.c.b16 %v2220, %v2219
  %v2236 = vpack.c.b16 %v2222, %v2221
  %v2237 = vpack.c.b16 %v2224, %v2223
  %v2238 = vpack.c.b16 %v2226, %v2225
  %v2239 = vpack.c.b16 %v2228, %v2227
  %v2240 = vpack.c.b16 %v2230, %v2229
  %v2241 = vpack.c.b16 %v2232, %v2231
  %v2242 = vpack.c.b16 %v2234, %v2233
  %v2244 = vsel %vm392, %v2235, 0
  %v2247 = vsel %vm392, %v2236, 0
  %v2250 = vsel %vm392, %v2237, 0
  %v2253 = vsel %vm392, %v2238, 0
  %v2256 = vsel %vm392, %v2239, 0
  %v2259 = vsel %vm392, %v2240, 0
  %v2262 = vsel %vm392, %v2241, 0
  %v2265 = vsel %vm392, %v2242, 0
  %2267 = vmatprep.subr.bf16.mxu0 0
  %2268 = vmatpush1.bf16.msra.mxu0 %v2121
  %2269 = vmatprep.subr.bf16.mxu0 0
  %2270 = vmatpush1.bf16.msra.mxu0 %v2122
  %2271 = vmatprep.subr.bf16.mxu0 0
  %2272 = vmatpush1.bf16.msra.mxu0 0
  %2273 = vmatprep.subr.bf16.mxu0 0
  %2274 = vmatpush1.bf16.msra.mxu0 0
  %2275 = vmatprep.subr.bf16.mxu0 0
  %2276 = vmatpush1.bf16.msra.mxu0 0
  %2277 = vmatprep.subr.bf16.mxu0 0
  %2278 = vmatpush1.bf16.msra.mxu0 0
  %2279 = vmatprep.subr.bf16.mxu0 0
  %2280 = vmatpush1.bf16.msra.mxu0 0
  %2281 = vmatprep.subr.bf16.mxu0 0
  %2282 = vmatpush1.bf16.msra.mxu0 0
  %2283 = vmatprep.subr.bf16.mxu0 0
  %2284 = vmatpush1.bf16.msra.mxu0 0
  %2285 = vmatprep.subr.bf16.mxu0 0
  %2286 = vmatpush1.bf16.msra.mxu0 0
  %2287 = vmatprep.subr.bf16.mxu0 0
  %2288 = vmatpush1.bf16.msra.mxu0 0
  %2289 = vmatprep.subr.bf16.mxu0 0
  %2290 = vmatpush1.bf16.msra.mxu0 0
  %2291 = vmatprep.subr.bf16.mxu0 0
  %2292 = vmatpush1.bf16.msra.mxu0 0
  %2293 = vmatprep.subr.bf16.mxu0 0
  %2294 = vmatpush1.bf16.msra.mxu0 0
  %2295 = vmatprep.subr.bf16.mxu0 0
  %2296 = vmatpush1.bf16.msra.mxu0 0
  %2297 = vmatprep.subr.bf16.mxu0 0
  %2298 = vmatpush1.bf16.msra.mxu0 0
  %2299 = vmatprep.mubr.bf16.mxu0 0
  %2300 = vmatmul.mubr.bf16.gmra.mrb[0].mxu0 %v2244
  %v2301 = vpop.f32.mrb[0].mxu0
  %v2302 = vadd.f32 %v2126, %v2301
  %v2303 = vpop.f32.mrb[0].mxu0
  %v2304 = vpop.f32.mrb[0].mxu0
  %v2305 = vadd.f32 %v2131, %v2304
  %v2306 = vpop.f32.mrb[0].mxu0
  %2307 = vmatprep.mubr.bf16.mxu0 0
  %2308 = vmatmul.mubr.bf16.gmra.mrb[0].mxu0 %v2247
  %v2309 = vpop.f32.mrb[0].mxu0
  %v2310 = vadd.f32 %v2136, %v2309
  %v2311 = vpop.f32.mrb[0].mxu0
  %v2312 = vpop.f32.mrb[0].mxu0
  %v2313 = vadd.f32 %v2141, %v2312
  %v2314 = vpop.f32.mrb[0].mxu0
  %2315 = vmatprep.mubr.bf16.mxu0 0
  %2316 = vmatmul.mubr.bf16.gmra.mrb[0].mxu0 %v2250
  %v2317 = vpop.f32.mrb[0].mxu0
  %v2318 = vadd.f32 %v2146, %v2317
  %v2319 = vpop.f32.mrb[0].mxu0
  %v2320 = vpop.f32.mrb[0].mxu0
  %v2321 = vadd.f32 %v2151, %v2320
  %v2322 = vpop.f32.mrb[0].mxu0
  %2323 = vmatprep.mubr.bf16.mxu0 0
  %2324 = vmatmul.mubr.bf16.gmra.mrb[0].mxu0 %v2253
  %v2325 = vpop.f32.mrb[0].mxu0
  %v2326 = vadd.f32 %v2156, %v2325
  %v2327 = vpop.f32.mrb[0].mxu0
  %v2328 = vpop.f32.mrb[0].mxu0
  %v2329 = vadd.f32 %v2161, %v2328
  %v2330 = vpop.f32.mrb[0].mxu0
  %2331 = vmatprep.mubr.bf16.mxu0 0
  %2332 = vmatmul.mubr.bf16.gmra.mrb[0].mxu0 %v2256
  %v2333 = vpop.f32.mrb[0].mxu0
  %v2334 = vadd.f32 %v2166, %v2333
  %v2335 = vpop.f32.mrb[0].mxu0
  %v2336 = vpop.f32.mrb[0].mxu0
  %v2337 = vadd.f32 %v2171, %v2336
  %v2338 = vpop.f32.mrb[0].mxu0
  %2339 = vmatprep.mubr.bf16.mxu0 0
  %2340 = vmatmul.mubr.bf16.gmra.mrb[0].mxu0 %v2259
  %v2341 = vpop.f32.mrb[0].mxu0
  %v2342 = vadd.f32 %v2176, %v2341
  %v2343 = vpop.f32.mrb[0].mxu0
  %v2344 = vpop.f32.mrb[0].mxu0
  %v2345 = vadd.f32 %v2181, %v2344
  %v2346 = vpop.f32.mrb[0].mxu0
  %2347 = vmatprep.mubr.bf16.mxu0 0
  %2348 = vmatmul.mubr.bf16.gmra.mrb[0].mxu0 %v2262
  %v2349 = vpop.f32.mrb[0].mxu0
  %v2350 = vadd.f32 %v2186, %v2349
  %v2351 = vpop.f32.mrb[0].mxu0
  %v2352 = vpop.f32.mrb[0].mxu0
  %v2353 = vadd.f32 %v2191, %v2352
  %v2354 = vpop.f32.mrb[0].mxu0
  %2355 = vmatprep.mubr.bf16.mxu0 0
  %2356 = vmatmul.mubr.bf16.gmra.mrb[0].mxu0 %v2265
  %v2357 = vpop.f32.mrb[0].mxu0
  %v2358 = vadd.f32 %v2196, %v2357
  %v2359 = vpop.f32.mrb[0].mxu0
  %v2360 = vpop.f32.mrb[0].mxu0
  %v2361 = vadd.f32 %v2201, %v2360
  %v2362 = vpop.f32.mrb[0].mxu0
  %2363 = vdwg.mxu0
  %v2364 = vmul.f32 %v2302, %v2302
  %v2365 = vmul.f32 %v2305, %v2305
  %v2366 = vmul.f32 %v2310, %v2310
  %v2367 = vmul.f32 %v2313, %v2313
  %v2368 = vmul.f32 %v2318, %v2318
  %v2369 = vmul.f32 %v2321, %v2321
  %v2370 = vmul.f32 %v2326, %v2326
  %v2371 = vmul.f32 %v2329, %v2329
  %v2372 = vmul.f32 %v2334, %v2334
  %v2373 = vmul.f32 %v2337, %v2337
  %v2374 = vmul.f32 %v2342, %v2342
  %v2375 = vmul.f32 %v2345, %v2345
  %v2376 = vmul.f32 %v2350, %v2350
  %v2377 = vmul.f32 %v2353, %v2353
  %v2378 = vmul.f32 %v2358, %v2358
  %v2379 = vmul.f32 %v2361, %v2361
  %v2380 = vmul.f32 %v2302, %v2364
  %v2381 = vmul.f32 %v2305, %v2365
  %v2382 = vmul.f32 %v2310, %v2366
  %v2383 = vmul.f32 %v2313, %v2367
  %v2384 = vmul.f32 %v2318, %v2368
  %v2385 = vmul.f32 %v2321, %v2369
  %v2386 = vmul.f32 %v2326, %v2370
  %v2387 = vmul.f32 %v2329, %v2371
  %v2388 = vmul.f32 %v2334, %v2372
  %v2389 = vmul.f32 %v2337, %v2373
  %v2390 = vmul.f32 %v2342, %v2374
  %v2391 = vmul.f32 %v2345, %v2375
  %v2392 = vmul.f32 %v2350, %v2376
  %v2393 = vmul.f32 %v2353, %v2377
  %v2394 = vmul.f32 %v2358, %v2378
  %v2395 = vmul.f32 %v2361, %v2379
  %v2396 = vmul.f32 %v2380, 0.044715
  %v2397 = vmul.f32 %v2381, 0.044715
  %v2398 = vmul.f32 %v2382, 0.044715
  %v2399 = vmul.f32 %v2383, 0.044715
  %v2400 = vmul.f32 %v2384, 0.044715
  %v2401 = vmul.f32 %v2385, 0.044715
  %v2402 = vmul.f32 %v2386, 0.044715
  %v2403 = vmul.f32 %v2387, 0.044715
  %v2404 = vmul.f32 %v2388, 0.044715
  %v2405 = vmul.f32 %v2389, 0.044715
  %v2406 = vmul.f32 %v2390, 0.044715
  %v2407 = vmul.f32 %v2391, 0.044715
  %v2408 = vmul.f32 %v2392, 0.044715
  %v2409 = vmul.f32 %v2393, 0.044715
  %v2410 = vmul.f32 %v2394, 0.044715
  %v2411 = vmul.f32 %v2395, 0.044715
  %v2412 = vadd.f32 %v2302, %v2396
  %v2413 = vadd.f32 %v2305, %v2397
  %v2414 = vadd.f32 %v2310, %v2398
  %v2415 = vadd.f32 %v2313, %v2399
  %v2416 = vadd.f32 %v2318, %v2400
  %v2417 = vadd.f32 %v2321, %v2401
  %v2418 = vadd.f32 %v2326, %v2402
  %v2419 = vadd.f32 %v2329, %v2403
  %v2420 = vadd.f32 %v2334, %v2404
  %v2421 = vadd.f32 %v2337, %v2405
  %v2422 = vadd.f32 %v2342, %v2406
  %v2423 = vadd.f32 %v2345, %v2407
  %v2424 = vadd.f32 %v2350, %v2408
  %v2425 = vadd.f32 %v2353, %v2409
  %v2426 = vadd.f32 %v2358, %v2410
  %v2427 = vadd.f32 %v2361, %v2411
  %v2428 = vmul.f32 %v2412, 0.7978846
  %v2429 = vmul.f32 %v2413, 0.7978846
  %v2430 = vmul.f32 %v2414, 0.7978846
  %v2431 = vmul.f32 %v2415, 0.7978846
  %v2432 = vmul.f32 %v2416, 0.7978846
  %v2433 = vmul.f32 %v2417, 0.7978846
  %v2434 = vmul.f32 %v2418, 0.7978846
  %v2435 = vmul.f32 %v2419, 0.7978846
  %v2436 = vmul.f32 %v2420, 0.7978846
  %v2437 = vmul.f32 %v2421, 0.7978846
  %v2438 = vmul.f32 %v2422, 0.7978846
  %v2439 = vmul.f32 %v2423, 0.7978846
  %v2440 = vmul.f32 %v2424, 0.7978846
  %v2441 = vmul.f32 %v2425, 0.7978846
  %v2442 = vmul.f32 %v2426, 0.7978846
  %v2443 = vmul.f32 %v2427, 0.7978846
  %v2444 = vtanh.pop %v2428
  %v2445 = vtanh.pop %v2429
  %v2446 = vtanh.pop %v2430
  %v2447 = vtanh.pop %v2431
  %v2448 = vtanh.pop %v2432
  %v2449 = vtanh.pop %v2433
  %v2450 = vtanh.pop %v2434
  %v2451 = vtanh.pop %v2435
  %v2452 = vtanh.pop %v2436
  %v2453 = vtanh.pop %v2437
  %v2454 = vtanh.pop %v2438
  %v2455 = vtanh.pop %v2439
  %v2456 = vtanh.pop %v2440
  %v2457 = vtanh.pop %v2441
  %v2458 = vtanh.pop %v2442
  %v2459 = vtanh.pop %v2443
  %v2460 = vadd.f32 %v2444, 1.0
  %v2461 = vadd.f32 %v2445, 1.0
  %v2462 = vadd.f32 %v2446, 1.0
  %v2463 = vadd.f32 %v2447, 1.0
  %v2464 = vadd.f32 %v2448, 1.0
  %v2465 = vadd.f32 %v2449, 1.0
  %v2466 = vadd.f32 %v2450, 1.0
  %v2467 = vadd.f32 %v2451, 1.0
  %v2468 = vadd.f32 %v2452, 1.0
  %v2469 = vadd.f32 %v2453, 1.0
  %v2470 = vadd.f32 %v2454, 1.0
  %v2471 = vadd.f32 %v2455, 1.0
  %v2472 = vadd.f32 %v2456, 1.0
  %v2473 = vadd.f32 %v2457, 1.0
  %v2474 = vadd.f32 %v2458, 1.0
  %v2475 = vadd.f32 %v2459, 1.0
  %v2476 = vmul.f32 %v2460, 0.5
  %v2477 = vmul.f32 %v2461, 0.5
  %v2478 = vmul.f32 %v2462, 0.5
  %v2479 = vmul.f32 %v2463, 0.5
  %v2480 = vmul.f32 %v2464, 0.5
  %v2481 = vmul.f32 %v2465, 0.5
  %v2482 = vmul.f32 %v2466, 0.5
  %v2483 = vmul.f32 %v2467, 0.5
  %v2484 = vmul.f32 %v2468, 0.5
  %v2485 = vmul.f32 %v2469, 0.5
  %v2486 = vmul.f32 %v2470, 0.5
  %v2487 = vmul.f32 %v2471, 0.5
  %v2488 = vmul.f32 %v2472, 0.5
  %v2489 = vmul.f32 %v2473, 0.5
  %v2490 = vmul.f32 %v2474, 0.5
  %v2491 = vmul.f32 %v2475, 0.5
  %v2492 = vmul.f32 %v2302, %v2476
  %v2493 = vmul.f32 %v2305, %v2477
  %v2494 = vmul.f32 %v2310, %v2478
  %v2495 = vmul.f32 %v2313, %v2479
  %v2496 = vmul.f32 %v2318, %v2480
  %v2497 = vmul.f32 %v2321, %v2481
  %v2498 = vmul.f32 %v2326, %v2482
  %v2499 = vmul.f32 %v2329, %v2483
  %v2500 = vmul.f32 %v2334, %v2484
  %v2501 = vmul.f32 %v2337, %v2485
  %v2502 = vmul.f32 %v2342, %v2486
  %v2503 = vmul.f32 %v2345, %v2487
  %v2504 = vmul.f32 %v2350, %v2488
  %v2505 = vmul.f32 %v2353, %v2489
  %v2506 = vmul.f32 %v2358, %v2490
  %v2507 = vmul.f32 %v2361, %v2491
  %v2508 = vpack.c.bf16 %v2493, %v2492
  %v2509 = vpack.c.bf16 %v2495, %v2494
  %v2510 = vpack.c.bf16 %v2497, %v2496
  %v2511 = vpack.c.bf16 %v2499, %v2498
  %v2512 = vpack.c.bf16 %v2501, %v2500
  %v2513 = vpack.c.bf16 %v2503, %v2502
  %v2514 = vpack.c.bf16 %v2505, %v2504
  %v2515 = vpack.c.bf16 %v2507, %v2506
  %2517 = vset.pattern.permute.xlu0 0
  %2518 = vperm.xlu0 %2517, %v212
  %v2519 = vpop.permute.xlu0 %2518
  %2522 = vset.pattern.permute.xlu0 0
  %2523 = vperm.xlu0 %2522, %v213
  %v2524 = vpop.permute.xlu0 %2523
  %2527 = vset.pattern.permute.xlu0 0
  %2528 = vperm.xlu0 %2527, %v214
  %v2529 = vpop.permute.xlu0 %2528
  %2532 = vset.pattern.permute.xlu0 0
  %2533 = vperm.xlu0 %2532, %v215
  %v2534 = vpop.permute.xlu0 %2533
  %v2540 = vunpack.c.l.b16 %v160
  %v2541 = vunpack.c.l.b16 %v161
  %v2542 = vunpack.c.l.b16 %v162
  %v2543 = vunpack.c.l.b16 %v163
  %v2544 = vpack.c.b16 %v2541, %v2540
  %v2545 = vpack.c.b16 %v2543, %v2542
  %2548 = vmatprep.subr.bf16.mxu0 0
  %2549 = vmatpush1.bf16.msra.mxu0 %v2508
  %2550 = vmatprep.subr.bf16.mxu0 0
  %2551 = vmatpush1.bf16.msra.mxu0 %v2509
  %2552 = vmatprep.subr.bf16.mxu0 0
  %2553 = vmatpush1.bf16.msra.mxu0 %v2510
  %2554 = vmatprep.subr.bf16.mxu0 0
  %2555 = vmatpush1.bf16.msra.mxu0 %v2511
  %2556 = vmatprep.subr.bf16.mxu0 0
  %2557 = vmatpush1.bf16.msra.mxu0 %v2512
  %2558 = vmatprep.subr.bf16.mxu0 0
  %2559 = vmatpush1.bf16.msra.mxu0 %v2513
  %2560 = vmatprep.subr.bf16.mxu0 0
  %2561 = vmatpush1.bf16.msra.mxu0 %v2514
  %2562 = vmatprep.subr.bf16.mxu0 0
  %2563 = vmatpush1.bf16.msra.mxu0 %v2515
  %2564 = vmatprep.subr.bf16.mxu0 0
  %2565 = vmatpush1.bf16.msra.mxu0 0
  %2566 = vmatprep.subr.bf16.mxu0 0
  %2567 = vmatpush1.bf16.msra.mxu0 0
  %2568 = vmatprep.subr.bf16.mxu0 0
  %2569 = vmatpush1.bf16.msra.mxu0 0
  %2570 = vmatprep.subr.bf16.mxu0 0
  %2571 = vmatpush1.bf16.msra.mxu0 0
  %2572 = vmatprep.subr.bf16.mxu0 0
  %2573 = vmatpush1.bf16.msra.mxu0 0
  %2574 = vmatprep.subr.bf16.mxu0 0
  %2575 = vmatpush1.bf16.msra.mxu0 0
  %2576 = vmatprep.subr.bf16.mxu0 0
  %2577 = vmatpush1.bf16.msra.mxu0 0
  %2578 = vmatprep.subr.bf16.mxu0 0
  %2579 = vmatpush1.bf16.msra.mxu0 0
  %2580 = vmatprep.mubr.bf16.mxu0 0
  %2581 = vmatmul.mubr.bf16.gmra.mrb[0].mxu0 %v2544
  %v2582 = vpop.f32.mrb[0].mxu0
  %v2583 = vadd.f32 %v2519, %v2582
  %v2584 = vpop.f32.mrb[0].mxu0
  %v2585 = vpop.f32.mrb[0].mxu0
  %v2586 = vadd.f32 %v2524, %v2585
  %v2587 = vpop.f32.mrb[0].mxu0
  %2588 = vmatprep.mubr.bf16.mxu0 0
  %2589 = vmatmul.mubr.bf16.gmra.mrb[0].mxu0 %v2545
  %v2590 = vpop.f32.mrb[0].mxu0
  %v2591 = vadd.f32 %v2529, %v2590
  %v2592 = vpop.f32.mrb[0].mxu0
  %v2593 = vpop.f32.mrb[0].mxu0
  %v2594 = vadd.f32 %v2534, %v2593
  %v2595 = vpop.f32.mrb[0].mxu0
  %2596 = vdwg.mxu0
  %v2597 = vadd.f32 %v2033, %v2583
  %v2598 = vadd.f32 %v2034, %v2586
  %v2599 = vadd.f32 %v2035, %v2591
  %v2600 = vadd.f32 %v2036, %v2594
  %s2601 = scalar_lea.vmem %s5, 128
  %v2602 = vld [vmem:[%s2601] sm:$0xf]
  %v2603 = vld [vmem:[%s2601 + $0x4] sm:$0xf]
  %v2604 = vld [vmem:[%s2601 + $0x8] sm:$0xf]
  %v2605 = vld [vmem:[%s2601 + $0xc] sm:$0xf]
  %v2606 = vld [vmem:[%s2601 + $0x10] sm:$0xf]
  %v2607 = vld [vmem:[%s2601 + $0x14] sm:$0xf]
  %v2608 = vld [vmem:[%s2601 + $0x18] sm:$0xf]
  %v2609 = vld [vmem:[%s2601 + $0x1c] sm:$0xf]
  %v2610 = vld [vmem:[%s2601 + $0x20] sm:$0xf]
  %v2611 = vld [vmem:[%s2601 + $0x24] sm:$0xf]
  %v2612 = vld [vmem:[%s2601 + $0x28] sm:$0xf]
  %v2613 = vld [vmem:[%s2601 + $0x2c] sm:$0xf]
  %v2614 = vld [vmem:[%s2601 + $0x30] sm:$0xf]
  %v2615 = vld [vmem:[%s2601 + $0x34] sm:$0xf]
  %v2616 = vld [vmem:[%s2601 + $0x38] sm:$0xf]
  %v2617 = vld [vmem:[%s2601 + $0x3c] sm:$0xf]
  %v2618 = vld [vmem:[%s2601 + $0x40] sm:$0xf]
  %v2619 = vld [vmem:[%s2601 + $0x44] sm:$0xf]
  %v2620 = vld [vmem:[%s2601 + $0x48] sm:$0xf]
  %v2621 = vld [vmem:[%s2601 + $0x4c] sm:$0xf]
  %v2622 = vld [vmem:[%s2601 + $0x50] sm:$0xf]
  %v2623 = vld [vmem:[%s2601 + $0x54] sm:$0xf]
  %v2624 = vld [vmem:[%s2601 + $0x58] sm:$0xf]
  %v2625 = vld [vmem:[%s2601 + $0x5c] sm:$0xf]
  %v2626 = vld [vmem:[%s2601 + $0x60] sm:$0xf]
  %v2627 = vld [vmem:[%s2601 + $0x64] sm:$0xf]
  %v2628 = vld [vmem:[%s2601 + $0x68] sm:$0xf]
  %v2629 = vld [vmem:[%s2601 + $0x6c] sm:$0xf]
  %v2630 = vld [vmem:[%s2601 + $0x70] sm:$0xf]
  %v2631 = vld [vmem:[%s2601 + $0x74] sm:$0xf]
  %v2632 = vld [vmem:[%s2601 + $0x78] sm:$0xf]
  %v2633 = vld [vmem:[%s2601 + $0x7c] sm:$0xf]
  %s2634 = scalar_lea.vmem %s6, 16
  %v2635 = vld [vmem:[%s2634] sm:$0xf]
  %v2636 = vld [vmem:[%s2634 + $0x4] sm:$0xf]
  %v2637 = vld [vmem:[%s2634 + $0x8] sm:$0xf]
  %v2638 = vld [vmem:[%s2634 + $0xc] sm:$0xf]
  %s2639 = scalar_lea.vmem %s7, 416
  %v2640 = vld [vmem:[%s2639] sm:$0xff]
  %v2641 = vld [vmem:[%s2639 + $0x8] sm:$0xff]
  %v2642 = vld [vmem:[%s2639 + $0x10] sm:$0xff]
  %v2643 = vld [vmem:[%s2639 + $0x18] sm:$0xff]
  %v2644 = vld [vmem:[%s2639 + $0x20] sm:$0xff]
  %v2645 = vld [vmem:[%s2639 + $0x28] sm:$0xff]
  %v2646 = vld [vmem:[%s2639 + $0x30] sm:$0xff]
  %v2647 = vld [vmem:[%s2639 + $0x38] sm:$0xff]
  %v2648 = vld [vmem:[%s2639 + $0x40] sm:$0xff]
  %v2649 = vld [vmem:[%s2639 + $0x48] sm:$0xff]
  %v2650 = vld [vmem:[%s2639 + $0x50] sm:$0xff]
  %v2651 = vld [vmem:[%s2639 + $0x58] sm:$0xff]
  %v2652 = vld [vmem:[%s2639 + $0x60] sm:$0xff]
  %v2653 = vld [vmem:[%s2639 + $0x68] sm:$0xff]
  %v2654 = vld [vmem:[%s2639 + $0x70] sm:$0xff]
  %v2655 = vld [vmem:[%s2639 + $0x78] sm:$0xff]
  %v2656 = vld [vmem:[%s2639 + $0x80] sm:$0xff]
  %v2657 = vld [vmem:[%s2639 + $0x88] sm:$0xff]
  %v2658 = vld [vmem:[%s2639 + $0x90] sm:$0xff]
  %v2659 = vld [vmem:[%s2639 + $0x98] sm:$0xff]
  %v2660 = vld [vmem:[%s2639 + $0xa0] sm:$0xff]
  %v2661 = vld [vmem:[%s2639 + $0xa8] sm:$0xff]
  %v2662 = vld [vmem:[%s2639 + $0xb0] sm:$0xff]
  %v2663 = vld [vmem:[%s2639 + $0xb8] sm:$0xff]
  %v2664 = vld [vmem:[%s2639 + $0xc0] sm:$0xff]
  %v2665 = vld [vmem:[%s2639 + $0xc8] sm:$0xff]
  %v2666 = vld [vmem:[%s2639 + $0xd0] sm:$0xff]
  %v2667 = vld [vmem:[%s2639 + $0xd8] sm:$0xff]
  %v2668 = vld [vmem:[%s2639 + $0xe0] sm:$0xff]
  %v2669 = vld [vmem:[%s2639 + $0xe8] sm:$0xff]
  %v2670 = vld [vmem:[%s2639 + $0xf0] sm:$0xff]
  %v2671 = vld [vmem:[%s2639 + $0xf8] sm:$0xff]
  %v2672 = vld [vmem:[%s2639 + $0x100] sm:$0xff]
  %v2673 = vld [vmem:[%s2639 + $0x108] sm:$0xff]
  %v2674 = vld [vmem:[%s2639 + $0x110] sm:$0xff]
  %v2675 = vld [vmem:[%s2639 + $0x118] sm:$0xff]
  %v2676 = vld [vmem:[%s2639 + $0x120] sm:$0xff]
  %v2677 = vld [vmem:[%s2639 + $0x128] sm:$0xff]
  %v2678 = vld [vmem:[%s2639 + $0x130] sm:$0xff]
  %v2679 = vld [vmem:[%s2639 + $0x138] sm:$0xff]
  %v2680 = vld [vmem:[%s2639 + $0x140] sm:$0xff]
  %v2681 = vld [vmem:[%s2639 + $0x148] sm:$0xff]
  %v2682 = vld [vmem:[%s2639 + $0x150] sm:$0xff]
  %v2683 = vld [vmem:[%s2639 + $0x158] sm:$0xff]
  %v2684 = vld [vmem:[%s2639 + $0x160] sm:$0xff]
  %v2685 = vld [vmem:[%s2639 + $0x168] sm:$0xff]
  %v2686 = vld [vmem:[%s2639 + $0x170] sm:$0xff]
  %v2687 = vld [vmem:[%s2639 + $0x178] sm:$0xff]
  %v2688 = vld [vmem:[%s2639 + $0x180] sm:$0xff]
  %v2689 = vld [vmem:[%s2639 + $0x188] sm:$0xff]
  %v2690 = vld [vmem:[%s2639 + $0x190] sm:$0xff]
  %v2691 = vld [vmem:[%s2639 + $0x198] sm:$0xff]
  %v2692 = vadd.f32 %v2597, %v2598
  %v2693 = vadd.f32 %v2692, %v2599
  %v2694 = vadd.f32 %v2693, %v2600
  %v2695 = vrot.slane %v2694, 4
  %v2696 = vadd.f32 %v2694, %v2695
  %v2697 = vrot.slane %v2696, 2
  %v2698 = vadd.f32 %v2696, %v2697
  %v2699 = vrot.slane %v2698, 1
  %v2700 = vadd.f32 %v2698, %v2699
  %v2701 = vmul.f32 %v2597, %v2597
  %v2702 = vmul.f32 %v2598, %v2598
  %v2703 = vmul.f32 %v2599, %v2599
  %v2704 = vmul.f32 %v2600, %v2600
  %v2705 = vadd.f32 %v2701, %v2702
  %v2706 = vadd.f32 %v2705, %v2703
  %v2707 = vadd.f32 %v2706, %v2704
  %v2708 = vrot.slane %v2707, 4
  %v2709 = vadd.f32 %v2707, %v2708
  %v2710 = vrot.slane %v2709, 2
  %v2711 = vadd.f32 %v2709, %v2710
  %v2712 = vrot.slane %v2711, 1
  %v2713 = vadd.f32 %v2711, %v2712
  %v2714 = vmul.f32 %v2700, 0.03125
  %v2715 = vmul.f32 %v2713, 0.03125
  %v2716 = vmul.f32 %v2714, %v2714
  %v2717 = vsub.f32 %v2715, %v2716
  %v2718 = vsub.f32 %v2597, %v2714
  %v2719 = vsub.f32 %v2598, %v2714
  %v2720 = vsub.f32 %v2599, %v2714
  %v2721 = vsub.f32 %v2600, %v2714
  %v2722 = vadd.f32 %v2717, 1e-06
  %v2723 = vrsqrt.pop %v2722
  %v2724 = vmul.f32 %v2718, %v2723
  %v2725 = vmul.f32 %v2719, %v2723
  %v2726 = vmul.f32 %v2720, %v2723
  %v2727 = vmul.f32 %v2721, %v2723
  %2729 = vset.pattern.permute.xlu0 0
  %2730 = vperm.xlu0 %2729, %v2640
  %v2731 = vpop.permute.xlu0 %2730
  %2734 = vset.pattern.permute.xlu0 0
  %2735 = vperm.xlu0 %2734, %v2641
  %v2736 = vpop.permute.xlu0 %2735
  %2739 = vset.pattern.permute.xlu0 0
  %2740 = vperm.xlu0 %2739, %v2642
  %v2741 = vpop.permute.xlu0 %2740
  %2744 = vset.pattern.permute.xlu0 0
  %2745 = vperm.xlu0 %2744, %v2643
  %v2746 = vpop.permute.xlu0 %2745
  %v2748 = vmul.f32 %v2724, %v2731
  %v2749 = vmul.f32 %v2725, %v2736
  %v2750 = vmul.f32 %v2726, %v2741
  %v2751 = vmul.f32 %v2727, %v2746
  %2753 = vset.pattern.permute.xlu0 0
  %2754 = vperm.xlu0 %2753, %v2644
  %v2755 = vpop.permute.xlu0 %2754
  %2758 = vset.pattern.permute.xlu0 0
  %2759 = vperm.xlu0 %2758, %v2645
  %v2760 = vpop.permute.xlu0 %2759
  %2763 = vset.pattern.permute.xlu0 0
  %2764 = vperm.xlu0 %2763, %v2646
  %v2765 = vpop.permute.xlu0 %2764
  %2768 = vset.pattern.permute.xlu0 0
  %2769 = vperm.xlu0 %2768, %v2647
  %v2770 = vpop.permute.xlu0 %2769
  %v2772 = vadd.f32 %v2748, %v2755
  %v2773 = vadd.f32 %v2749, %v2760
  %v2774 = vadd.f32 %v2750, %v2765
  %v2775 = vadd.f32 %v2751, %v2770
  %v2776 = vpack.c.bf16 %v2773, %v2772
  %v2777 = vpack.c.bf16 %v2775, %v2774
  %2779 = vset.pattern.permute.xlu0 0
  %2780 = vperm.xlu0 %2779, %v2648
  %v2781 = vpop.permute.xlu0 %2780
  %2784 = vset.pattern.permute.xlu0 0
  %2785 = vperm.xlu0 %2784, %v2649
  %v2786 = vpop.permute.xlu0 %2785
  %2789 = vset.pattern.permute.xlu0 0
  %2790 = vperm.xlu0 %2789, %v2650
  %v2791 = vpop.permute.xlu0 %2790
  %2794 = vset.pattern.permute.xlu0 0
  %2795 = vperm.xlu0 %2794, %v2651
  %v2796 = vpop.permute.xlu0 %2795
  %2799 = vset.pattern.permute.xlu0 0
  %2800 = vperm.xlu0 %2799, %v2652
  %v2801 = vpop.permute.xlu0 %2800
  %2804 = vset.pattern.permute.xlu0 0
  %2805 = vperm.xlu0 %2804, %v2653
  %v2806 = vpop.permute.xlu0 %2805
  %2809 = vset.pattern.permute.xlu0 0
  %2810 = vperm.xlu0 %2809, %v2654
  %v2811 = vpop.permute.xlu0 %2810
  %2814 = vset.pattern.permute.xlu0 0
  %2815 = vperm.xlu0 %2814, %v2655
  %v2816 = vpop.permute.xlu0 %2815
  %2819 = vset.pattern.permute.xlu0 0
  %2820 = vperm.xlu0 %2819, %v2656
  %v2821 = vpop.permute.xlu0 %2820
  %2824 = vset.pattern.permute.xlu0 0
  %2825 = vperm.xlu0 %2824, %v2657
  %v2826 = vpop.permute.xlu0 %2825
  %2829 = vset.pattern.permute.xlu0 0
  %2830 = vperm.xlu0 %2829, %v2658
  %v2831 = vpop.permute.xlu0 %2830
  %2834 = vset.pattern.permute.xlu0 0
  %2835 = vperm.xlu0 %2834, %v2659
  %v2836 = vpop.permute.xlu0 %2835
  %v2850 = vunpack.c.l.b16 %v2602
  %v2851 = vunpack.c.l.b16 %v2603
  %v2852 = vunpack.c.l.b16 %v2604
  %v2853 = vunpack.c.l.b16 %v2605
  %v2854 = vunpack.c.l.b16 %v2606
  %v2855 = vunpack.c.l.b16 %v2607
  %v2856 = vunpack.c.l.b16 %v2608
  %v2857 = vunpack.c.l.b16 %v2609
  %v2858 = vunpack.c.l.b16 %v2610
  %v2859 = vunpack.c.l.b16 %v2611
  %v2860 = vunpack.c.l.b16 %v2612
  %v2861 = vunpack.c.l.b16 %v2613
  %v2862 = vpack.c.b16 %v2851, %v2850
  %v2863 = vpack.c.b16 %v2853, %v2852
  %v2864 = vpack.c.b16 %v2855, %v2854
  %v2865 = vpack.c.b16 %v2857, %v2856
  %v2866 = vpack.c.b16 %v2859, %v2858
  %v2867 = vpack.c.b16 %v2861, %v2860
  %v2869 = vsel %vm392, %v2862, 0
  %v2872 = vsel %vm392, %v2863, 0
  %v2875 = vsel %vm392, %v2864, 0
  %v2878 = vsel %vm392, %v2865, 0
  %v2881 = vsel %vm392, %v2866, 0
  %v2884 = vsel %vm392, %v2867, 0
  %2886 = vmatprep.subr.bf16.mxu0 0
  %2887 = vmatpush1.bf16.msra.mxu0 %v2776
  %2888 = vmatprep.subr.bf16.mxu0 0
  %2889 = vmatpush1.bf16.msra.mxu0 %v2777
  %2890 = vmatprep.subr.bf16.mxu0 0
  %2891 = vmatpush1.bf16.msra.mxu0 0
  %2892 = vmatprep.subr.bf16.mxu0 0
  %2893 = vmatpush1.bf16.msra.mxu0 0
  %2894 = vmatprep.subr.bf16.mxu0 0
  %2895 = vmatpush1.bf16.msra.mxu0 0
  %2896 = vmatprep.subr.bf16.mxu0 0
  %2897 = vmatpush1.bf16.msra.mxu0 0
  %2898 = vmatprep.subr.bf16.mxu0 0
  %2899 = vmatpush1.bf16.msra.mxu0 0
  %2900 = vmatprep.subr.bf16.mxu0 0
  %2901 = vmatpush1.bf16.msra.mxu0 0
  %2902 = vmatprep.subr.bf16.mxu0 0
  %2903 = vmatpush1.bf16.msra.mxu0 0
  %2904 = vmatprep.subr.bf16.mxu0 0
  %2905 = vmatpush1.bf16.msra.mxu0 0
  %2906 = vmatprep.subr.bf16.mxu0 0
  %2907 = vmatpush1.bf16.msra.mxu0 0
  %2908 = vmatprep.subr.bf16.mxu0 0
  %2909 = vmatpush1.bf16.msra.mxu0 0
  %2910 = vmatprep.subr.bf16.mxu0 0
  %2911 = vmatpush1.bf16.msra.mxu0 0
  %2912 = vmatprep.subr.bf16.mxu0 0
  %2913 = vmatpush1.bf16.msra.mxu0 0
  %2914 = vmatprep.subr.bf16.mxu0 0
  %2915 = vmatpush1.bf16.msra.mxu0 0
  %2916 = vmatprep.subr.bf16.mxu0 0
  %2917 = vmatpush1.bf16.msra.mxu0 0
  %2918 = vmatprep.mubr.bf16.mxu0 0
  %2919 = vmatmul.mubr.bf16.gmra.mrb[0].mxu0 %v2869
  %v2920 = vpop.f32.mrb[0].mxu0
  %v2921 = vadd.f32 %v2781, %v2920
  %v2922 = vpop.f32.mrb[0].mxu0
  %v2923 = vpop.f32.mrb[0].mxu0
  %v2924 = vadd.f32 %v2786, %v2923
  %v2925 = vpop.f32.mrb[0].mxu0
  %2926 = vmatprep.mubr.bf16.mxu0 0
  %2927 = vmatmul.mubr.bf16.gmra.mrb[0].mxu0 %v2872
  %v2928 = vpop.f32.mrb[0].mxu0
  %v2929 = vadd.f32 %v2791, %v2928
  %v2930 = vpop.f32.mrb[0].mxu0
  %v2931 = vpop.f32.mrb[0].mxu0
  %v2932 = vadd.f32 %v2796, %v2931
  %v2933 = vpop.f32.mrb[0].mxu0
  %2934 = vmatprep.mubr.bf16.mxu0 0
  %2935 = vmatmul.mubr.bf16.gmra.mrb[0].mxu0 %v2875
  %v2936 = vpop.f32.mrb[0].mxu0
  %v2937 = vadd.f32 %v2801, %v2936
  %v2938 = vpop.f32.mrb[0].mxu0
  %v2939 = vpop.f32.mrb[0].mxu0
  %v2940 = vadd.f32 %v2806, %v2939
  %v2941 = vpop.f32.mrb[0].mxu0
  %2942 = vmatprep.mubr.bf16.mxu0 0
  %2943 = vmatmul.mubr.bf16.gmra.mrb[0].mxu0 %v2878
  %v2944 = vpop.f32.mrb[0].mxu0
  %v2945 = vadd.f32 %v2811, %v2944
  %v2946 = vpop.f32.mrb[0].mxu0
  %v2947 = vpop.f32.mrb[0].mxu0
  %v2948 = vadd.f32 %v2816, %v2947
  %v2949 = vpop.f32.mrb[0].mxu0
  %2950 = vmatprep.mubr.bf16.mxu0 0
  %2951 = vmatmul.mubr.bf16.gmra.mrb[0].mxu0 %v2881
  %v2952 = vpop.f32.mrb[0].mxu0
  %v2953 = vadd.f32 %v2821, %v2952
  %v2954 = vpop.f32.mrb[0].mxu0
  %v2955 = vpop.f32.mrb[0].mxu0
  %v2956 = vadd.f32 %v2826, %v2955
  %v2957 = vpop.f32.mrb[0].mxu0
  %2958 = vmatprep.mubr.bf16.mxu0 0
  %2959 = vmatmul.mubr.bf16.gmra.mrb[0].mxu0 %v2884
  %v2960 = vpop.f32.mrb[0].mxu0
  %v2961 = vadd.f32 %v2831, %v2960
  %v2962 = vpop.f32.mrb[0].mxu0
  %v2963 = vpop.f32.mrb[0].mxu0
  %v2964 = vadd.f32 %v2836, %v2963
  %v2965 = vpop.f32.mrb[0].mxu0
  %2966 = vdwg.mxu0
  %2967 = vxpose.xlu0.b32.start [1/16] %v2921, 128
  %2968 = vxpose.xlu0.b32.cont [2/16] 0.0, 128
  %2969 = vxpose.xlu0.b32.cont [3/16] 0.0, 128
  %2970 = vxpose.xlu0.b32.cont [4/16] 0.0, 128
  %2971 = vxpose.xlu0.b32.cont [5/16] 0.0, 128
  %2972 = vxpose.xlu0.b32.cont [6/16] 0.0, 128
  %2973 = vxpose.xlu0.b32.cont [7/16] 0.0, 128
  %2974 = vxpose.xlu0.b32.cont [8/16] 0.0, 128
  %2975 = vxpose.xlu0.b32.cont [9/16] 0.0, 128
  %2976 = vxpose.xlu0.b32.cont [10/16] 0.0, 128
  %2977 = vxpose.xlu0.b32.cont [11/16] 0.0, 128
  %2978 = vxpose.xlu0.b32.cont [12/16] 0.0, 128
  %2979 = vxpose.xlu0.b32.cont [13/16] 0.0, 128
  %2980 = vxpose.xlu0.b32.cont [14/16] 0.0, 128
  %2981 = vxpose.xlu0.b32.cont [15/16] 0.0, 128
  %2982 = vxpose.xlu0.b32.end [16/16] 0.0, 128
  %v2983 = vpop.trf.xlu0
  %v2984 = vpop.trf.xlu0
  %v2985 = vpop.trf.xlu0
  %v2986 = vpop.trf.xlu0
  %v2987 = vpop.trf.xlu0
  %v2988 = vpop.trf.xlu0
  %v2989 = vpop.trf.xlu0
  %v2990 = vpop.trf.xlu0
  %v2991 = vpop.trf.xlu0
  %v2992 = vpop.trf.xlu0
  %v2993 = vpop.trf.xlu0
  %v2994 = vpop.trf.xlu0
  %v2995 = vpop.trf.xlu0
  %v2996 = vpop.trf.xlu0
  %v2997 = vpop.trf.xlu0
  %v2998 = vpop.trf.xlu0
  %2999 = vxpose.xlu0.b32.start [1/16] %v2924, 128
  %3000 = vxpose.xlu0.b32.cont [2/16] 0.0, 128
  %3001 = vxpose.xlu0.b32.cont [3/16] 0.0, 128
  %3002 = vxpose.xlu0.b32.cont [4/16] 0.0, 128
  %3003 = vxpose.xlu0.b32.cont [5/16] 0.0, 128
  %3004 = vxpose.xlu0.b32.cont [6/16] 0.0, 128
  %3005 = vxpose.xlu0.b32.cont [7/16] 0.0, 128
  %3006 = vxpose.xlu0.b32.cont [8/16] 0.0, 128
  %3007 = vxpose.xlu0.b32.cont [9/16] 0.0, 128
  %3008 = vxpose.xlu0.b32.cont [10/16] 0.0, 128
  %3009 = vxpose.xlu0.b32.cont [11/16] 0.0, 128
  %3010 = vxpose.xlu0.b32.cont [12/16] 0.0, 128
  %3011 = vxpose.xlu0.b32.cont [13/16] 0.0, 128
  %3012 = vxpose.xlu0.b32.cont [14/16] 0.0, 128
  %3013 = vxpose.xlu0.b32.cont [15/16] 0.0, 128
  %3014 = vxpose.xlu0.b32.end [16/16] 0.0, 128
  %v3015 = vpop.trf.xlu0
  %v3016 = vpop.trf.xlu0
  %v3017 = vpop.trf.xlu0
  %v3018 = vpop.trf.xlu0
  %v3019 = vpop.trf.xlu0
  %v3020 = vpop.trf.xlu0
  %v3021 = vpop.trf.xlu0
  %v3022 = vpop.trf.xlu0
  %v3023 = vpop.trf.xlu0
  %v3024 = vpop.trf.xlu0
  %v3025 = vpop.trf.xlu0
  %v3026 = vpop.trf.xlu0
  %v3027 = vpop.trf.xlu0
  %v3028 = vpop.trf.xlu0
  %v3029 = vpop.trf.xlu0
  %v3030 = vpop.trf.xlu0
  %3031 = vxpose.xlu0.b32.start [1/16] %v2929, 128
  %3032 = vxpose.xlu0.b32.cont [2/16] 0.0, 128
  %3033 = vxpose.xlu0.b32.cont [3/16] 0.0, 128
  %3034 = vxpose.xlu0.b32.cont [4/16] 0.0, 128
  %3035 = vxpose.xlu0.b32.cont [5/16] 0.0, 128
  %3036 = vxpose.xlu0.b32.cont [6/16] 0.0, 128
  %3037 = vxpose.xlu0.b32.cont [7/16] 0.0, 128
  %3038 = vxpose.xlu0.b32.cont [8/16] 0.0, 128
  %3039 = vxpose.xlu0.b32.cont [9/16] 0.0, 128
  %3040 = vxpose.xlu0.b32.cont [10/16] 0.0, 128
  %3041 = vxpose.xlu0.b32.cont [11/16] 0.0, 128
  %3042 = vxpose.xlu0.b32.cont [12/16] 0.0, 128
  %3043 = vxpose.xlu0.b32.cont [13/16] 0.0, 128
  %3044 = vxpose.xlu0.b32.cont [14/16] 0.0, 128
  %3045 = vxpose.xlu0.b32.cont [15/16] 0.0, 128
  %3046 = vxpose.xlu0.b32.end [16/16] 0.0, 128
  %v3047 = vpop.trf.xlu0
  %v3048 = vpop.trf.xlu0
  %v3049 = vpop.trf.xlu0
  %v3050 = vpop.trf.xlu0
  %v3051 = vpop.trf.xlu0
  %v3052 = vpop.trf.xlu0
  %v3053 = vpop.trf.xlu0
  %v3054 = vpop.trf.xlu0
  %v3055 = vpop.trf.xlu0
  %v3056 = vpop.trf.xlu0
  %v3057 = vpop.trf.xlu0
  %v3058 = vpop.trf.xlu0
  %v3059 = vpop.trf.xlu0
  %v3060 = vpop.trf.xlu0
  %v3061 = vpop.trf.xlu0
  %v3062 = vpop.trf.xlu0
  %3063 = vxpose.xlu0.b32.start [1/16] %v2932, 128
  %3064 = vxpose.xlu0.b32.cont [2/16] 0.0, 128
  %3065 = vxpose.xlu0.b32.cont [3/16] 0.0, 128
  %3066 = vxpose.xlu0.b32.cont [4/16] 0.0, 128
  %3067 = vxpose.xlu0.b32.cont [5/16] 0.0, 128
  %3068 = vxpose.xlu0.b32.cont [6/16] 0.0, 128
  %3069 = vxpose.xlu0.b32.cont [7/16] 0.0, 128
  %3070 = vxpose.xlu0.b32.cont [8/16] 0.0, 128
  %3071 = vxpose.xlu0.b32.cont [9/16] 0.0, 128
  %3072 = vxpose.xlu0.b32.cont [10/16] 0.0, 128
  %3073 = vxpose.xlu0.b32.cont [11/16] 0.0, 128
  %3074 = vxpose.xlu0.b32.cont [12/16] 0.0, 128
  %3075 = vxpose.xlu0.b32.cont [13/16] 0.0, 128
  %3076 = vxpose.xlu0.b32.cont [14/16] 0.0, 128
  %3077 = vxpose.xlu0.b32.cont [15/16] 0.0, 128
  %3078 = vxpose.xlu0.b32.end [16/16] 0.0, 128
  %v3079 = vpop.trf.xlu0
  %v3080 = vpop.trf.xlu0
  %v3081 = vpop.trf.xlu0
  %v3082 = vpop.trf.xlu0
  %v3083 = vpop.trf.xlu0
  %v3084 = vpop.trf.xlu0
  %v3085 = vpop.trf.xlu0
  %v3086 = vpop.trf.xlu0
  %v3087 = vpop.trf.xlu0
  %v3088 = vpop.trf.xlu0
  %v3089 = vpop.trf.xlu0
  %v3090 = vpop.trf.xlu0
  %v3091 = vpop.trf.xlu0
  %v3092 = vpop.trf.xlu0
  %v3093 = vpop.trf.xlu0
  %v3094 = vpop.trf.xlu0
  %v3095 = vpack.c.bf16 %v2984, %v2983
  %v3096 = vpack.c.bf16 %v2986, %v2985
  %v3097 = vpack.c.bf16 %v2988, %v2987
  %v3098 = vpack.c.bf16 %v2990, %v2989
  %v3099 = vpack.c.bf16 %v2992, %v2991
  %v3100 = vpack.c.bf16 %v2994, %v2993
  %v3101 = vpack.c.bf16 %v2996, %v2995
  %v3102 = vpack.c.bf16 %v2998, %v2997
  %v3103 = vpack.c.bf16 %v3016, %v3015
  %v3104 = vpack.c.bf16 %v3018, %v3017
  %v3105 = vpack.c.bf16 %v3020, %v3019
  %v3106 = vpack.c.bf16 %v3022, %v3021
  %v3107 = vpack.c.bf16 %v3024, %v3023
  %v3108 = vpack.c.bf16 %v3026, %v3025
  %v3109 = vpack.c.bf16 %v3028, %v3027
  %v3110 = vpack.c.bf16 %v3030, %v3029
  %v3111 = vpack.c.bf16 %v3048, %v3047
  %v3112 = vpack.c.bf16 %v3050, %v3049
  %v3113 = vpack.c.bf16 %v3052, %v3051
  %v3114 = vpack.c.bf16 %v3054, %v3053
  %v3115 = vpack.c.bf16 %v3056, %v3055
  %v3116 = vpack.c.bf16 %v3058, %v3057
  %v3117 = vpack.c.bf16 %v3060, %v3059
  %v3118 = vpack.c.bf16 %v3062, %v3061
  %v3119 = vpack.c.bf16 %v3080, %v3079
  %v3120 = vpack.c.bf16 %v3082, %v3081
  %v3121 = vpack.c.bf16 %v3084, %v3083
  %v3122 = vpack.c.bf16 %v3086, %v3085
  %v3123 = vpack.c.bf16 %v3088, %v3087
  %v3124 = vpack.c.bf16 %v3090, %v3089
  %v3125 = vpack.c.bf16 %v3092, %v3091
  %v3126 = vpack.c.bf16 %v3094, %v3093
  %v3127 = vpack.c.bf16 %v2937, %v2937
  %v3128 = vpack.c.bf16 %v2940, %v2940
  %v3129 = vpack.c.bf16 %v2945, %v2945
  %v3130 = vpack.c.bf16 %v2948, %v2948
  %v3131 = vld [vmem:[%s8] sm:$0xff]
  %v3132 = vld [vmem:[%s8 + $0x8] sm:$0xff]
  %v3133 = vld [vmem:[%s8 + $0x10] sm:$0xff]
  %v3134 = vld [vmem:[%s8 + $0x18] sm:$0xff]
  %v3135 = vld [vmem:[%s8 + $0x20] sm:$0xff]
  %v3136 = vld [vmem:[%s8 + $0x28] sm:$0xff]
  %v3137 = vld [vmem:[%s8 + $0x30] sm:$0xff]
  %v3138 = vld [vmem:[%s8 + $0x38] sm:$0xff]
  %v3139 = vld [vmem:[%s8 + $0x40] sm:$0xff]
  %v3140 = vld [vmem:[%s8 + $0x48] sm:$0xff]
  %v3141 = vld [vmem:[%s8 + $0x50] sm:$0xff]
  %v3142 = vld [vmem:[%s8 + $0x58] sm:$0xff]
  %v3143 = vld [vmem:[%s8 + $0x60] sm:$0xff]
  %v3144 = vld [vmem:[%s8 + $0x68] sm:$0xff]
  %v3145 = vld [vmem:[%s8 + $0x70] sm:$0xff]
  %v3146 = vld [vmem:[%s8 + $0x78] sm:$0xff]
  %v3148 = vsel %vm672, %v3095, 0
  %v3151 = vsel %vm672, %v3096, 0
  %v3154 = vsel %vm672, %v3097, 0
  %v3157 = vsel %vm672, %v3098, 0
  %v3160 = vsel %vm672, %v3099, 0
  %v3163 = vsel %vm672, %v3100, 0
  %v3166 = vsel %vm672, %v3101, 0
  %v3169 = vsel %vm672, %v3102, 0
  %v3172 = vsel %vm697, %v3127, 0
  %3174 = vmatprep.subr.bf16.mxu0 0
  %3175 = vmatpush1.bf16.msra.mxu0 %v3172
  %3176 = vmatprep.subr.bf16.mxu0 0
  %3177 = vmatpush1.bf16.msra.mxu0 0
  %3178 = vmatprep.subr.bf16.mxu0 0
  %3179 = vmatpush1.bf16.msra.mxu0 0
  %3180 = vmatprep.subr.bf16.mxu0 0
  %3181 = vmatpush1.bf16.msra.mxu0 0
  %3182 = vmatprep.subr.bf16.mxu0 0
  %3183 = vmatpush1.bf16.msra.mxu0 0
  %3184 = vmatprep.subr.bf16.mxu0 0
  %3185 = vmatpush1.bf16.msra.mxu0 0
  %3186 = vmatprep.subr.bf16.mxu0 0
  %3187 = vmatpush1.bf16.msra.mxu0 0
  %3188 = vmatprep.subr.bf16.mxu0 0
  %3189 = vmatpush1.bf16.msra.mxu0 0
  %3190 = vmatprep.subr.bf16.mxu0 0
  %3191 = vmatpush1.bf16.msra.mxu0 0
  %3192 = vmatprep.subr.bf16.mxu0 0
  %3193 = vmatpush1.bf16.msra.mxu0 0
  %3194 = vmatprep.subr.bf16.mxu0 0
  %3195 = vmatpush1.bf16.msra.mxu0 0
  %3196 = vmatprep.subr.bf16.mxu0 0
  %3197 = vmatpush1.bf16.msra.mxu0 0
  %3198 = vmatprep.subr.bf16.mxu0 0
  %3199 = vmatpush1.bf16.msra.mxu0 0
  %3200 = vmatprep.subr.bf16.mxu0 0
  %3201 = vmatpush1.bf16.msra.mxu0 0
  %3202 = vmatprep.subr.bf16.mxu0 0
  %3203 = vmatpush1.bf16.msra.mxu0 0
  %3204 = vmatprep.subr.bf16.mxu0 0
  %3205 = vmatpush1.bf16.msra.mxu0 0
  %3206 = vmatprep.mubr.bf16.mxu0 0
  %3207 = vmatmul.mubr.bf16.gmra.mrb[0].mxu0 %v3148
  %v3208 = vpop.f32.mrb[0].mxu0
  %v3209 = vadd.f32 %v3131, %v3208
  %v3210 = vpop.f32.mrb[0].mxu0
  %v3211 = vpop.f32.mrb[0].mxu0
  %v3212 = vadd.f32 %v3132, %v3211
  %v3213 = vpop.f32.mrb[0].mxu0
  %3214 = vmatprep.mubr.bf16.mxu0 0
  %3215 = vmatmul.mubr.bf16.gmra.mrb[0].mxu0 %v3151
  %v3216 = vpop.f32.mrb[0].mxu0
  %v3217 = vadd.f32 %v3133, %v3216
  %v3218 = vpop.f32.mrb[0].mxu0
  %v3219 = vpop.f32.mrb[0].mxu0
  %v3220 = vadd.f32 %v3134, %v3219
  %v3221 = vpop.f32.mrb[0].mxu0
  %3222 = vmatprep.mubr.bf16.mxu0 0
  %3223 = vmatmul.mubr.bf16.gmra.mrb[0].mxu0 %v3154
  %v3224 = vpop.f32.mrb[0].mxu0
  %v3225 = vadd.f32 %v3135, %v3224
  %v3226 = vpop.f32.mrb[0].mxu0
  %v3227 = vpop.f32.mrb[0].mxu0
  %v3228 = vadd.f32 %v3136, %v3227
  %v3229 = vpop.f32.mrb[0].mxu0
  %3230 = vmatprep.mubr.bf16.mxu0 0
  %3231 = vmatmul.mubr.bf16.gmra.mrb[0].mxu0 %v3157
  %v3232 = vpop.f32.mrb[0].mxu0
  %v3233 = vadd.f32 %v3137, %v3232
  %v3234 = vpop.f32.mrb[0].mxu0
  %v3235 = vpop.f32.mrb[0].mxu0
  %v3236 = vadd.f32 %v3138, %v3235
  %v3237 = vpop.f32.mrb[0].mxu0
  %3238 = vmatprep.mubr.bf16.mxu0 0
  %3239 = vmatmul.mubr.bf16.gmra.mrb[0].mxu0 %v3160
  %v3240 = vpop.f32.mrb[0].mxu0
  %v3241 = vadd.f32 %v3139, %v3240
  %v3242 = vpop.f32.mrb[0].mxu0
  %v3243 = vpop.f32.mrb[0].mxu0
  %v3244 = vadd.f32 %v3140, %v3243
  %v3245 = vpop.f32.mrb[0].mxu0
  %3246 = vmatprep.mubr.bf16.mxu0 0
  %3247 = vmatmul.mubr.bf16.gmra.mrb[0].mxu0 %v3163
  %v3248 = vpop.f32.mrb[0].mxu0
  %v3249 = vadd.f32 %v3141, %v3248
  %v3250 = vpop.f32.mrb[0].mxu0
  %v3251 = vpop.f32.mrb[0].mxu0
  %v3252 = vadd.f32 %v3142, %v3251
  %v3253 = vpop.f32.mrb[0].mxu0
  %3254 = vmatprep.mubr.bf16.mxu0 0
  %3255 = vmatmul.mubr.bf16.gmra.mrb[0].mxu0 %v3166
  %v3256 = vpop.f32.mrb[0].mxu0
  %v3257 = vadd.f32 %v3143, %v3256
  %v3258 = vpop.f32.mrb[0].mxu0
  %v3259 = vpop.f32.mrb[0].mxu0
  %v3260 = vadd.f32 %v3144, %v3259
  %v3261 = vpop.f32.mrb[0].mxu0
  %3262 = vmatprep.mubr.bf16.mxu0 0
  %3263 = vmatmul.mubr.bf16.gmra.mrb[0].mxu0 %v3169
  %v3264 = vpop.f32.mrb[0].mxu0
  %v3265 = vadd.f32 %v3145, %v3264
  %v3266 = vpop.f32.mrb[0].mxu0
  %v3267 = vpop.f32.mrb[0].mxu0
  %v3268 = vadd.f32 %v3146, %v3267
  %v3269 = vpop.f32.mrb[0].mxu0
  %3270 = vdwg.mxu0
  %v3272 = vsel %vm672, %v3103, 0
  %v3275 = vsel %vm672, %v3104, 0
  %v3278 = vsel %vm672, %v3105, 0
  %v3281 = vsel %vm672, %v3106, 0
  %v3284 = vsel %vm672, %v3107, 0
  %v3287 = vsel %vm672, %v3108, 0
  %v3290 = vsel %vm672, %v3109, 0
  %v3293 = vsel %vm672, %v3110, 0
  %v3296 = vsel %vm697, %v3128, 0
  %3298 = vmatprep.subr.bf16.mxu0 0
  %3299 = vmatpush1.bf16.msra.mxu0 %v3296
  %3300 = vmatprep.subr.bf16.mxu0 0
  %3301 = vmatpush1.bf16.msra.mxu0 0
  %3302 = vmatprep.subr.bf16.mxu0 0
  %3303 = vmatpush1.bf16.msra.mxu0 0
  %3304 = vmatprep.subr.bf16.mxu0 0
  %3305 = vmatpush1.bf16.msra.mxu0 0
  %3306 = vmatprep.subr.bf16.mxu0 0
  %3307 = vmatpush1.bf16.msra.mxu0 0
  %3308 = vmatprep.subr.bf16.mxu0 0
  %3309 = vmatpush1.bf16.msra.mxu0 0
  %3310 = vmatprep.subr.bf16.mxu0 0
  %3311 = vmatpush1.bf16.msra.mxu0 0
  %3312 = vmatprep.subr.bf16.mxu0 0
  %3313 = vmatpush1.bf16.msra.mxu0 0
  %3314 = vmatprep.subr.bf16.mxu0 0
  %3315 = vmatpush1.bf16.msra.mxu0 0
  %3316 = vmatprep.subr.bf16.mxu0 0
  %3317 = vmatpush1.bf16.msra.mxu0 0
  %3318 = vmatprep.subr.bf16.mxu0 0
  %3319 = vmatpush1.bf16.msra.mxu0 0
  %3320 = vmatprep.subr.bf16.mxu0 0
  %3321 = vmatpush1.bf16.msra.mxu0 0
  %3322 = vmatprep.subr.bf16.mxu0 0
  %3323 = vmatpush1.bf16.msra.mxu0 0
  %3324 = vmatprep.subr.bf16.mxu0 0
  %3325 = vmatpush1.bf16.msra.mxu0 0
  %3326 = vmatprep.subr.bf16.mxu0 0
  %3327 = vmatpush1.bf16.msra.mxu0 0
  %3328 = vmatprep.subr.bf16.mxu0 0
  %3329 = vmatpush1.bf16.msra.mxu0 0
  %3330 = vmatprep.mubr.bf16.mxu0 0
  %3331 = vmatmul.mubr.bf16.gmra.mrb[0].mxu0 %v3272
  %v3332 = vpop.f32.mrb[0].mxu0
  %v3333 = vadd.f32 %v3131, %v3332
  %v3334 = vpop.f32.mrb[0].mxu0
  %v3335 = vpop.f32.mrb[0].mxu0
  %v3336 = vadd.f32 %v3132, %v3335
  %v3337 = vpop.f32.mrb[0].mxu0
  %3338 = vmatprep.mubr.bf16.mxu0 0
  %3339 = vmatmul.mubr.bf16.gmra.mrb[0].mxu0 %v3275
  %v3340 = vpop.f32.mrb[0].mxu0
  %v3341 = vadd.f32 %v3133, %v3340
  %v3342 = vpop.f32.mrb[0].mxu0
  %v3343 = vpop.f32.mrb[0].mxu0
  %v3344 = vadd.f32 %v3134, %v3343
  %v3345 = vpop.f32.mrb[0].mxu0
  %3346 = vmatprep.mubr.bf16.mxu0 0
  %3347 = vmatmul.mubr.bf16.gmra.mrb[0].mxu0 %v3278
  %v3348 = vpop.f32.mrb[0].mxu0
  %v3349 = vadd.f32 %v3135, %v3348
  %v3350 = vpop.f32.mrb[0].mxu0
  %v3351 = vpop.f32.mrb[0].mxu0
  %v3352 = vadd.f32 %v3136, %v3351
  %v3353 = vpop.f32.mrb[0].mxu0
  %3354 = vmatprep.mubr.bf16.mxu0 0
  %3355 = vmatmul.mubr.bf16.gmra.mrb[0].mxu0 %v3281
  %v3356 = vpop.f32.mrb[0].mxu0
  %v3357 = vadd.f32 %v3137, %v3356
  %v3358 = vpop.f32.mrb[0].mxu0
  %v3359 = vpop.f32.mrb[0].mxu0
  %v3360 = vadd.f32 %v3138, %v3359
  %v3361 = vpop.f32.mrb[0].mxu0
  %3362 = vmatprep.mubr.bf16.mxu0 0
  %3363 = vmatmul.mubr.bf16.gmra.mrb[0].mxu0 %v3284
  %v3364 = vpop.f32.mrb[0].mxu0
  %v3365 = vadd.f32 %v3139, %v3364
  %v3366 = vpop.f32.mrb[0].mxu0
  %v3367 = vpop.f32.mrb[0].mxu0
  %v3368 = vadd.f32 %v3140, %v3367
  %v3369 = vpop.f32.mrb[0].mxu0
  %3370 = vmatprep.mubr.bf16.mxu0 0
  %3371 = vmatmul.mubr.bf16.gmra.mrb[0].mxu0 %v3287
  %v3372 = vpop.f32.mrb[0].mxu0
  %v3373 = vadd.f32 %v3141, %v3372
  %v3374 = vpop.f32.mrb[0].mxu0
  %v3375 = vpop.f32.mrb[0].mxu0
  %v3376 = vadd.f32 %v3142, %v3375
  %v3377 = vpop.f32.mrb[0].mxu0
  %3378 = vmatprep.mubr.bf16.mxu0 0
  %3379 = vmatmul.mubr.bf16.gmra.mrb[0].mxu0 %v3290
  %v3380 = vpop.f32.mrb[0].mxu0
  %v3381 = vadd.f32 %v3143, %v3380
  %v3382 = vpop.f32.mrb[0].mxu0
  %v3383 = vpop.f32.mrb[0].mxu0
  %v3384 = vadd.f32 %v3144, %v3383
  %v3385 = vpop.f32.mrb[0].mxu0
  %3386 = vmatprep.mubr.bf16.mxu0 0
  %3387 = vmatmul.mubr.bf16.gmra.mrb[0].mxu0 %v3293
  %v3388 = vpop.f32.mrb[0].mxu0
  %v3389 = vadd.f32 %v3145, %v3388
  %v3390 = vpop.f32.mrb[0].mxu0
  %v3391 = vpop.f32.mrb[0].mxu0
  %v3392 = vadd.f32 %v3146, %v3391
  %v3393 = vpop.f32.mrb[0].mxu0
  %3394 = vdwg.mxu0
  %v3396 = vsel %vm672, %v3111, 0
  %v3399 = vsel %vm672, %v3112, 0
  %v3402 = vsel %vm672, %v3113, 0
  %v3405 = vsel %vm672, %v3114, 0
  %v3408 = vsel %vm672, %v3115, 0
  %v3411 = vsel %vm672, %v3116, 0
  %v3414 = vsel %vm672, %v3117, 0
  %v3417 = vsel %vm672, %v3118, 0
  %v3420 = vsel %vm697, %v3129, 0
  %3422 = vmatprep.subr.bf16.mxu0 0
  %3423 = vmatpush1.bf16.msra.mxu0 %v3420
  %3424 = vmatprep.subr.bf16.mxu0 0
  %3425 = vmatpush1.bf16.msra.mxu0 0
  %3426 = vmatprep.subr.bf16.mxu0 0
  %3427 = vmatpush1.bf16.msra.mxu0 0
  %3428 = vmatprep.subr.bf16.mxu0 0
  %3429 = vmatpush1.bf16.msra.mxu0 0
  %3430 = vmatprep.subr.bf16.mxu0 0
  %3431 = vmatpush1.bf16.msra.mxu0 0
  %3432 = vmatprep.subr.bf16.mxu0 0
  %3433 = vmatpush1.bf16.msra.mxu0 0
  %3434 = vmatprep.subr.bf16.mxu0 0
  %3435 = vmatpush1.bf16.msra.mxu0 0
  %3436 = vmatprep.subr.bf16.mxu0 0
  %3437 = vmatpush1.bf16.msra.mxu0 0
  %3438 = vmatprep.subr.bf16.mxu0 0
  %3439 = vmatpush1.bf16.msra.mxu0 0
  %3440 = vmatprep.subr.bf16.mxu0 0
  %3441 = vmatpush1.bf16.msra.mxu0 0
  %3442 = vmatprep.subr.bf16.mxu0 0
  %3443 = vmatpush1.bf16.msra.mxu0 0
  %3444 = vmatprep.subr.bf16.mxu0 0
  %3445 = vmatpush1.bf16.msra.mxu0 0
  %3446 = vmatprep.subr.bf16.mxu0 0
  %3447 = vmatpush1.bf16.msra.mxu0 0
  %3448 = vmatprep.subr.bf16.mxu0 0
  %3449 = vmatpush1.bf16.msra.mxu0 0
  %3450 = vmatprep.subr.bf16.mxu0 0
  %3451 = vmatpush1.bf16.msra.mxu0 0
  %3452 = vmatprep.subr.bf16.mxu0 0
  %3453 = vmatpush1.bf16.msra.mxu0 0
  %3454 = vmatprep.mubr.bf16.mxu0 0
  %3455 = vmatmul.mubr.bf16.gmra.mrb[0].mxu0 %v3396
  %v3456 = vpop.f32.mrb[0].mxu0
  %v3457 = vadd.f32 %v3131, %v3456
  %v3458 = vpop.f32.mrb[0].mxu0
  %v3459 = vpop.f32.mrb[0].mxu0
  %v3460 = vadd.f32 %v3132, %v3459
  %v3461 = vpop.f32.mrb[0].mxu0
  %3462 = vmatprep.mubr.bf16.mxu0 0
  %3463 = vmatmul.mubr.bf16.gmra.mrb[0].mxu0 %v3399
  %v3464 = vpop.f32.mrb[0].mxu0
  %v3465 = vadd.f32 %v3133, %v3464
  %v3466 = vpop.f32.mrb[0].mxu0
  %v3467 = vpop.f32.mrb[0].mxu0
  %v3468 = vadd.f32 %v3134, %v3467
  %v3469 = vpop.f32.mrb[0].mxu0
  %3470 = vmatprep.mubr.bf16.mxu0 0
  %3471 = vmatmul.mubr.bf16.gmra.mrb[0].mxu0 %v3402
  %v3472 = vpop.f32.mrb[0].mxu0
  %v3473 = vadd.f32 %v3135, %v3472
  %v3474 = vpop.f32.mrb[0].mxu0
  %v3475 = vpop.f32.mrb[0].mxu0
  %v3476 = vadd.f32 %v3136, %v3475
  %v3477 = vpop.f32.mrb[0].mxu0
  %3478 = vmatprep.mubr.bf16.mxu0 0
  %3479 = vmatmul.mubr.bf16.gmra.mrb[0].mxu0 %v3405
  %v3480 = vpop.f32.mrb[0].mxu0
  %v3481 = vadd.f32 %v3137, %v3480
  %v3482 = vpop.f32.mrb[0].mxu0
  %v3483 = vpop.f32.mrb[0].mxu0
  %v3484 = vadd.f32 %v3138, %v3483
  %v3485 = vpop.f32.mrb[0].mxu0
  %3486 = vmatprep.mubr.bf16.mxu0 0
  %3487 = vmatmul.mubr.bf16.gmra.mrb[0].mxu0 %v3408
  %v3488 = vpop.f32.mrb[0].mxu0
  %v3489 = vadd.f32 %v3139, %v3488
  %v3490 = vpop.f32.mrb[0].mxu0
  %v3491 = vpop.f32.mrb[0].mxu0
  %v3492 = vadd.f32 %v3140, %v3491
  %v3493 = vpop.f32.mrb[0].mxu0
  %3494 = vmatprep.mubr.bf16.mxu0 0
  %3495 = vmatmul.mubr.bf16.gmra.mrb[0].mxu0 %v3411
  %v3496 = vpop.f32.mrb[0].mxu0
  %v3497 = vadd.f32 %v3141, %v3496
  %v3498 = vpop.f32.mrb[0].mxu0
  %v3499 = vpop.f32.mrb[0].mxu0
  %v3500 = vadd.f32 %v3142, %v3499
  %v3501 = vpop.f32.mrb[0].mxu0
  %3502 = vmatprep.mubr.bf16.mxu0 0
  %3503 = vmatmul.mubr.bf16.gmra.mrb[0].mxu0 %v3414
  %v3504 = vpop.f32.mrb[0].mxu0
  %v3505 = vadd.f32 %v3143, %v3504
  %v3506 = vpop.f32.mrb[0].mxu0
  %v3507 = vpop.f32.mrb[0].mxu0
  %v3508 = vadd.f32 %v3144, %v3507
  %v3509 = vpop.f32.mrb[0].mxu0
  %3510 = vmatprep.mubr.bf16.mxu0 0
  %3511 = vmatmul.mubr.bf16.gmra.mrb[0].mxu0 %v3417
  %v3512 = vpop.f32.mrb[0].mxu0
  %v3513 = vadd.f32 %v3145, %v3512
  %v3514 = vpop.f32.mrb[0].mxu0
  %v3515 = vpop.f32.mrb[0].mxu0
  %v3516 = vadd.f32 %v3146, %v3515
  %v3517 = vpop.f32.mrb[0].mxu0
  %3518 = vdwg.mxu0
  %v3520 = vsel %vm672, %v3119, 0
  %v3523 = vsel %vm672, %v3120, 0
  %v3526 = vsel %vm672, %v3121, 0
  %v3529 = vsel %vm672, %v3122, 0
  %v3532 = vsel %vm672, %v3123, 0
  %v3535 = vsel %vm672, %v3124, 0
  %v3538 = vsel %vm672, %v3125, 0
  %v3541 = vsel %vm672, %v3126, 0
  %v3544 = vsel %vm697, %v3130, 0
  %3546 = vmatprep.subr.bf16.mxu0 0
  %3547 = vmatpush1.bf16.msra.mxu0 %v3544
  %3548 = vmatprep.subr.bf16.mxu0 0
  %3549 = vmatpush1.bf16.msra.mxu0 0
  %3550 = vmatprep.subr.bf16.mxu0 0
  %3551 = vmatpush1.bf16.msra.mxu0 0
  %3552 = vmatprep.subr.bf16.mxu0 0
  %3553 = vmatpush1.bf16.msra.mxu0 0
  %3554 = vmatprep.subr.bf16.mxu0 0
  %3555 = vmatpush1.bf16.msra.mxu0 0
  %3556 = vmatprep.subr.bf16.mxu0 0
  %3557 = vmatpush1.bf16.msra.mxu0 0
  %3558 = vmatprep.subr.bf16.mxu0 0
  %3559 = vmatpush1.bf16.msra.mxu0 0
  %3560 = vmatprep.subr.bf16.mxu0 0
  %3561 = vmatpush1.bf16.msra.mxu0 0
  %3562 = vmatprep.subr.bf16.mxu0 0
  %3563 = vmatpush1.bf16.msra.mxu0 0
  %3564 = vmatprep.subr.bf16.mxu0 0
  %3565 = vmatpush1.bf16.msra.mxu0 0
  %3566 = vmatprep.subr.bf16.mxu0 0
  %3567 = vmatpush1.bf16.msra.mxu0 0
  %3568 = vmatprep.subr.bf16.mxu0 0
  %3569 = vmatpush1.bf16.msra.mxu0 0
  %3570 = vmatprep.subr.bf16.mxu0 0
  %3571 = vmatpush1.bf16.msra.mxu0 0
  %3572 = vmatprep.subr.bf16.mxu0 0
  %3573 = vmatpush1.bf16.msra.mxu0 0
  %3574 = vmatprep.subr.bf16.mxu0 0
  %3575 = vmatpush1.bf16.msra.mxu0 0
  %3576 = vmatprep.subr.bf16.mxu0 0
  %3577 = vmatpush1.bf16.msra.mxu0 0
  %3578 = vmatprep.mubr.bf16.mxu0 0
  %3579 = vmatmul.mubr.bf16.gmra.mrb[0].mxu0 %v3520
  %v3580 = vpop.f32.mrb[0].mxu0
  %v3581 = vadd.f32 %v3131, %v3580
  %v3582 = vpop.f32.mrb[0].mxu0
  %v3583 = vpop.f32.mrb[0].mxu0
  %v3584 = vadd.f32 %v3132, %v3583
  %v3585 = vpop.f32.mrb[0].mxu0
  %3586 = vmatprep.mubr.bf16.mxu0 0
  %3587 = vmatmul.mubr.bf16.gmra.mrb[0].mxu0 %v3523
  %v3588 = vpop.f32.mrb[0].mxu0
  %v3589 = vadd.f32 %v3133, %v3588
  %v3590 = vpop.f32.mrb[0].mxu0
  %v3591 = vpop.f32.mrb[0].mxu0
  %v3592 = vadd.f32 %v3134, %v3591
  %v3593 = vpop.f32.mrb[0].mxu0
  %3594 = vmatprep.mubr.bf16.mxu0 0
  %3595 = vmatmul.mubr.bf16.gmra.mrb[0].mxu0 %v3526
  %v3596 = vpop.f32.mrb[0].mxu0
  %v3597 = vadd.f32 %v3135, %v3596
  %v3598 = vpop.f32.mrb[0].mxu0
  %v3599 = vpop.f32.mrb[0].mxu0
  %v3600 = vadd.f32 %v3136, %v3599
  %v3601 = vpop.f32.mrb[0].mxu0
  %3602 = vmatprep.mubr.bf16.mxu0 0
  %3603 = vmatmul.mubr.bf16.gmra.mrb[0].mxu0 %v3529
  %v3604 = vpop.f32.mrb[0].mxu0
  %v3605 = vadd.f32 %v3137, %v3604
  %v3606 = vpop.f32.mrb[0].mxu0
  %v3607 = vpop.f32.mrb[0].mxu0
  %v3608 = vadd.f32 %v3138, %v3607
  %v3609 = vpop.f32.mrb[0].mxu0
  %3610 = vmatprep.mubr.bf16.mxu0 0
  %3611 = vmatmul.mubr.bf16.gmra.mrb[0].mxu0 %v3532
  %v3612 = vpop.f32.mrb[0].mxu0
  %v3613 = vadd.f32 %v3139, %v3612
  %v3614 = vpop.f32.mrb[0].mxu0
  %v3615 = vpop.f32.mrb[0].mxu0
  %v3616 = vadd.f32 %v3140, %v3615
  %v3617 = vpop.f32.mrb[0].mxu0
  %3618 = vmatprep.mubr.bf16.mxu0 0
  %3619 = vmatmul.mubr.bf16.gmra.mrb[0].mxu0 %v3535
  %v3620 = vpop.f32.mrb[0].mxu0
  %v3621 = vadd.f32 %v3141, %v3620
  %v3622 = vpop.f32.mrb[0].mxu0
  %v3623 = vpop.f32.mrb[0].mxu0
  %v3624 = vadd.f32 %v3142, %v3623
  %v3625 = vpop.f32.mrb[0].mxu0
  %3626 = vmatprep.mubr.bf16.mxu0 0
  %3627 = vmatmul.mubr.bf16.gmra.mrb[0].mxu0 %v3538
  %v3628 = vpop.f32.mrb[0].mxu0
  %v3629 = vadd.f32 %v3143, %v3628
  %v3630 = vpop.f32.mrb[0].mxu0
  %v3631 = vpop.f32.mrb[0].mxu0
  %v3632 = vadd.f32 %v3144, %v3631
  %v3633 = vpop.f32.mrb[0].mxu0
  %3634 = vmatprep.mubr.bf16.mxu0 0
  %3635 = vmatmul.mubr.bf16.gmra.mrb[0].mxu0 %v3541
  %v3636 = vpop.f32.mrb[0].mxu0
  %v3637 = vadd.f32 %v3145, %v3636
  %v3638 = vpop.f32.mrb[0].mxu0
  %v3639 = vpop.f32.mrb[0].mxu0
  %v3640 = vadd.f32 %v3146, %v3639
  %v3641 = vpop.f32.mrb[0].mxu0
  %3642 = vdwg.mxu0
  %3643 = vmax.xlane.f32.xlu0 %v3209
  %v3644 = vpop.xlane.xlu0 %3643
  %3645 = vmax.xlane.f32.xlu0 %v3212
  %v3646 = vpop.xlane.xlu0 %3645
  %3647 = vmax.xlane.f32.xlu0 %v3217
  %v3648 = vpop.xlane.xlu0 %3647
  %3649 = vmax.xlane.f32.xlu0 %v3220
  %v3650 = vpop.xlane.xlu0 %3649
  %3651 = vmax.xlane.f32.xlu0 %v3225
  %v3652 = vpop.xlane.xlu0 %3651
  %3653 = vmax.xlane.f32.xlu0 %v3228
  %v3654 = vpop.xlane.xlu0 %3653
  %3655 = vmax.xlane.f32.xlu0 %v3233
  %v3656 = vpop.xlane.xlu0 %3655
  %3657 = vmax.xlane.f32.xlu0 %v3236
  %v3658 = vpop.xlane.xlu0 %3657
  %3659 = vmax.xlane.f32.xlu0 %v3241
  %v3660 = vpop.xlane.xlu0 %3659
  %3661 = vmax.xlane.f32.xlu0 %v3244
  %v3662 = vpop.xlane.xlu0 %3661
  %3663 = vmax.xlane.f32.xlu0 %v3249
  %v3664 = vpop.xlane.xlu0 %3663
  %3665 = vmax.xlane.f32.xlu0 %v3252
  %v3666 = vpop.xlane.xlu0 %3665
  %3667 = vmax.xlane.f32.xlu0 %v3257
  %v3668 = vpop.xlane.xlu0 %3667
  %3669 = vmax.xlane.f32.xlu0 %v3260
  %v3670 = vpop.xlane.xlu0 %3669
  %3671 = vmax.xlane.f32.xlu0 %v3265
  %v3672 = vpop.xlane.xlu0 %3671
  %3673 = vmax.xlane.f32.xlu0 %v3268
  %v3674 = vpop.xlane.xlu0 %3673
  %3675 = vmax.xlane.f32.xlu0 %v3333
  %v3676 = vpop.xlane.xlu0 %3675
  %3677 = vmax.xlane.f32.xlu0 %v3336
  %v3678 = vpop.xlane.xlu0 %3677
  %3679 = vmax.xlane.f32.xlu0 %v3341
  %v3680 = vpop.xlane.xlu0 %3679
  %3681 = vmax.xlane.f32.xlu0 %v3344
  %v3682 = vpop.xlane.xlu0 %3681
  %3683 = vmax.xlane.f32.xlu0 %v3349
  %v3684 = vpop.xlane.xlu0 %3683
  %3685 = vmax.xlane.f32.xlu0 %v3352
  %v3686 = vpop.xlane.xlu0 %3685
  %3687 = vmax.xlane.f32.xlu0 %v3357
  %v3688 = vpop.xlane.xlu0 %3687
  %3689 = vmax.xlane.f32.xlu0 %v3360
  %v3690 = vpop.xlane.xlu0 %3689
  %3691 = vmax.xlane.f32.xlu0 %v3365
  %v3692 = vpop.xlane.xlu0 %3691
  %3693 = vmax.xlane.f32.xlu0 %v3368
  %v3694 = vpop.xlane.xlu0 %3693
  %3695 = vmax.xlane.f32.xlu0 %v3373
  %v3696 = vpop.xlane.xlu0 %3695
  %3697 = vmax.xlane.f32.xlu0 %v3376
  %v3698 = vpop.xlane.xlu0 %3697
  %3699 = vmax.xlane.f32.xlu0 %v3381
  %v3700 = vpop.xlane.xlu0 %3699
  %3701 = vmax.xlane.f32.xlu0 %v3384
  %v3702 = vpop.xlane.xlu0 %3701
  %3703 = vmax.xlane.f32.xlu0 %v3389
  %v3704 = vpop.xlane.xlu0 %3703
  %3705 = vmax.xlane.f32.xlu0 %v3392
  %v3706 = vpop.xlane.xlu0 %3705
  %3707 = vmax.xlane.f32.xlu0 %v3457
  %v3708 = vpop.xlane.xlu0 %3707
  %3709 = vmax.xlane.f32.xlu0 %v3460
  %v3710 = vpop.xlane.xlu0 %3709
  %3711 = vmax.xlane.f32.xlu0 %v3465
  %v3712 = vpop.xlane.xlu0 %3711
  %3713 = vmax.xlane.f32.xlu0 %v3468
  %v3714 = vpop.xlane.xlu0 %3713
  %3715 = vmax.xlane.f32.xlu0 %v3473
  %v3716 = vpop.xlane.xlu0 %3715
  %3717 = vmax.xlane.f32.xlu0 %v3476
  %v3718 = vpop.xlane.xlu0 %3717
  %3719 = vmax.xlane.f32.xlu0 %v3481
  %v3720 = vpop.xlane.xlu0 %3719
  %3721 = vmax.xlane.f32.xlu0 %v3484
  %v3722 = vpop.xlane.xlu0 %3721
  %3723 = vmax.xlane.f32.xlu0 %v3489
  %v3724 = vpop.xlane.xlu0 %3723
  %3725 = vmax.xlane.f32.xlu0 %v3492
  %v3726 = vpop.xlane.xlu0 %3725
  %3727 = vmax.xlane.f32.xlu0 %v3497
  %v3728 = vpop.xlane.xlu0 %3727
  %3729 = vmax.xlane.f32.xlu0 %v3500
  %v3730 = vpop.xlane.xlu0 %3729
  %3731 = vmax.xlane.f32.xlu0 %v3505
  %v3732 = vpop.xlane.xlu0 %3731
  %3733 = vmax.xlane.f32.xlu0 %v3508
  %v3734 = vpop.xlane.xlu0 %3733
  %3735 = vmax.xlane.f32.xlu0 %v3513
  %v3736 = vpop.xlane.xlu0 %3735
  %3737 = vmax.xlane.f32.xlu0 %v3516
  %v3738 = vpop.xlane.xlu0 %3737
  %3739 = vmax.xlane.f32.xlu0 %v3581
  %v3740 = vpop.xlane.xlu0 %3739
  %3741 = vmax.xlane.f32.xlu0 %v3584
  %v3742 = vpop.xlane.xlu0 %3741
  %3743 = vmax.xlane.f32.xlu0 %v3589
  %v3744 = vpop.xlane.xlu0 %3743
  %3745 = vmax.xlane.f32.xlu0 %v3592
  %v3746 = vpop.xlane.xlu0 %3745
  %3747 = vmax.xlane.f32.xlu0 %v3597
  %v3748 = vpop.xlane.xlu0 %3747
  %3749 = vmax.xlane.f32.xlu0 %v3600
  %v3750 = vpop.xlane.xlu0 %3749
  %3751 = vmax.xlane.f32.xlu0 %v3605
  %v3752 = vpop.xlane.xlu0 %3751
  %3753 = vmax.xlane.f32.xlu0 %v3608
  %v3754 = vpop.xlane.xlu0 %3753
  %3755 = vmax.xlane.f32.xlu0 %v3613
  %v3756 = vpop.xlane.xlu0 %3755
  %3757 = vmax.xlane.f32.xlu0 %v3616
  %v3758 = vpop.xlane.xlu0 %3757
  %3759 = vmax.xlane.f32.xlu0 %v3621
  %v3760 = vpop.xlane.xlu0 %3759
  %3761 = vmax.xlane.f32.xlu0 %v3624
  %v3762 = vpop.xlane.xlu0 %3761
  %3763 = vmax.xlane.f32.xlu0 %v3629
  %v3764 = vpop.xlane.xlu0 %3763
  %3765 = vmax.xlane.f32.xlu0 %v3632
  %v3766 = vpop.xlane.xlu0 %3765
  %3767 = vmax.xlane.f32.xlu0 %v3637
  %v3768 = vpop.xlane.xlu0 %3767
  %3769 = vmax.xlane.f32.xlu0 %v3640
  %v3770 = vpop.xlane.xlu0 %3769
  %v3771 = vsub.f32 %v3209, %v3644
  %v3772 = vsub.f32 %v3212, %v3646
  %v3773 = vsub.f32 %v3217, %v3648
  %v3774 = vsub.f32 %v3220, %v3650
  %v3775 = vsub.f32 %v3225, %v3652
  %v3776 = vsub.f32 %v3228, %v3654
  %v3777 = vsub.f32 %v3233, %v3656
  %v3778 = vsub.f32 %v3236, %v3658
  %v3779 = vsub.f32 %v3241, %v3660
  %v3780 = vsub.f32 %v3244, %v3662
  %v3781 = vsub.f32 %v3249, %v3664
  %v3782 = vsub.f32 %v3252, %v3666
  %v3783 = vsub.f32 %v3257, %v3668
  %v3784 = vsub.f32 %v3260, %v3670
  %v3785 = vsub.f32 %v3265, %v3672
  %v3786 = vsub.f32 %v3268, %v3674
  %v3787 = vsub.f32 %v3333, %v3676
  %v3788 = vsub.f32 %v3336, %v3678
  %v3789 = vsub.f32 %v3341, %v3680
  %v3790 = vsub.f32 %v3344, %v3682
  %v3791 = vsub.f32 %v3349, %v3684
  %v3792 = vsub.f32 %v3352, %v3686
  %v3793 = vsub.f32 %v3357, %v3688
  %v3794 = vsub.f32 %v3360, %v3690
  %v3795 = vsub.f32 %v3365, %v3692
  %v3796 = vsub.f32 %v3368, %v3694
  %v3797 = vsub.f32 %v3373, %v3696
  %v3798 = vsub.f32 %v3376, %v3698
  %v3799 = vsub.f32 %v3381, %v3700
  %v3800 = vsub.f32 %v3384, %v3702
  %v3801 = vsub.f32 %v3389, %v3704
  %v3802 = vsub.f32 %v3392, %v3706
  %v3803 = vsub.f32 %v3457, %v3708
  %v3804 = vsub.f32 %v3460, %v3710
  %v3805 = vsub.f32 %v3465, %v3712
  %v3806 = vsub.f32 %v3468, %v3714
  %v3807 = vsub.f32 %v3473, %v3716
  %v3808 = vsub.f32 %v3476, %v3718
  %v3809 = vsub.f32 %v3481, %v3720
  %v3810 = vsub.f32 %v3484, %v3722
  %v3811 = vsub.f32 %v3489, %v3724
  %v3812 = vsub.f32 %v3492, %v3726
  %v3813 = vsub.f32 %v3497, %v3728
  %v3814 = vsub.f32 %v3500, %v3730
  %v3815 = vsub.f32 %v3505, %v3732
  %v3816 = vsub.f32 %v3508, %v3734
  %v3817 = vsub.f32 %v3513, %v3736
  %v3818 = vsub.f32 %v3516, %v3738
  %v3819 = vsub.f32 %v3581, %v3740
  %v3820 = vsub.f32 %v3584, %v3742
  %v3821 = vsub.f32 %v3589, %v3744
  %v3822 = vsub.f32 %v3592, %v3746
  %v3823 = vsub.f32 %v3597, %v3748
  %v3824 = vsub.f32 %v3600, %v3750
  %v3825 = vsub.f32 %v3605, %v3752
  %v3826 = vsub.f32 %v3608, %v3754
  %v3827 = vsub.f32 %v3613, %v3756
  %v3828 = vsub.f32 %v3616, %v3758
  %v3829 = vsub.f32 %v3621, %v3760
  %v3830 = vsub.f32 %v3624, %v3762
  %v3831 = vsub.f32 %v3629, %v3764
  %v3832 = vsub.f32 %v3632, %v3766
  %v3833 = vsub.f32 %v3637, %v3768
  %v3834 = vsub.f32 %v3640, %v3770
  %v3835 = vmul.f32 %v3771, 1.442695
  %v3836 = vpow.pop %v3835
  %v3837 = vmul.f32 %v3772, 1.442695
  %v3838 = vpow.pop %v3837
  %v3839 = vmul.f32 %v3773, 1.442695
  %v3840 = vpow.pop %v3839
  %v3841 = vmul.f32 %v3774, 1.442695
  %v3842 = vpow.pop %v3841
  %v3843 = vmul.f32 %v3775, 1.442695
  %v3844 = vpow.pop %v3843
  %v3845 = vmul.f32 %v3776, 1.442695
  %v3846 = vpow.pop %v3845
  %v3847 = vmul.f32 %v3777, 1.442695
  %v3848 = vpow.pop %v3847
  %v3849 = vmul.f32 %v3778, 1.442695
  %v3850 = vpow.pop %v3849
  %v3851 = vmul.f32 %v3779, 1.442695
  %v3852 = vpow.pop %v3851
  %v3853 = vmul.f32 %v3780, 1.442695
  %v3854 = vpow.pop %v3853
  %v3855 = vmul.f32 %v3781, 1.442695
  %v3856 = vpow.pop %v3855
  %v3857 = vmul.f32 %v3782, 1.442695
  %v3858 = vpow.pop %v3857
  %v3859 = vmul.f32 %v3783, 1.442695
  %v3860 = vpow.pop %v3859
  %v3861 = vmul.f32 %v3784, 1.442695
  %v3862 = vpow.pop %v3861
  %v3863 = vmul.f32 %v3785, 1.442695
  %v3864 = vpow.pop %v3863
  %v3865 = vmul.f32 %v3786, 1.442695
  %v3866 = vpow.pop %v3865
  %v3867 = vmul.f32 %v3787, 1.442695
  %v3868 = vpow.pop %v3867
  %v3869 = vmul.f32 %v3788, 1.442695
  %v3870 = vpow.pop %v3869
  %v3871 = vmul.f32 %v3789, 1.442695
  %v3872 = vpow.pop %v3871
  %v3873 = vmul.f32 %v3790, 1.442695
  %v3874 = vpow.pop %v3873
  %v3875 = vmul.f32 %v3791, 1.442695
  %v3876 = vpow.pop %v3875
  %v3877 = vmul.f32 %v3792, 1.442695
  %v3878 = vpow.pop %v3877
  %v3879 = vmul.f32 %v3793, 1.442695
  %v3880 = vpow.pop %v3879
  %v3881 = vmul.f32 %v3794, 1.442695
  %v3882 = vpow.pop %v3881
  %v3883 = vmul.f32 %v3795, 1.442695
  %v3884 = vpow.pop %v3883
  %v3885 = vmul.f32 %v3796, 1.442695
  %v3886 = vpow.pop %v3885
  %v3887 = vmul.f32 %v3797, 1.442695
  %v3888 = vpow.pop %v3887
  %v3889 = vmul.f32 %v3798, 1.442695
  %v3890 = vpow.pop %v3889
  %v3891 = vmul.f32 %v3799, 1.442695
  %v3892 = vpow.pop %v3891
  %v3893 = vmul.f32 %v3800, 1.442695
  %v3894 = vpow.pop %v3893
  %v3895 = vmul.f32 %v3801, 1.442695
  %v3896 = vpow.pop %v3895
  %v3897 = vmul.f32 %v3802, 1.442695
  %v3898 = vpow.pop %v3897
  %v3899 = vmul.f32 %v3803, 1.442695
  %v3900 = vpow.pop %v3899
  %v3901 = vmul.f32 %v3804, 1.442695
  %v3902 = vpow.pop %v3901
  %v3903 = vmul.f32 %v3805, 1.442695
  %v3904 = vpow.pop %v3903
  %v3905 = vmul.f32 %v3806, 1.442695
  %v3906 = vpow.pop %v3905
  %v3907 = vmul.f32 %v3807, 1.442695
  %v3908 = vpow.pop %v3907
  %v3909 = vmul.f32 %v3808, 1.442695
  %v3910 = vpow.pop %v3909
  %v3911 = vmul.f32 %v3809, 1.442695
  %v3912 = vpow.pop %v3911
  %v3913 = vmul.f32 %v3810, 1.442695
  %v3914 = vpow.pop %v3913
  %v3915 = vmul.f32 %v3811, 1.442695
  %v3916 = vpow.pop %v3915
  %v3917 = vmul.f32 %v3812, 1.442695
  %v3918 = vpow.pop %v3917
  %v3919 = vmul.f32 %v3813, 1.442695
  %v3920 = vpow.pop %v3919
  %v3921 = vmul.f32 %v3814, 1.442695
  %v3922 = vpow.pop %v3921
  %v3923 = vmul.f32 %v3815, 1.442695
  %v3924 = vpow.pop %v3923
  %v3925 = vmul.f32 %v3816, 1.442695
  %v3926 = vpow.pop %v3925
  %v3927 = vmul.f32 %v3817, 1.442695
  %v3928 = vpow.pop %v3927
  %v3929 = vmul.f32 %v3818, 1.442695
  %v3930 = vpow.pop %v3929
  %v3931 = vmul.f32 %v3819, 1.442695
  %v3932 = vpow.pop %v3931
  %v3933 = vmul.f32 %v3820, 1.442695
  %v3934 = vpow.pop %v3933
  %v3935 = vmul.f32 %v3821, 1.442695
  %v3936 = vpow.pop %v3935
  %v3937 = vmul.f32 %v3822, 1.442695
  %v3938 = vpow.pop %v3937
  %v3939 = vmul.f32 %v3823, 1.442695
  %v3940 = vpow.pop %v3939
  %v3941 = vmul.f32 %v3824, 1.442695
  %v3942 = vpow.pop %v3941
  %v3943 = vmul.f32 %v3825, 1.442695
  %v3944 = vpow.pop %v3943
  %v3945 = vmul.f32 %v3826, 1.442695
  %v3946 = vpow.pop %v3945
  %v3947 = vmul.f32 %v3827, 1.442695
  %v3948 = vpow.pop %v3947
  %v3949 = vmul.f32 %v3828, 1.442695
  %v3950 = vpow.pop %v3949
  %v3951 = vmul.f32 %v3829, 1.442695
  %v3952 = vpow.pop %v3951
  %v3953 = vmul.f32 %v3830, 1.442695
  %v3954 = vpow.pop %v3953
  %v3955 = vmul.f32 %v3831, 1.442695
  %v3956 = vpow.pop %v3955
  %v3957 = vmul.f32 %v3832, 1.442695
  %v3958 = vpow.pop %v3957
  %v3959 = vmul.f32 %v3833, 1.442695
  %v3960 = vpow.pop %v3959
  %v3961 = vmul.f32 %v3834, 1.442695
  %v3962 = vpow.pop %v3961
  %3963 = vadd.xlane.f32.xlu0 %v3836
  %v3964 = vpop.xlane.xlu0 %3963
  %3965 = vadd.xlane.f32.xlu0 %v3838
  %v3966 = vpop.xlane.xlu0 %3965
  %3967 = vadd.xlane.f32.xlu0 %v3840
  %v3968 = vpop.xlane.xlu0 %3967
  %3969 = vadd.xlane.f32.xlu0 %v3842
  %v3970 = vpop.xlane.xlu0 %3969
  %3971 = vadd.xlane.f32.xlu0 %v3844
  %v3972 = vpop.xlane.xlu0 %3971
  %3973 = vadd.xlane.f32.xlu0 %v3846
  %v3974 = vpop.xlane.xlu0 %3973
  %3975 = vadd.xlane.f32.xlu0 %v3848
  %v3976 = vpop.xlane.xlu0 %3975
  %3977 = vadd.xlane.f32.xlu0 %v3850
  %v3978 = vpop.xlane.xlu0 %3977
  %3979 = vadd.xlane.f32.xlu0 %v3852
  %v3980 = vpop.xlane.xlu0 %3979
  %3981 = vadd.xlane.f32.xlu0 %v3854
  %v3982 = vpop.xlane.xlu0 %3981
  %3983 = vadd.xlane.f32.xlu0 %v3856
  %v3984 = vpop.xlane.xlu0 %3983
  %3985 = vadd.xlane.f32.xlu0 %v3858
  %v3986 = vpop.xlane.xlu0 %3985
  %3987 = vadd.xlane.f32.xlu0 %v3860
  %v3988 = vpop.xlane.xlu0 %3987
  %3989 = vadd.xlane.f32.xlu0 %v3862
  %v3990 = vpop.xlane.xlu0 %3989
  %3991 = vadd.xlane.f32.xlu0 %v3864
  %v3992 = vpop.xlane.xlu0 %3991
  %3993 = vadd.xlane.f32.xlu0 %v3866
  %v3994 = vpop.xlane.xlu0 %3993
  %3995 = vadd.xlane.f32.xlu0 %v3868
  %v3996 = vpop.xlane.xlu0 %3995
  %3997 = vadd.xlane.f32.xlu0 %v3870
  %v3998 = vpop.xlane.xlu0 %3997
  %3999 = vadd.xlane.f32.xlu0 %v3872
  %v4000 = vpop.xlane.xlu0 %3999
  %4001 = vadd.xlane.f32.xlu0 %v3874
  %v4002 = vpop.xlane.xlu0 %4001
  %4003 = vadd.xlane.f32.xlu0 %v3876
  %v4004 = vpop.xlane.xlu0 %4003
  %4005 = vadd.xlane.f32.xlu0 %v3878
  %v4006 = vpop.xlane.xlu0 %4005
  %4007 = vadd.xlane.f32.xlu0 %v3880
  %v4008 = vpop.xlane.xlu0 %4007
  %4009 = vadd.xlane.f32.xlu0 %v3882
  %v4010 = vpop.xlane.xlu0 %4009
  %4011 = vadd.xlane.f32.xlu0 %v3884
  %v4012 = vpop.xlane.xlu0 %4011
  %4013 = vadd.xlane.f32.xlu0 %v3886
  %v4014 = vpop.xlane.xlu0 %4013
  %4015 = vadd.xlane.f32.xlu0 %v3888
  %v4016 = vpop.xlane.xlu0 %4015
  %4017 = vadd.xlane.f32.xlu0 %v3890
  %v4018 = vpop.xlane.xlu0 %4017
  %4019 = vadd.xlane.f32.xlu0 %v3892
  %v4020 = vpop.xlane.xlu0 %4019
  %4021 = vadd.xlane.f32.xlu0 %v3894
  %v4022 = vpop.xlane.xlu0 %4021
  %4023 = vadd.xlane.f32.xlu0 %v3896
  %v4024 = vpop.xlane.xlu0 %4023
  %4025 = vadd.xlane.f32.xlu0 %v3898
  %v4026 = vpop.xlane.xlu0 %4025
  %4027 = vadd.xlane.f32.xlu0 %v3900
  %v4028 = vpop.xlane.xlu0 %4027
  %4029 = vadd.xlane.f32.xlu0 %v3902
  %v4030 = vpop.xlane.xlu0 %4029
  %4031 = vadd.xlane.f32.xlu0 %v3904
  %v4032 = vpop.xlane.xlu0 %4031
  %4033 = vadd.xlane.f32.xlu0 %v3906
  %v4034 = vpop.xlane.xlu0 %4033
  %4035 = vadd.xlane.f32.xlu0 %v3908
  %v4036 = vpop.xlane.xlu0 %4035
  %4037 = vadd.xlane.f32.xlu0 %v3910
  %v4038 = vpop.xlane.xlu0 %4037
  %4039 = vadd.xlane.f32.xlu0 %v3912
  %v4040 = vpop.xlane.xlu0 %4039
  %4041 = vadd.xlane.f32.xlu0 %v3914
  %v4042 = vpop.xlane.xlu0 %4041
  %4043 = vadd.xlane.f32.xlu0 %v3916
  %v4044 = vpop.xlane.xlu0 %4043
  %4045 = vadd.xlane.f32.xlu0 %v3918
  %v4046 = vpop.xlane.xlu0 %4045
  %4047 = vadd.xlane.f32.xlu0 %v3920
  %v4048 = vpop.xlane.xlu0 %4047
  %4049 = vadd.xlane.f32.xlu0 %v3922
  %v4050 = vpop.xlane.xlu0 %4049
  %4051 = vadd.xlane.f32.xlu0 %v3924
  %v4052 = vpop.xlane.xlu0 %4051
  %4053 = vadd.xlane.f32.xlu0 %v3926
  %v4054 = vpop.xlane.xlu0 %4053
  %4055 = vadd.xlane.f32.xlu0 %v3928
  %v4056 = vpop.xlane.xlu0 %4055
  %4057 = vadd.xlane.f32.xlu0 %v3930
  %v4058 = vpop.xlane.xlu0 %4057
  %4059 = vadd.xlane.f32.xlu0 %v3932
  %v4060 = vpop.xlane.xlu0 %4059
  %4061 = vadd.xlane.f32.xlu0 %v3934
  %v4062 = vpop.xlane.xlu0 %4061
  %4063 = vadd.xlane.f32.xlu0 %v3936
  %v4064 = vpop.xlane.xlu0 %4063
  %4065 = vadd.xlane.f32.xlu0 %v3938
  %v4066 = vpop.xlane.xlu0 %4065
  %4067 = vadd.xlane.f32.xlu0 %v3940
  %v4068 = vpop.xlane.xlu0 %4067
  %4069 = vadd.xlane.f32.xlu0 %v3942
  %v4070 = vpop.xlane.xlu0 %4069
  %4071 = vadd.xlane.f32.xlu0 %v3944
  %v4072 = vpop.xlane.xlu0 %4071
  %4073 = vadd.xlane.f32.xlu0 %v3946
  %v4074 = vpop.xlane.xlu0 %4073
  %4075 = vadd.xlane.f32.xlu0 %v3948
  %v4076 = vpop.xlane.xlu0 %4075
  %4077 = vadd.xlane.f32.xlu0 %v3950
  %v4078 = vpop.xlane.xlu0 %4077
  %4079 = vadd.xlane.f32.xlu0 %v3952
  %v4080 = vpop.xlane.xlu0 %4079
  %4081 = vadd.xlane.f32.xlu0 %v3954
  %v4082 = vpop.xlane.xlu0 %4081
  %4083 = vadd.xlane.f32.xlu0 %v3956
  %v4084 = vpop.xlane.xlu0 %4083
  %4085 = vadd.xlane.f32.xlu0 %v3958
  %v4086 = vpop.xlane.xlu0 %4085
  %4087 = vadd.xlane.f32.xlu0 %v3960
  %v4088 = vpop.xlane.xlu0 %4087
  %4089 = vadd.xlane.f32.xlu0 %v3962
  %v4090 = vpop.xlane.xlu0 %4089
  %v4091 = vrcp.pop %v3964
  %v4092 = vrcp.pop %v3966
  %v4093 = vrcp.pop %v3968
  %v4094 = vrcp.pop %v3970
  %v4095 = vrcp.pop %v3972
  %v4096 = vrcp.pop %v3974
  %v4097 = vrcp.pop %v3976
  %v4098 = vrcp.pop %v3978
  %v4099 = vrcp.pop %v3980
  %v4100 = vrcp.pop %v3982
  %v4101 = vrcp.pop %v3984
  %v4102 = vrcp.pop %v3986
  %v4103 = vrcp.pop %v3988
  %v4104 = vrcp.pop %v3990
  %v4105 = vrcp.pop %v3992
  %v4106 = vrcp.pop %v3994
  %v4107 = vrcp.pop %v3996
  %v4108 = vrcp.pop %v3998
  %v4109 = vrcp.pop %v4000
  %v4110 = vrcp.pop %v4002
  %v4111 = vrcp.pop %v4004
  %v4112 = vrcp.pop %v4006
  %v4113 = vrcp.pop %v4008
  %v4114 = vrcp.pop %v4010
  %v4115 = vrcp.pop %v4012
  %v4116 = vrcp.pop %v4014
  %v4117 = vrcp.pop %v4016
  %v4118 = vrcp.pop %v4018
  %v4119 = vrcp.pop %v4020
  %v4120 = vrcp.pop %v4022
  %v4121 = vrcp.pop %v4024
  %v4122 = vrcp.pop %v4026
  %v4123 = vrcp.pop %v4028
  %v4124 = vrcp.pop %v4030
  %v4125 = vrcp.pop %v4032
  %v4126 = vrcp.pop %v4034
  %v4127 = vrcp.pop %v4036
  %v4128 = vrcp.pop %v4038
  %v4129 = vrcp.pop %v4040
  %v4130 = vrcp.pop %v4042
  %v4131 = vrcp.pop %v4044
  %v4132 = vrcp.pop %v4046
  %v4133 = vrcp.pop %v4048
  %v4134 = vrcp.pop %v4050
  %v4135 = vrcp.pop %v4052
  %v4136 = vrcp.pop %v4054
  %v4137 = vrcp.pop %v4056
  %v4138 = vrcp.pop %v4058
  %v4139 = vrcp.pop %v4060
  %v4140 = vrcp.pop %v4062
  %v4141 = vrcp.pop %v4064
  %v4142 = vrcp.pop %v4066
  %v4143 = vrcp.pop %v4068
  %v4144 = vrcp.pop %v4070
  %v4145 = vrcp.pop %v4072
  %v4146 = vrcp.pop %v4074
  %v4147 = vrcp.pop %v4076
  %v4148 = vrcp.pop %v4078
  %v4149 = vrcp.pop %v4080
  %v4150 = vrcp.pop %v4082
  %v4151 = vrcp.pop %v4084
  %v4152 = vrcp.pop %v4086
  %v4153 = vrcp.pop %v4088
  %v4154 = vrcp.pop %v4090
  %v4155 = vmul.f32 %v3836, %v4091
  %v4156 = vmul.f32 %v3838, %v4092
  %v4157 = vmul.f32 %v3840, %v4093
  %v4158 = vmul.f32 %v3842, %v4094
  %v4159 = vmul.f32 %v3844, %v4095
  %v4160 = vmul.f32 %v3846, %v4096
  %v4161 = vmul.f32 %v3848, %v4097
  %v4162 = vmul.f32 %v3850, %v4098
  %v4163 = vmul.f32 %v3852, %v4099
  %v4164 = vmul.f32 %v3854, %v4100
  %v4165 = vmul.f32 %v3856, %v4101
  %v4166 = vmul.f32 %v3858, %v4102
  %v4167 = vmul.f32 %v3860, %v4103
  %v4168 = vmul.f32 %v3862, %v4104
  %v4169 = vmul.f32 %v3864, %v4105
  %v4170 = vmul.f32 %v3866, %v4106
  %v4171 = vmul.f32 %v3868, %v4107
  %v4172 = vmul.f32 %v3870, %v4108
  %v4173 = vmul.f32 %v3872, %v4109
  %v4174 = vmul.f32 %v3874, %v4110
  %v4175 = vmul.f32 %v3876, %v4111
  %v4176 = vmul.f32 %v3878, %v4112
  %v4177 = vmul.f32 %v3880, %v4113
  %v4178 = vmul.f32 %v3882, %v4114
  %v4179 = vmul.f32 %v3884, %v4115
  %v4180 = vmul.f32 %v3886, %v4116
  %v4181 = vmul.f32 %v3888, %v4117
  %v4182 = vmul.f32 %v3890, %v4118
  %v4183 = vmul.f32 %v3892, %v4119
  %v4184 = vmul.f32 %v3894, %v4120
  %v4185 = vmul.f32 %v3896, %v4121
  %v4186 = vmul.f32 %v3898, %v4122
  %v4187 = vmul.f32 %v3900, %v4123
  %v4188 = vmul.f32 %v3902, %v4124
  %v4189 = vmul.f32 %v3904, %v4125
  %v4190 = vmul.f32 %v3906, %v4126
  %v4191 = vmul.f32 %v3908, %v4127
  %v4192 = vmul.f32 %v3910, %v4128
  %v4193 = vmul.f32 %v3912, %v4129
  %v4194 = vmul.f32 %v3914, %v4130
  %v4195 = vmul.f32 %v3916, %v4131
  %v4196 = vmul.f32 %v3918, %v4132
  %v4197 = vmul.f32 %v3920, %v4133
  %v4198 = vmul.f32 %v3922, %v4134
  %v4199 = vmul.f32 %v3924, %v4135
  %v4200 = vmul.f32 %v3926, %v4136
  %v4201 = vmul.f32 %v3928, %v4137
  %v4202 = vmul.f32 %v3930, %v4138
  %v4203 = vmul.f32 %v3932, %v4139
  %v4204 = vmul.f32 %v3934, %v4140
  %v4205 = vmul.f32 %v3936, %v4141
  %v4206 = vmul.f32 %v3938, %v4142
  %v4207 = vmul.f32 %v3940, %v4143
  %v4208 = vmul.f32 %v3942, %v4144
  %v4209 = vmul.f32 %v3944, %v4145
  %v4210 = vmul.f32 %v3946, %v4146
  %v4211 = vmul.f32 %v3948, %v4147
  %v4212 = vmul.f32 %v3950, %v4148
  %v4213 = vmul.f32 %v3952, %v4149
  %v4214 = vmul.f32 %v3954, %v4150
  %v4215 = vmul.f32 %v3956, %v4151
  %v4216 = vmul.f32 %v3958, %v4152
  %v4217 = vmul.f32 %v3960, %v4153
  %v4218 = vmul.f32 %v3962, %v4154
  %v4219 = vpack.c.bf16 %v2953, %v2953
  %v4220 = vpack.c.bf16 %v2956, %v2956
  %v4221 = vpack.c.bf16 %v2961, %v2961
  %v4222 = vpack.c.bf16 %v2964, %v2964
  %v4223 = vpack.c.bf16 %v4156, %v4155
  %v4224 = vpack.c.bf16 %v4158, %v4157
  %v4225 = vpack.c.bf16 %v4160, %v4159
  %v4226 = vpack.c.bf16 %v4162, %v4161
  %v4227 = vpack.c.bf16 %v4164, %v4163
  %v4228 = vpack.c.bf16 %v4166, %v4165
  %v4229 = vpack.c.bf16 %v4168, %v4167
  %v4230 = vpack.c.bf16 %v4170, %v4169
  %v4231 = vpack.c.bf16 %v4172, %v4171
  %v4232 = vpack.c.bf16 %v4174, %v4173
  %v4233 = vpack.c.bf16 %v4176, %v4175
  %v4234 = vpack.c.bf16 %v4178, %v4177
  %v4235 = vpack.c.bf16 %v4180, %v4179
  %v4236 = vpack.c.bf16 %v4182, %v4181
  %v4237 = vpack.c.bf16 %v4184, %v4183
  %v4238 = vpack.c.bf16 %v4186, %v4185
  %v4239 = vpack.c.bf16 %v4188, %v4187
  %v4240 = vpack.c.bf16 %v4190, %v4189
  %v4241 = vpack.c.bf16 %v4192, %v4191
  %v4242 = vpack.c.bf16 %v4194, %v4193
  %v4243 = vpack.c.bf16 %v4196, %v4195
  %v4244 = vpack.c.bf16 %v4198, %v4197
  %v4245 = vpack.c.bf16 %v4200, %v4199
  %v4246 = vpack.c.bf16 %v4202, %v4201
  %v4247 = vpack.c.bf16 %v4204, %v4203
  %v4248 = vpack.c.bf16 %v4206, %v4205
  %v4249 = vpack.c.bf16 %v4208, %v4207
  %v4250 = vpack.c.bf16 %v4210, %v4209
  %v4251 = vpack.c.bf16 %v4212, %v4211
  %v4252 = vpack.c.bf16 %v4214, %v4213
  %v4253 = vpack.c.bf16 %v4216, %v4215
  %v4254 = vpack.c.bf16 %v4218, %v4217
  %4255 = vmatprep.subr.bf16.mxu0 0
  %4256 = vmatpush1.bf16.xpose.msra.mxu0 %v4223
  %4257 = vmatprep.subr.bf16.mxu0 0
  %4258 = vmatpush1.bf16.xpose.msra.mxu0 %v4224
  %4259 = vmatprep.subr.bf16.mxu0 0
  %4260 = vmatpush1.bf16.xpose.msra.mxu0 %v4225
  %4261 = vmatprep.subr.bf16.mxu0 0
  %4262 = vmatpush1.bf16.xpose.msra.mxu0 %v4226
  %4263 = vmatprep.subr.bf16.mxu0 0
  %4264 = vmatpush1.bf16.xpose.msra.mxu0 %v4227
  %4265 = vmatprep.subr.bf16.mxu0 0
  %4266 = vmatpush1.bf16.xpose.msra.mxu0 %v4228
  %4267 = vmatprep.subr.bf16.mxu0 0
  %4268 = vmatpush1.bf16.xpose.msra.mxu0 %v4229
  %4269 = vmatprep.subr.bf16.mxu0 0
  %4270 = vmatpush1.bf16.xpose.msra.mxu0 %v4230
  %4271 = vmatprep.subr.bf16.mxu0 0
  %4272 = vmatpush1.bf16.xpose.msra.mxu0 0
  %4273 = vmatprep.subr.bf16.mxu0 0
  %4274 = vmatpush1.bf16.xpose.msra.mxu0 0
  %4275 = vmatprep.subr.bf16.mxu0 0
  %4276 = vmatpush1.bf16.xpose.msra.mxu0 0
  %4277 = vmatprep.subr.bf16.mxu0 0
  %4278 = vmatpush1.bf16.xpose.msra.mxu0 0
  %4279 = vmatprep.subr.bf16.mxu0 0
  %4280 = vmatpush1.bf16.xpose.msra.mxu0 0
  %4281 = vmatprep.subr.bf16.mxu0 0
  %4282 = vmatpush1.bf16.xpose.msra.mxu0 0
  %4283 = vmatprep.subr.bf16.mxu0 0
  %4284 = vmatpush1.bf16.xpose.msra.mxu0 0
  %4285 = vmatprep.subr.bf16.mxu0 0
  %4286 = vmatpush1.bf16.xpose.msra.mxu0 0
  %4287 = vmatprep.mubr.bf16.mxu0 0
  %4288 = vmatmul.mubr.bf16.gmra.mrb[0].mxu0 %v4219
  %v4289 = vpop.f32.mrb[0].mxu0
  %v4290 = vadd.f32 0.0, %v4289
  %v4291 = vpop.f32.mrb[0].mxu0
  %v4292 = vpop.f32.mrb[0].mxu0
  %v4293 = vpop.f32.mrb[0].mxu0
  %4294 = vdwg.mxu0
  %4295 = vmatprep.subr.bf16.mxu0 0
  %4296 = vmatpush1.bf16.xpose.msra.mxu0 %v4231
  %4297 = vmatprep.subr.bf16.mxu0 0
  %4298 = vmatpush1.bf16.xpose.msra.mxu0 %v4232
  %4299 = vmatprep.subr.bf16.mxu0 0
  %4300 = vmatpush1.bf16.xpose.msra.mxu0 %v4233
  %4301 = vmatprep.subr.bf16.mxu0 0
  %4302 = vmatpush1.bf16.xpose.msra.mxu0 %v4234
  %4303 = vmatprep.subr.bf16.mxu0 0
  %4304 = vmatpush1.bf16.xpose.msra.mxu0 %v4235
  %4305 = vmatprep.subr.bf16.mxu0 0
  %4306 = vmatpush1.bf16.xpose.msra.mxu0 %v4236
  %4307 = vmatprep.subr.bf16.mxu0 0
  %4308 = vmatpush1.bf16.xpose.msra.mxu0 %v4237
  %4309 = vmatprep.subr.bf16.mxu0 0
  %4310 = vmatpush1.bf16.xpose.msra.mxu0 %v4238
  %4311 = vmatprep.subr.bf16.mxu0 0
  %4312 = vmatpush1.bf16.xpose.msra.mxu0 0
  %4313 = vmatprep.subr.bf16.mxu0 0
  %4314 = vmatpush1.bf16.xpose.msra.mxu0 0
  %4315 = vmatprep.subr.bf16.mxu0 0
  %4316 = vmatpush1.bf16.xpose.msra.mxu0 0
  %4317 = vmatprep.subr.bf16.mxu0 0
  %4318 = vmatpush1.bf16.xpose.msra.mxu0 0
  %4319 = vmatprep.subr.bf16.mxu0 0
  %4320 = vmatpush1.bf16.xpose.msra.mxu0 0
  %4321 = vmatprep.subr.bf16.mxu0 0
  %4322 = vmatpush1.bf16.xpose.msra.mxu0 0
  %4323 = vmatprep.subr.bf16.mxu0 0
  %4324 = vmatpush1.bf16.xpose.msra.mxu0 0
  %4325 = vmatprep.subr.bf16.mxu0 0
  %4326 = vmatpush1.bf16.xpose.msra.mxu0 0
  %4327 = vmatprep.mubr.bf16.mxu0 0
  %4328 = vmatmul.mubr.bf16.gmra.mrb[0].mxu0 %v4220
  %v4329 = vpop.f32.mrb[0].mxu0
  %v4330 = vadd.f32 0.0, %v4329
  %v4331 = vpop.f32.mrb[0].mxu0
  %v4332 = vpop.f32.mrb[0].mxu0
  %v4333 = vpop.f32.mrb[0].mxu0
  %4334 = vdwg.mxu0
  %4335 = vmatprep.subr.bf16.mxu0 0
  %4336 = vmatpush1.bf16.xpose.msra.mxu0 %v4239
  %4337 = vmatprep.subr.bf16.mxu0 0
  %4338 = vmatpush1.bf16.xpose.msra.mxu0 %v4240
  %4339 = vmatprep.subr.bf16.mxu0 0
  %4340 = vmatpush1.bf16.xpose.msra.mxu0 %v4241
  %4341 = vmatprep.subr.bf16.mxu0 0
  %4342 = vmatpush1.bf16.xpose.msra.mxu0 %v4242
  %4343 = vmatprep.subr.bf16.mxu0 0
  %4344 = vmatpush1.bf16.xpose.msra.mxu0 %v4243
  %4345 = vmatprep.subr.bf16.mxu0 0
  %4346 = vmatpush1.bf16.xpose.msra.mxu0 %v4244
  %4347 = vmatprep.subr.bf16.mxu0 0
  %4348 = vmatpush1.bf16.xpose.msra.mxu0 %v4245
  %4349 = vmatprep.subr.bf16.mxu0 0
  %4350 = vmatpush1.bf16.xpose.msra.mxu0 %v4246
  %4351 = vmatprep.subr.bf16.mxu0 0
  %4352 = vmatpush1.bf16.xpose.msra.mxu0 0
  %4353 = vmatprep.subr.bf16.mxu0 0
  %4354 = vmatpush1.bf16.xpose.msra.mxu0 0
  %4355 = vmatprep.subr.bf16.mxu0 0
  %4356 = vmatpush1.bf16.xpose.msra.mxu0 0
  %4357 = vmatprep.subr.bf16.mxu0 0
  %4358 = vmatpush1.bf16.xpose.msra.mxu0 0
  %4359 = vmatprep.subr.bf16.mxu0 0
  %4360 = vmatpush1.bf16.xpose.msra.mxu0 0
  %4361 = vmatprep.subr.bf16.mxu0 0
  %4362 = vmatpush1.bf16.xpose.msra.mxu0 0
  %4363 = vmatprep.subr.bf16.mxu0 0
  %4364 = vmatpush1.bf16.xpose.msra.mxu0 0
  %4365 = vmatprep.subr.bf16.mxu0 0
  %4366 = vmatpush1.bf16.xpose.msra.mxu0 0
  %4367 = vmatprep.mubr.bf16.mxu0 0
  %4368 = vmatmul.mubr.bf16.gmra.mrb[0].mxu0 %v4221
  %v4369 = vpop.f32.mrb[0].mxu0
  %v4370 = vadd.f32 0.0, %v4369
  %v4371 = vpop.f32.mrb[0].mxu0
  %v4372 = vpop.f32.mrb[0].mxu0
  %v4373 = vpop.f32.mrb[0].mxu0
  %4374 = vdwg.mxu0
  %4375 = vmatprep.subr.bf16.mxu0 0
  %4376 = vmatpush1.bf16.xpose.msra.mxu0 %v4247
  %4377 = vmatprep.subr.bf16.mxu0 0
  %4378 = vmatpush1.bf16.xpose.msra.mxu0 %v4248
  %4379 = vmatprep.subr.bf16.mxu0 0
  %4380 = vmatpush1.bf16.xpose.msra.mxu0 %v4249
  %4381 = vmatprep.subr.bf16.mxu0 0
  %4382 = vmatpush1.bf16.xpose.msra.mxu0 %v4250
  %4383 = vmatprep.subr.bf16.mxu0 0
  %4384 = vmatpush1.bf16.xpose.msra.mxu0 %v4251
  %4385 = vmatprep.subr.bf16.mxu0 0
  %4386 = vmatpush1.bf16.xpose.msra.mxu0 %v4252
  %4387 = vmatprep.subr.bf16.mxu0 0
  %4388 = vmatpush1.bf16.xpose.msra.mxu0 %v4253
  %4389 = vmatprep.subr.bf16.mxu0 0
  %4390 = vmatpush1.bf16.xpose.msra.mxu0 %v4254
  %4391 = vmatprep.subr.bf16.mxu0 0
  %4392 = vmatpush1.bf16.xpose.msra.mxu0 0
  %4393 = vmatprep.subr.bf16.mxu0 0
  %4394 = vmatpush1.bf16.xpose.msra.mxu0 0
  %4395 = vmatprep.subr.bf16.mxu0 0
  %4396 = vmatpush1.bf16.xpose.msra.mxu0 0
  %4397 = vmatprep.subr.bf16.mxu0 0
  %4398 = vmatpush1.bf16.xpose.msra.mxu0 0
  %4399 = vmatprep.subr.bf16.mxu0 0
  %4400 = vmatpush1.bf16.xpose.msra.mxu0 0
  %4401 = vmatprep.subr.bf16.mxu0 0
  %4402 = vmatpush1.bf16.xpose.msra.mxu0 0
  %4403 = vmatprep.subr.bf16.mxu0 0
  %4404 = vmatpush1.bf16.xpose.msra.mxu0 0
  %4405 = vmatprep.subr.bf16.mxu0 0
  %4406 = vmatpush1.bf16.xpose.msra.mxu0 0
  %4407 = vmatprep.mubr.bf16.mxu0 0
  %4408 = vmatmul.mubr.bf16.gmra.mrb[0].mxu0 %v4222
  %v4409 = vpop.f32.mrb[0].mxu0
  %v4410 = vadd.f32 0.0, %v4409
  %v4411 = vpop.f32.mrb[0].mxu0
  %v4412 = vpop.f32.mrb[0].mxu0
  %v4413 = vpop.f32.mrb[0].mxu0
  %4414 = vdwg.mxu0
  %v4415 = vpack.c.bf16 %v4330, %v4290
  %v4416 = vpack.c.bf16 %v4410, %v4370
  %v4421 = vunpack.c.l.b16 %v2614
  %v4422 = vunpack.c.l.b16 %v2615
  %v4423 = vunpack.c.l.b16 %v2616
  %v4424 = vunpack.c.l.b16 %v2617
  %v4425 = vpack.c.b16 %v4422, %v4421
  %v4426 = vpack.c.b16 %v4424, %v4423
  %v4428 = vsel %vm392, %v4425, 0
  %v4431 = vsel %vm392, %v4426, 0
  %4433 = vmatprep.subr.bf16.mxu0 0
  %4434 = vmatpush1.bf16.msra.mxu0 %v4415
  %4435 = vmatprep.subr.bf16.mxu0 0
  %4436 = vmatpush1.bf16.msra.mxu0 %v4416
  %4437 = vmatprep.subr.bf16.mxu0 0
  %4438 = vmatpush1.bf16.msra.mxu0 0
  %4439 = vmatprep.subr.bf16.mxu0 0
  %4440 = vmatpush1.bf16.msra.mxu0 0
  %4441 = vmatprep.subr.bf16.mxu0 0
  %4442 = vmatpush1.bf16.msra.mxu0 0
  %4443 = vmatprep.subr.bf16.mxu0 0
  %4444 = vmatpush1.bf16.msra.mxu0 0
  %4445 = vmatprep.subr.bf16.mxu0 0
  %4446 = vmatpush1.bf16.msra.mxu0 0
  %4447 = vmatprep.subr.bf16.mxu0 0
  %4448 = vmatpush1.bf16.msra.mxu0 0
  %4449 = vmatprep.subr.bf16.mxu0 0
  %4450 = vmatpush1.bf16.msra.mxu0 0
  %4451 = vmatprep.subr.bf16.mxu0 0
  %4452 = vmatpush1.bf16.msra.mxu0 0
  %4453 = vmatprep.subr.bf16.mxu0 0
  %4454 = vmatpush1.bf16.msra.mxu0 0
  %4455 = vmatprep.subr.bf16.mxu0 0
  %4456 = vmatpush1.bf16.msra.mxu0 0
  %4457 = vmatprep.subr.bf16.mxu0 0
  %4458 = vmatpush1.bf16.msra.mxu0 0
  %4459 = vmatprep.subr.bf16.mxu0 0
  %4460 = vmatpush1.bf16.msra.mxu0 0
  %4461 = vmatprep.subr.bf16.mxu0 0
  %4462 = vmatpush1.bf16.msra.mxu0 0
  %4463 = vmatprep.subr.bf16.mxu0 0
  %4464 = vmatpush1.bf16.msra.mxu0 0
  %4465 = vmatprep.mubr.bf16.mxu0 0
  %4466 = vmatmul.mubr.bf16.gmra.mrb[0].mxu0 %v4428
  %v4467 = vpop.f32.mrb[0].mxu0
  %v4468 = vadd.f32 0.0, %v4467
  %v4469 = vpop.f32.mrb[0].mxu0
  %v4470 = vpop.f32.mrb[0].mxu0
  %v4471 = vadd.f32 0.0, %v4470
  %v4472 = vpop.f32.mrb[0].mxu0
  %4473 = vmatprep.mubr.bf16.mxu0 0
  %4474 = vmatmul.mubr.bf16.gmra.mrb[0].mxu0 %v4431
  %v4475 = vpop.f32.mrb[0].mxu0
  %v4476 = vadd.f32 0.0, %v4475
  %v4477 = vpop.f32.mrb[0].mxu0
  %v4478 = vpop.f32.mrb[0].mxu0
  %v4479 = vadd.f32 0.0, %v4478
  %v4480 = vpop.f32.mrb[0].mxu0
  %4481 = vdwg.mxu0
  %v4482 = vadd.f32 %v2597, %v4468
  %v4483 = vadd.f32 %v2598, %v4471
  %v4484 = vadd.f32 %v2599, %v4476
  %v4485 = vadd.f32 %v2600, %v4479
  %4487 = vset.pattern.permute.xlu0 0
  %4488 = vperm.xlu0 %4487, %v2660
  %v4489 = vpop.permute.xlu0 %4488
  %4492 = vset.pattern.permute.xlu0 0
  %4493 = vperm.xlu0 %4492, %v2661
  %v4494 = vpop.permute.xlu0 %4493
  %4497 = vset.pattern.permute.xlu0 0
  %4498 = vperm.xlu0 %4497, %v2662
  %v4499 = vpop.permute.xlu0 %4498
  %4502 = vset.pattern.permute.xlu0 0
  %4503 = vperm.xlu0 %4502, %v2663
  %v4504 = vpop.permute.xlu0 %4503
  %v4506 = vadd.f32 %v4482, %v4489
  %v4507 = vadd.f32 %v4483, %v4494
  %v4508 = vadd.f32 %v4484, %v4499
  %v4509 = vadd.f32 %v4485, %v4504
  %v4510 = vadd.f32 %v4506, %v4507
  %v4511 = vadd.f32 %v4510, %v4508
  %v4512 = vadd.f32 %v4511, %v4509
  %v4513 = vrot.slane %v4512, 4
  %v4514 = vadd.f32 %v4512, %v4513
  %v4515 = vrot.slane %v4514, 2
  %v4516 = vadd.f32 %v4514, %v4515
  %v4517 = vrot.slane %v4516, 1
  %v4518 = vadd.f32 %v4516, %v4517
  %v4519 = vmul.f32 %v4506, %v4506
  %v4520 = vmul.f32 %v4507, %v4507
  %v4521 = vmul.f32 %v4508, %v4508
  %v4522 = vmul.f32 %v4509, %v4509
  %v4523 = vadd.f32 %v4519, %v4520
  %v4524 = vadd.f32 %v4523, %v4521
  %v4525 = vadd.f32 %v4524, %v4522
  %v4526 = vrot.slane %v4525, 4
  %v4527 = vadd.f32 %v4525, %v4526
  %v4528 = vrot.slane %v4527, 2
  %v4529 = vadd.f32 %v4527, %v4528
  %v4530 = vrot.slane %v4529, 1
  %v4531 = vadd.f32 %v4529, %v4530
  %v4532 = vmul.f32 %v4518, 0.03125
  %v4533 = vmul.f32 %v4531, 0.03125
  %v4534 = vmul.f32 %v4532, %v4532
  %v4535 = vsub.f32 %v4533, %v4534
  %v4536 = vsub.f32 %v4506, %v4532
  %v4537 = vsub.f32 %v4507, %v4532
  %v4538 = vsub.f32 %v4508, %v4532
  %v4539 = vsub.f32 %v4509, %v4532
  %v4540 = vadd.f32 %v4535, 1e-06
  %v4541 = vrsqrt.pop %v4540
  %v4542 = vmul.f32 %v4536, %v4541
  %v4543 = vmul.f32 %v4537, %v4541
  %v4544 = vmul.f32 %v4538, %v4541
  %v4545 = vmul.f32 %v4539, %v4541
  %4547 = vset.pattern.permute.xlu0 0
  %4548 = vperm.xlu0 %4547, %v2664
  %v4549 = vpop.permute.xlu0 %4548
  %4552 = vset.pattern.permute.xlu0 0
  %4553 = vperm.xlu0 %4552, %v2665
  %v4554 = vpop.permute.xlu0 %4553
  %4557 = vset.pattern.permute.xlu0 0
  %4558 = vperm.xlu0 %4557, %v2666
  %v4559 = vpop.permute.xlu0 %4558
  %4562 = vset.pattern.permute.xlu0 0
  %4563 = vperm.xlu0 %4562, %v2667
  %v4564 = vpop.permute.xlu0 %4563
  %v4566 = vmul.f32 %v4542, %v4549
  %v4567 = vmul.f32 %v4543, %v4554
  %v4568 = vmul.f32 %v4544, %v4559
  %v4569 = vmul.f32 %v4545, %v4564
  %4571 = vset.pattern.permute.xlu0 0
  %4572 = vperm.xlu0 %4571, %v2668
  %v4573 = vpop.permute.xlu0 %4572
  %4576 = vset.pattern.permute.xlu0 0
  %4577 = vperm.xlu0 %4576, %v2669
  %v4578 = vpop.permute.xlu0 %4577
  %4581 = vset.pattern.permute.xlu0 0
  %4582 = vperm.xlu0 %4581, %v2670
  %v4583 = vpop.permute.xlu0 %4582
  %4586 = vset.pattern.permute.xlu0 0
  %4587 = vperm.xlu0 %4586, %v2671
  %v4588 = vpop.permute.xlu0 %4587
  %v4590 = vadd.f32 %v4566, %v4573
  %v4591 = vadd.f32 %v4567, %v4578
  %v4592 = vadd.f32 %v4568, %v4583
  %v4593 = vadd.f32 %v4569, %v4588
  %v4594 = vpack.c.bf16 %v4591, %v4590
  %v4595 = vpack.c.bf16 %v4593, %v4592
  %4597 = vset.pattern.permute.xlu0 0
  %4598 = vperm.xlu0 %4597, %v2672
  %v4599 = vpop.permute.xlu0 %4598
  %4602 = vset.pattern.permute.xlu0 0
  %4603 = vperm.xlu0 %4602, %v2673
  %v4604 = vpop.permute.xlu0 %4603
  %4607 = vset.pattern.permute.xlu0 0
  %4608 = vperm.xlu0 %4607, %v2674
  %v4609 = vpop.permute.xlu0 %4608
  %4612 = vset.pattern.permute.xlu0 0
  %4613 = vperm.xlu0 %4612, %v2675
  %v4614 = vpop.permute.xlu0 %4613
  %4617 = vset.pattern.permute.xlu0 0
  %4618 = vperm.xlu0 %4617, %v2676
  %v4619 = vpop.permute.xlu0 %4618
  %4622 = vset.pattern.permute.xlu0 0
  %4623 = vperm.xlu0 %4622, %v2677
  %v4624 = vpop.permute.xlu0 %4623
  %4627 = vset.pattern.permute.xlu0 0
  %4628 = vperm.xlu0 %4627, %v2678
  %v4629 = vpop.permute.xlu0 %4628
  %4632 = vset.pattern.permute.xlu0 0
  %4633 = vperm.xlu0 %4632, %v2679
  %v4634 = vpop.permute.xlu0 %4633
  %4637 = vset.pattern.permute.xlu0 0
  %4638 = vperm.xlu0 %4637, %v2680
  %v4639 = vpop.permute.xlu0 %4638
  %4642 = vset.pattern.permute.xlu0 0
  %4643 = vperm.xlu0 %4642, %v2681
  %v4644 = vpop.permute.xlu0 %4643
  %4647 = vset.pattern.permute.xlu0 0
  %4648 = vperm.xlu0 %4647, %v2682
  %v4649 = vpop.permute.xlu0 %4648
  %4652 = vset.pattern.permute.xlu0 0
  %4653 = vperm.xlu0 %4652, %v2683
  %v4654 = vpop.permute.xlu0 %4653
  %4657 = vset.pattern.permute.xlu0 0
  %4658 = vperm.xlu0 %4657, %v2684
  %v4659 = vpop.permute.xlu0 %4658
  %4662 = vset.pattern.permute.xlu0 0
  %4663 = vperm.xlu0 %4662, %v2685
  %v4664 = vpop.permute.xlu0 %4663
  %4667 = vset.pattern.permute.xlu0 0
  %4668 = vperm.xlu0 %4667, %v2686
  %v4669 = vpop.permute.xlu0 %4668
  %4672 = vset.pattern.permute.xlu0 0
  %4673 = vperm.xlu0 %4672, %v2687
  %v4674 = vpop.permute.xlu0 %4673
  %v4692 = vunpack.c.l.b16 %v2618
  %v4693 = vunpack.c.l.b16 %v2619
  %v4694 = vunpack.c.l.b16 %v2620
  %v4695 = vunpack.c.l.b16 %v2621
  %v4696 = vunpack.c.l.b16 %v2622
  %v4697 = vunpack.c.l.b16 %v2623
  %v4698 = vunpack.c.l.b16 %v2624
  %v4699 = vunpack.c.l.b16 %v2625
  %v4700 = vunpack.c.l.b16 %v2626
  %v4701 = vunpack.c.l.b16 %v2627
  %v4702 = vunpack.c.l.b16 %v2628
  %v4703 = vunpack.c.l.b16 %v2629
  %v4704 = vunpack.c.l.b16 %v2630
  %v4705 = vunpack.c.l.b16 %v2631
  %v4706 = vunpack.c.l.b16 %v2632
  %v4707 = vunpack.c.l.b16 %v2633
  %v4708 = vpack.c.b16 %v4693, %v4692
  %v4709 = vpack.c.b16 %v4695, %v4694
  %v4710 = vpack.c.b16 %v4697, %v4696
  %v4711 = vpack.c.b16 %v4699, %v4698
  %v4712 = vpack.c.b16 %v4701, %v4700
  %v4713 = vpack.c.b16 %v4703, %v4702
  %v4714 = vpack.c.b16 %v4705, %v4704
  %v4715 = vpack.c.b16 %v4707, %v4706
  %v4717 = vsel %vm392, %v4708, 0
  %v4720 = vsel %vm392, %v4709, 0
  %v4723 = vsel %vm392, %v4710, 0
  %v4726 = vsel %vm392, %v4711, 0
  %v4729 = vsel %vm392, %v4712, 0
  %v4732 = vsel %vm392, %v4713, 0
  %v4735 = vsel %vm392, %v4714, 0
  %v4738 = vsel %vm392, %v4715, 0
  %4740 = vmatprep.subr.bf16.mxu0 0
  %4741 = vmatpush1.bf16.msra.mxu0 %v4594
  %4742 = vmatprep.subr.bf16.mxu0 0
  %4743 = vmatpush1.bf16.msra.mxu0 %v4595
  %4744 = vmatprep.subr.bf16.mxu0 0
  %4745 = vmatpush1.bf16.msra.mxu0 0
  %4746 = vmatprep.subr.bf16.mxu0 0
  %4747 = vmatpush1.bf16.msra.mxu0 0
  %4748 = vmatprep.subr.bf16.mxu0 0
  %4749 = vmatpush1.bf16.msra.mxu0 0
  %4750 = vmatprep.subr.bf16.mxu0 0
  %4751 = vmatpush1.bf16.msra.mxu0 0
  %4752 = vmatprep.subr.bf16.mxu0 0
  %4753 = vmatpush1.bf16.msra.mxu0 0
  %4754 = vmatprep.subr.bf16.mxu0 0
  %4755 = vmatpush1.bf16.msra.mxu0 0
  %4756 = vmatprep.subr.bf16.mxu0 0
  %4757 = vmatpush1.bf16.msra.mxu0 0
  %4758 = vmatprep.subr.bf16.mxu0 0
  %4759 = vmatpush1.bf16.msra.mxu0 0
  %4760 = vmatprep.subr.bf16.mxu0 0
  %4761 = vmatpush1.bf16.msra.mxu0 0
  %4762 = vmatprep.subr.bf16.mxu0 0
  %4763 = vmatpush1.bf16.msra.mxu0 0
  %4764 = vmatprep.subr.bf16.mxu0 0
  %4765 = vmatpush1.bf16.msra.mxu0 0
  %4766 = vmatprep.subr.bf16.mxu0 0
  %4767 = vmatpush1.bf16.msra.mxu0 0
  %4768 = vmatprep.subr.bf16.mxu0 0
  %4769 = vmatpush1.bf16.msra.mxu0 0
  %4770 = vmatprep.subr.bf16.mxu0 0
  %4771 = vmatpush1.bf16.msra.mxu0 0
  %4772 = vmatprep.mubr.bf16.mxu0 0
  %4773 = vmatmul.mubr.bf16.gmra.mrb[0].mxu0 %v4717
  %v4774 = vpop.f32.mrb[0].mxu0
  %v4775 = vadd.f32 %v4599, %v4774
  %v4776 = vpop.f32.mrb[0].mxu0
  %v4777 = vpop.f32.mrb[0].mxu0
  %v4778 = vadd.f32 %v4604, %v4777
  %v4779 = vpop.f32.mrb[0].mxu0
  %4780 = vmatprep.mubr.bf16.mxu0 0
  %4781 = vmatmul.mubr.bf16.gmra.mrb[0].mxu0 %v4720
  %v4782 = vpop.f32.mrb[0].mxu0
  %v4783 = vadd.f32 %v4609, %v4782
  %v4784 = vpop.f32.mrb[0].mxu0
  %v4785 = vpop.f32.mrb[0].mxu0
  %v4786 = vadd.f32 %v4614, %v4785
  %v4787 = vpop.f32.mrb[0].mxu0
  %4788 = vmatprep.mubr.bf16.mxu0 0
  %4789 = vmatmul.mubr.bf16.gmra.mrb[0].mxu0 %v4723
  %v4790 = vpop.f32.mrb[0].mxu0
  %v4791 = vadd.f32 %v4619, %v4790
  %v4792 = vpop.f32.mrb[0].mxu0
  %v4793 = vpop.f32.mrb[0].mxu0
  %v4794 = vadd.f32 %v4624, %v4793
  %v4795 = vpop.f32.mrb[0].mxu0
  %4796 = vmatprep.mubr.bf16.mxu0 0
  %4797 = vmatmul.mubr.bf16.gmra.mrb[0].mxu0 %v4726
  %v4798 = vpop.f32.mrb[0].mxu0
  %v4799 = vadd.f32 %v4629, %v4798
  %v4800 = vpop.f32.mrb[0].mxu0
  %v4801 = vpop.f32.mrb[0].mxu0
  %v4802 = vadd.f32 %v4634, %v4801
  %v4803 = vpop.f32.mrb[0].mxu0
  %4804 = vmatprep.mubr.bf16.mxu0 0
  %4805 = vmatmul.mubr.bf16.gmra.mrb[0].mxu0 %v4729
  %v4806 = vpop.f32.mrb[0].mxu0
  %v4807 = vadd.f32 %v4639, %v4806
  %v4808 = vpop.f32.mrb[0].mxu0
  %v4809 = vpop.f32.mrb[0].mxu0
  %v4810 = vadd.f32 %v4644, %v4809
  %v4811 = vpop.f32.mrb[0].mxu0
  %4812 = vmatprep.mubr.bf16.mxu0 0
  %4813 = vmatmul.mubr.bf16.gmra.mrb[0].mxu0 %v4732
  %v4814 = vpop.f32.mrb[0].mxu0
  %v4815 = vadd.f32 %v4649, %v4814
  %v4816 = vpop.f32.mrb[0].mxu0
  %v4817 = vpop.f32.mrb[0].mxu0
  %v4818 = vadd.f32 %v4654, %v4817
  %v4819 = vpop.f32.mrb[0].mxu0
  %4820 = vmatprep.mubr.bf16.mxu0 0
  %4821 = vmatmul.mubr.bf16.gmra.mrb[0].mxu0 %v4735
  %v4822 = vpop.f32.mrb[0].mxu0
  %v4823 = vadd.f32 %v4659, %v4822
  %v4824 = vpop.f32.mrb[0].mxu0
  %v4825 = vpop.f32.mrb[0].mxu0
  %v4826 = vadd.f32 %v4664, %v4825
  %v4827 = vpop.f32.mrb[0].mxu0
  %4828 = vmatprep.mubr.bf16.mxu0 0
  %4829 = vmatmul.mubr.bf16.gmra.mrb[0].mxu0 %v4738
  %v4830 = vpop.f32.mrb[0].mxu0
  %v4831 = vadd.f32 %v4669, %v4830
  %v4832 = vpop.f32.mrb[0].mxu0
  %v4833 = vpop.f32.mrb[0].mxu0
  %v4834 = vadd.f32 %v4674, %v4833
  %v4835 = vpop.f32.mrb[0].mxu0
  %4836 = vdwg.mxu0
  %v4837 = vmul.f32 %v4775, %v4775
  %v4838 = vmul.f32 %v4778, %v4778
  %v4839 = vmul.f32 %v4783, %v4783
  %v4840 = vmul.f32 %v4786, %v4786
  %v4841 = vmul.f32 %v4791, %v4791
  %v4842 = vmul.f32 %v4794, %v4794
  %v4843 = vmul.f32 %v4799, %v4799
  %v4844 = vmul.f32 %v4802, %v4802
  %v4845 = vmul.f32 %v4807, %v4807
  %v4846 = vmul.f32 %v4810, %v4810
  %v4847 = vmul.f32 %v4815, %v4815
  %v4848 = vmul.f32 %v4818, %v4818
  %v4849 = vmul.f32 %v4823, %v4823
  %v4850 = vmul.f32 %v4826, %v4826
  %v4851 = vmul.f32 %v4831, %v4831
  %v4852 = vmul.f32 %v4834, %v4834
  %v4853 = vmul.f32 %v4775, %v4837
  %v4854 = vmul.f32 %v4778, %v4838
  %v4855 = vmul.f32 %v4783, %v4839
  %v4856 = vmul.f32 %v4786, %v4840
  %v4857 = vmul.f32 %v4791, %v4841
  %v4858 = vmul.f32 %v4794, %v4842
  %v4859 = vmul.f32 %v4799, %v4843
  %v4860 = vmul.f32 %v4802, %v4844
  %v4861 = vmul.f32 %v4807, %v4845
  %v4862 = vmul.f32 %v4810, %v4846
  %v4863 = vmul.f32 %v4815, %v4847
  %v4864 = vmul.f32 %v4818, %v4848
  %v4865 = vmul.f32 %v4823, %v4849
  %v4866 = vmul.f32 %v4826, %v4850
  %v4867 = vmul.f32 %v4831, %v4851
  %v4868 = vmul.f32 %v4834, %v4852
  %v4869 = vmul.f32 %v4853, 0.044715
  %v4870 = vmul.f32 %v4854, 0.044715
  %v4871 = vmul.f32 %v4855, 0.044715
  %v4872 = vmul.f32 %v4856, 0.044715
  %v4873 = vmul.f32 %v4857, 0.044715
  %v4874 = vmul.f32 %v4858, 0.044715
  %v4875 = vmul.f32 %v4859, 0.044715
  %v4876 = vmul.f32 %v4860, 0.044715
  %v4877 = vmul.f32 %v4861, 0.044715
  %v4878 = vmul.f32 %v4862, 0.044715
  %v4879 = vmul.f32 %v4863, 0.044715
  %v4880 = vmul.f32 %v4864, 0.044715
  %v4881 = vmul.f32 %v4865, 0.044715
  %v4882 = vmul.f32 %v4866, 0.044715
  %v4883 = vmul.f32 %v4867, 0.044715
  %v4884 = vmul.f32 %v4868, 0.044715
  %v4885 = vadd.f32 %v4775, %v4869
  %v4886 = vadd.f32 %v4778, %v4870
  %v4887 = vadd.f32 %v4783, %v4871
  %v4888 = vadd.f32 %v4786, %v4872
  %v4889 = vadd.f32 %v4791, %v4873
  %v4890 = vadd.f32 %v4794, %v4874
  %v4891 = vadd.f32 %v4799, %v4875
  %v4892 = vadd.f32 %v4802, %v4876
  %v4893 = vadd.f32 %v4807, %v4877
  %v4894 = vadd.f32 %v4810, %v4878
  %v4895 = vadd.f32 %v4815, %v4879
  %v4896 = vadd.f32 %v4818, %v4880
  %v4897 = vadd.f32 %v4823, %v4881
  %v4898 = vadd.f32 %v4826, %v4882
  %v4899 = vadd.f32 %v4831, %v4883
  %v4900 = vadd.f32 %v4834, %v4884
  %v4901 = vmul.f32 %v4885, 0.7978846
  %v4902 = vmul.f32 %v4886, 0.7978846
  %v4903 = vmul.f32 %v4887, 0.7978846
  %v4904 = vmul.f32 %v4888, 0.7978846
  %v4905 = vmul.f32 %v4889, 0.7978846
  %v4906 = vmul.f32 %v4890, 0.7978846
  %v4907 = vmul.f32 %v4891, 0.7978846
  %v4908 = vmul.f32 %v4892, 0.7978846
  %v4909 = vmul.f32 %v4893, 0.7978846
  %v4910 = vmul.f32 %v4894, 0.7978846
  %v4911 = vmul.f32 %v4895, 0.7978846
  %v4912 = vmul.f32 %v4896, 0.7978846
  %v4913 = vmul.f32 %v4897, 0.7978846
  %v4914 = vmul.f32 %v4898, 0.7978846
  %v4915 = vmul.f32 %v4899, 0.7978846
  %v4916 = vmul.f32 %v4900, 0.7978846
  %v4917 = vtanh.pop %v4901
  %v4918 = vtanh.pop %v4902
  %v4919 = vtanh.pop %v4903
  %v4920 = vtanh.pop %v4904
  %v4921 = vtanh.pop %v4905
  %v4922 = vtanh.pop %v4906
  %v4923 = vtanh.pop %v4907
  %v4924 = vtanh.pop %v4908
  %v4925 = vtanh.pop %v4909
  %v4926 = vtanh.pop %v4910
  %v4927 = vtanh.pop %v4911
  %v4928 = vtanh.pop %v4912
  %v4929 = vtanh.pop %v4913
  %v4930 = vtanh.pop %v4914
  %v4931 = vtanh.pop %v4915
  %v4932 = vtanh.pop %v4916
  %v4933 = vadd.f32 %v4917, 1.0
  %v4934 = vadd.f32 %v4918, 1.0
  %v4935 = vadd.f32 %v4919, 1.0
  %v4936 = vadd.f32 %v4920, 1.0
  %v4937 = vadd.f32 %v4921, 1.0
  %v4938 = vadd.f32 %v4922, 1.0
  %v4939 = vadd.f32 %v4923, 1.0
  %v4940 = vadd.f32 %v4924, 1.0
  %v4941 = vadd.f32 %v4925, 1.0
  %v4942 = vadd.f32 %v4926, 1.0
  %v4943 = vadd.f32 %v4927, 1.0
  %v4944 = vadd.f32 %v4928, 1.0
  %v4945 = vadd.f32 %v4929, 1.0
  %v4946 = vadd.f32 %v4930, 1.0
  %v4947 = vadd.f32 %v4931, 1.0
  %v4948 = vadd.f32 %v4932, 1.0
  %v4949 = vmul.f32 %v4933, 0.5
  %v4950 = vmul.f32 %v4934, 0.5
  %v4951 = vmul.f32 %v4935, 0.5
  %v4952 = vmul.f32 %v4936, 0.5
  %v4953 = vmul.f32 %v4937, 0.5
  %v4954 = vmul.f32 %v4938, 0.5
  %v4955 = vmul.f32 %v4939, 0.5
  %v4956 = vmul.f32 %v4940, 0.5
  %v4957 = vmul.f32 %v4941, 0.5
  %v4958 = vmul.f32 %v4942, 0.5
  %v4959 = vmul.f32 %v4943, 0.5
  %v4960 = vmul.f32 %v4944, 0.5
  %v4961 = vmul.f32 %v4945, 0.5
  %v4962 = vmul.f32 %v4946, 0.5
  %v4963 = vmul.f32 %v4947, 0.5
  %v4964 = vmul.f32 %v4948, 0.5
  %v4965 = vmul.f32 %v4775, %v4949
  %v4966 = vmul.f32 %v4778, %v4950
  %v4967 = vmul.f32 %v4783, %v4951
  %v4968 = vmul.f32 %v4786, %v4952
  %v4969 = vmul.f32 %v4791, %v4953
  %v4970 = vmul.f32 %v4794, %v4954
  %v4971 = vmul.f32 %v4799, %v4955
  %v4972 = vmul.f32 %v4802, %v4956
  %v4973 = vmul.f32 %v4807, %v4957
  %v4974 = vmul.f32 %v4810, %v4958
  %v4975 = vmul.f32 %v4815, %v4959
  %v4976 = vmul.f32 %v4818, %v4960
  %v4977 = vmul.f32 %v4823, %v4961
  %v4978 = vmul.f32 %v4826, %v4962
  %v4979 = vmul.f32 %v4831, %v4963
  %v4980 = vmul.f32 %v4834, %v4964
  %v4981 = vpack.c.bf16 %v4966, %v4965
  %v4982 = vpack.c.bf16 %v4968, %v4967
  %v4983 = vpack.c.bf16 %v4970, %v4969
  %v4984 = vpack.c.bf16 %v4972, %v4971
  %v4985 = vpack.c.bf16 %v4974, %v4973
  %v4986 = vpack.c.bf16 %v4976, %v4975
  %v4987 = vpack.c.bf16 %v4978, %v4977
  %v4988 = vpack.c.bf16 %v4980, %v4979
  %4990 = vset.pattern.permute.xlu0 0
  %4991 = vperm.xlu0 %4990, %v2688
  %v4992 = vpop.permute.xlu0 %4991
  %4995 = vset.pattern.permute.xlu0 0
  %4996 = vperm.xlu0 %4995, %v2689
  %v4997 = vpop.permute.xlu0 %4996
  %5000 = vset.pattern.permute.xlu0 0
  %5001 = vperm.xlu0 %5000, %v2690
  %v5002 = vpop.permute.xlu0 %5001
  %5005 = vset.pattern.permute.xlu0 0
  %5006 = vperm.xlu0 %5005, %v2691
  %v5007 = vpop.permute.xlu0 %5006
  %v5013 = vunpack.c.l.b16 %v2635
  %v5014 = vunpack.c.l.b16 %v2636
  %v5015 = vunpack.c.l.b16 %v2637
  %v5016 = vunpack.c.l.b16 %v2638
  %v5017 = vpack.c.b16 %v5014, %v5013
  %v5018 = vpack.c.b16 %v5016, %v5015
  %5021 = vmatprep.subr.bf16.mxu0 0
  %5022 = vmatpush1.bf16.msra.mxu0 %v4981
  %5023 = vmatprep.subr.bf16.mxu0 0
  %5024 = vmatpush1.bf16.msra.mxu0 %v4982
  %5025 = vmatprep.subr.bf16.mxu0 0
  %5026 = vmatpush1.bf16.msra.mxu0 %v4983
  %5027 = vmatprep.subr.bf16.mxu0 0
  %5028 = vmatpush1.bf16.msra.mxu0 %v4984
  %5029 = vmatprep.subr.bf16.mxu0 0
  %5030 = vmatpush1.bf16.msra.mxu0 %v4985
  %5031 = vmatprep.subr.bf16.mxu0 0
  %5032 = vmatpush1.bf16.msra.mxu0 %v4986
  %5033 = vmatprep.subr.bf16.mxu0 0
  %5034 = vmatpush1.bf16.msra.mxu0 %v4987
  %5035 = vmatprep.subr.bf16.mxu0 0
  %5036 = vmatpush1.bf16.msra.mxu0 %v4988
  %5037 = vmatprep.subr.bf16.mxu0 0
  %5038 = vmatpush1.bf16.msra.mxu0 0
  %5039 = vmatprep.subr.bf16.mxu0 0
  %5040 = vmatpush1.bf16.msra.mxu0 0
  %5041 = vmatprep.subr.bf16.mxu0 0
  %5042 = vmatpush1.bf16.msra.mxu0 0
  %5043 = vmatprep.subr.bf16.mxu0 0
  %5044 = vmatpush1.bf16.msra.mxu0 0
  %5045 = vmatprep.subr.bf16.mxu0 0
  %5046 = vmatpush1.bf16.msra.mxu0 0
  %5047 = vmatprep.subr.bf16.mxu0 0
  %5048 = vmatpush1.bf16.msra.mxu0 0
  %5049 = vmatprep.subr.bf16.mxu0 0
  %5050 = vmatpush1.bf16.msra.mxu0 0
  %5051 = vmatprep.subr.bf16.mxu0 0
  %5052 = vmatpush1.bf16.msra.mxu0 0
  %5053 = vmatprep.mubr.bf16.mxu0 0
  %5054 = vmatmul.mubr.bf16.gmra.mrb[0].mxu0 %v5017
  %v5055 = vpop.f32.mrb[0].mxu0
  %v5056 = vadd.f32 %v4992, %v5055
  %v5057 = vpop.f32.mrb[0].mxu0
  %v5058 = vpop.f32.mrb[0].mxu0
  %v5059 = vadd.f32 %v4997, %v5058
  %v5060 = vpop.f32.mrb[0].mxu0
  %5061 = vmatprep.mubr.bf16.mxu0 0
  %5062 = vmatmul.mubr.bf16.gmra.mrb[0].mxu0 %v5018
  %v5063 = vpop.f32.mrb[0].mxu0
  %v5064 = vadd.f32 %v5002, %v5063
  %v5065 = vpop.f32.mrb[0].mxu0
  %v5066 = vpop.f32.mrb[0].mxu0
  %v5067 = vadd.f32 %v5007, %v5066
  %v5068 = vpop.f32.mrb[0].mxu0
  %5069 = vdwg.mxu0
  %v5070 = vadd.f32 %v4506, %v5056
  %v5071 = vadd.f32 %v4507, %v5059
  %v5072 = vadd.f32 %v4508, %v5064
  %v5073 = vadd.f32 %v4509, %v5067
  %5074 = vst [vmem:[%s9] sm:$0xff] %v5070
  %5075 = vst [vmem:[%s9 + $0x8] sm:$0xff] %v5071
  %5076 = vst [vmem:[%s9 + $0x10] sm:$0xff] %v5072
  %5077 = vst [vmem:[%s9 + $0x18] sm:$0xff] %v5073
  // Predicated region
  $region38: #{aggregation_forward.1} parent=0 // pred_check
    _
  $region39: #{aggregation_forward.1} parent=0 // pred_check_branch
    %5079 = sbr.rel (0) target = $region41
  $region40: #{aggregation_forward.1} parent=0 // pred_region
    _
  $region41: #{aggregation_forward.1} parent=0 // pred_fallthru
    _
  // Predicated region
  $region42: #{aggregation_forward.1} parent=0 // pred_check
    _
  $region43: #{aggregation_forward.1} parent=0 // pred_check_branch
    %5081 = sbr.rel (0) target = $region45
  $region44: #{aggregation_forward.1} parent=0 // pred_region
    _
  $region45: #{aggregation_forward.1} parent=0 // pred_fallthru
    _

</llo_original>
